<compile_context>
chip_gen: v7x
topology: tpu7x:2x2x1
jax: 0.10.0
libtpu: 0.0.40
codegen_flags: <defaults>
</compile_context>

<pallas_src>
import numpy as np
import jax
import jax.numpy as jnp
from jax.experimental import pallas as pl
from jax.experimental.pallas import tpu as pltpu

# Hopper-v2 dimensions (gym env not required at runtime).
STATE_SPACE = 11
ACTION_SPACE = 3
H1 = 400
H2 = 300
OUT = 1

XA_PAD = 16     # state(11) + action(3) zero-padded to 16 lanes
OUT_PAD = 128   # fc3 output zero-padded to a full 128-lane vreg


def _round_up(n, m):
    return ((n + m - 1) // m) * m


def critic_kernel(xa_ref, w1_ref, b1_ref, w2x_ref, w2a_ref, b2_ref,
                  w3_ref, b3_ref, o_ref):
    xa = xa_ref[...]                                   # bf16 [TB, 16]

    # fc1: relu(x @ W1 + b1)   (action/pad rows of W1 are zero)
    h1 = jnp.dot(xa, w1_ref[...], preferred_element_type=jnp.float32)
    h1 = jnp.maximum(h1 + b1_ref[...], 0.0)            # f32 [TB, 400]

    # fc2 on cat([h1, a], 1): relu(h1 @ W2x + xa @ W2a + b2)
    h2 = jnp.dot(h1.astype(jnp.bfloat16), w2x_ref[...],
                 preferred_element_type=jnp.float32)
    h2 = h2 + jnp.dot(xa, w2a_ref[...], preferred_element_type=jnp.float32)
    h2 = jnp.maximum(h2 + b2_ref[...], 0.0)            # f32 [TB, 300]

    # fc3 (lane-padded to 128): h2 @ W3pad + b3pad  (no activation)
    o = jnp.dot(h2.astype(jnp.bfloat16), w3_ref[...],
                preferred_element_type=jnp.float32)
    o_ref[...] = o + b3_ref[...]                       # f32 [TB, 128]


def _pack_input(x, a, b_pad):
    """Concatenate state+action into one zero-padded bf16 [B_pad, 16] tensor."""
    xa = jnp.zeros((b_pad, XA_PAD), jnp.bfloat16)
    xa = xa.at[:x.shape[0], :STATE_SPACE].set(x.astype(jnp.bfloat16))
    xa = xa.at[:a.shape[0], STATE_SPACE:STATE_SPACE + ACTION_SPACE].set(
        a.astype(jnp.bfloat16))
    return xa


def critic_forward(x, a, params):
    """x: [B, STATE_SPACE] f32, a: [B, ACTION_SPACE] f32 -> [B, 1] f32."""
    B = x.shape[0]
    w1p, b1, w2x, w2ap, b2, w3p, b3p = params

    # Batch tile: multiple of 256 (v6e/v7x MXU), capped at 512 (VMEM-friendly
    # on all generations).  Pad the batch so every block divides exactly.
    TB = min(512, _round_up(B, 256))
    B_pad = _round_up(B, TB)
    xa = _pack_input(x, a, B_pad)

    const2 = lambda i: (0, 0)
    out = pl.pallas_call(
        critic_kernel,
        out_shape=jax.ShapeDtypeStruct((B_pad, OUT_PAD), jnp.float32),
        grid=(B_pad // TB,),
        in_specs=[
            pl.BlockSpec((TB, XA_PAD), lambda i: (i, 0)),   # xa (batch tiled)
            pl.BlockSpec((XA_PAD, H1), const2),             # W1 (resident)
            pl.BlockSpec((1, H1), const2),                  # b1
            pl.BlockSpec((H1, H2), const2),                 # W2 state part
            pl.BlockSpec((XA_PAD, H2), const2),             # W2 action part
            pl.BlockSpec((1, H2), const2),                  # b2
            pl.BlockSpec((H2, OUT_PAD), const2),            # W3 (lane-padded)
            pl.BlockSpec((1, OUT_PAD), const2),             # b3 (lane-padded)
        ],
        out_specs=pl.BlockSpec((TB, OUT_PAD), lambda i: (i, 0)),
        compiler_params=pltpu.CompilerParams(
            dimension_semantics=("parallel",)),
    )(xa, w1p, b1, w2x, w2ap, b2, w3p, b3p)

    return out[:B, :OUT]


def fanin_init(key, size, fanin=None):
    # Mirrors the PyTorch fanin_init: v = 1/sqrt(size[0]) when fanin is None.
    fanin = fanin or size[0]
    v = 1.0 / np.sqrt(fanin)
    return jax.random.uniform(key, size, jnp.float32, minval=-v, maxval=v)


def init_params(key, dis=0.0003):
    ks = jax.random.split(key, 6)
    # PyTorch weights are [out, in]; fanin_init uses size[0] = out (faithful
    # to the reference code).  Transpose to [in, out] for the kernel.
    w1_t = fanin_init(ks[0], (H1, STATE_SPACE))                 # fc1.weight
    w2_t = fanin_init(ks[1], (H2, H1 + ACTION_SPACE))           # fc2.weight
    w3_t = jax.random.uniform(ks[2], (OUT, H2), jnp.float32,
                              minval=-dis, maxval=dis)          # fc3.weight
    # Biases follow nn.Linear default init: U(-1/sqrt(in), 1/sqrt(in)).
    b1 = jax.random.uniform(ks[3], (1, H1), jnp.float32,
                            minval=-1 / np.sqrt(STATE_SPACE),
                            maxval=1 / np.sqrt(STATE_SPACE))
    b2 = jax.random.uniform(ks[4], (1, H2), jnp.float32,
                            minval=-1 / np.sqrt(H1 + ACTION_SPACE),
                            maxval=1 / np.sqrt(H1 + ACTION_SPACE))
    b3 = jax.random.uniform(ks[5], (1, OUT), jnp.float32,
                            minval=-1 / np.sqrt(H2),
                            maxval=1 / np.sqrt(H2))

    w1 = w1_t.T                                   # [STATE_SPACE, H1]
    w2 = w2_t.T                                   # [H1 + ACTION_SPACE, H2]
    w2x = w2[:H1, :]                              # state part   [H1, H2]
    w2a = w2[H1:, :]                              # action part  [ACTION_SPACE, H2]
    w3 = w3_t.T                                   # [H2, OUT]

    # Pad W1 / W2a rows to the packed 16-wide input (extra rows are zero so
    # padded input lanes contribute nothing), pad W3 / b3 lanes to 128, and
    # cast matmul weights to bf16 once (biases stay f32 for VPU bias-add).
    w1p = jnp.zeros((XA_PAD, H1), jnp.float32).at[:STATE_SPACE, :].set(w1)
    w2ap = jnp.zeros((XA_PAD, H2), jnp.float32).at[
        STATE_SPACE:STATE_SPACE + ACTION_SPACE, :].set(w2a)
    w3p = jnp.zeros((H2, OUT_PAD), jnp.float32).at[:, :OUT].set(w3)
    b3p = jnp.zeros((1, OUT_PAD), jnp.float32).at[:, :OUT].set(b3)

    return (w1p.astype(jnp.bfloat16), b1,
            w2x.astype(jnp.bfloat16), w2ap.astype(jnp.bfloat16), b2,
            w3p.astype(jnp.bfloat16), b3p)


def critic_ref(x, a, params):
    """Pure-JAX reference with identical bf16-matmul / f32-accumulate math."""
    w1p, b1, w2x, w2ap, b2, w3p, b3p = params
    xa = _pack_input(x, a, x.shape[0])
    h1 = jnp.maximum(
        jnp.dot(xa, w1p, preferred_element_type=jnp.float32) + b1, 0.0)
    h2 = (jnp.dot(h1.astype(jnp.bfloat16), w2x,
                  preferred_element_type=jnp.float32)
          + jnp.dot(xa, w2ap, preferred_element_type=jnp.float32))
    h2 = jnp.maximum(h2 + b2, 0.0)
    o = jnp.dot(h2.astype(jnp.bfloat16), w3p,
                preferred_element_type=jnp.float32) + b3p
    return o[:, :OUT]


if __name__ == "__main__":
    key = jax.random.PRNGKey(0)
    kp, kx, ka = jax.random.split(key, 3)
    params = init_params(kp)

    B = 2
    x = jax.random.normal(kx, (B, STATE_SPACE), jnp.float32)
    a = jax.random.normal(ka, (B, ACTION_SPACE), jnp.float32)

    out = critic_forward(x, a, params)
    out = jax.block_until_ready(out)

    ref = critic_ref(x, a, params)
    np.testing.assert_allclose(np.asarray(out), np.asarray(ref),
                               rtol=2e-3, atol=2e-3)
    assert out.shape == (B, 1)
    print("KERNEL_OK")
</pallas_src>

<mosaic_0001>
module attributes {stable_mosaic.version = 11 : i64} {
  func.func @critic_kernel(%arg0: i32, %arg1: memref<256x16xbf16, #tpu.memory_space<vmem>>, %arg2: memref<16x400xbf16, #tpu.memory_space<vmem>>, %arg3: memref<1x400xf32, #tpu.memory_space<vmem>>, %arg4: memref<400x300xbf16, #tpu.memory_space<vmem>>, %arg5: memref<16x300xbf16, #tpu.memory_space<vmem>>, %arg6: memref<1x300xf32, #tpu.memory_space<vmem>>, %arg7: memref<300x128xbf16, #tpu.memory_space<vmem>>, %arg8: memref<1x128xf32, #tpu.memory_space<vmem>>, %arg9: memref<256x128xf32, #tpu.memory_space<vmem>>) attributes {dimension_semantics = [#tpu.dimension_semantics<parallel>], iteration_bounds = array<i64: 1>, scalar_prefetch = 0 : i64, scratch_operands = 0 : i64, tpu.core_type = #tpu.core_type<tc>, window_params = [{transform_indices = @transform_0, window_bounds = array<i64: 256, 16>}, {pipeline_mode = #tpu.pipeline_mode<synchronous>, transform_indices = @transform_1, window_bounds = array<i64: 16, 400>}, {pipeline_mode = #tpu.pipeline_mode<synchronous>, transform_indices = @transform_2, window_bounds = array<i64: 1, 400>}, {pipeline_mode = #tpu.pipeline_mode<synchronous>, transform_indices = @transform_3, window_bounds = array<i64: 400, 300>}, {pipeline_mode = #tpu.pipeline_mode<synchronous>, transform_indices = @transform_4, window_bounds = array<i64: 16, 300>}, {pipeline_mode = #tpu.pipeline_mode<synchronous>, transform_indices = @transform_5, window_bounds = array<i64: 1, 300>}, {pipeline_mode = #tpu.pipeline_mode<synchronous>, transform_indices = @transform_6, window_bounds = array<i64: 300, 128>}, {pipeline_mode = #tpu.pipeline_mode<synchronous>, transform_indices = @transform_7, window_bounds = array<i64: 1, 128>}, {transform_indices = @transform_8, window_bounds = array<i64: 256, 128>}]} {
    %c0 = arith.constant 0 : index
    %c0_0 = arith.constant 0 : index
    %0 = vector.load %arg1[%c0, %c0_0] : memref<256x16xbf16, #tpu.memory_space<vmem>>, vector<256x16xbf16>
    %c0_1 = arith.constant 0 : index
    %c0_2 = arith.constant 0 : index
    %1 = vector.load %arg2[%c0_1, %c0_2] : memref<16x400xbf16, #tpu.memory_space<vmem>>, vector<16x400xbf16>
    %cst = arith.constant dense<0.000000e+00> : vector<256x400xf32>
    %2 = tpu.matmul %0, %1, %cst {dimension_numbers = #tpu.dot_dimension_numbers<[1], [0], [0], [1], [0, 0, 1, 1], [], []>} : vector<256x16xbf16>, vector<16x400xbf16>, vector<256x400xf32> -> vector<256x400xf32>
    %c0_3 = arith.constant 0 : index
    %c0_4 = arith.constant 0 : index
    %3 = vector.load %arg3[%c0_3, %c0_4] : memref<1x400xf32, #tpu.memory_space<vmem>>, vector<1x400xf32>
    %4 = vector.broadcast %3 : vector<1x400xf32> to vector<256x400xf32>
    %5 = arith.addf %2, %4 : vector<256x400xf32>
    %cst_5 = arith.constant 0.000000e+00 : f32
    %6 = vector.broadcast %cst_5 : f32 to vector<256x400xf32>
    %7 = arith.maximumf %5, %6 : vector<256x400xf32>
    %8 = arith.truncf %7 : vector<256x400xf32> to vector<256x400xbf16>
    %c0_6 = arith.constant 0 : index
    %c0_7 = arith.constant 0 : index
    %9 = vector.load %arg4[%c0_6, %c0_7] : memref<400x300xbf16, #tpu.memory_space<vmem>>, vector<400x300xbf16>
    %cst_8 = arith.constant dense<0.000000e+00> : vector<256x300xf32>
    %10 = tpu.matmul %8, %9, %cst_8 {dimension_numbers = #tpu.dot_dimension_numbers<[1], [0], [0], [1], [0, 0, 1, 1], [], []>} : vector<256x400xbf16>, vector<400x300xbf16>, vector<256x300xf32> -> vector<256x300xf32>
    %c0_9 = arith.constant 0 : index
    %c0_10 = arith.constant 0 : index
    %11 = vector.load %arg5[%c0_9, %c0_10] : memref<16x300xbf16, #tpu.memory_space<vmem>>, vector<16x300xbf16>
    %cst_11 = arith.constant dense<0.000000e+00> : vector<256x300xf32>
    %12 = tpu.matmul %0, %11, %cst_11 {dimension_numbers = #tpu.dot_dimension_numbers<[1], [0], [0], [1], [0, 0, 1, 1], [], []>} : vector<256x16xbf16>, vector<16x300xbf16>, vector<256x300xf32> -> vector<256x300xf32>
    %13 = arith.addf %10, %12 : vector<256x300xf32>
    %c0_12 = arith.constant 0 : index
    %c0_13 = arith.constant 0 : index
    %14 = vector.load %arg6[%c0_12, %c0_13] : memref<1x300xf32, #tpu.memory_space<vmem>>, vector<1x300xf32>
    %15 = vector.broadcast %14 : vector<1x300xf32> to vector<256x300xf32>
    %16 = arith.addf %13, %15 : vector<256x300xf32>
    %cst_14 = arith.constant 0.000000e+00 : f32
    %17 = vector.broadcast %cst_14 : f32 to vector<256x300xf32>
    %18 = arith.maximumf %16, %17 : vector<256x300xf32>
    %19 = arith.truncf %18 : vector<256x300xf32> to vector<256x300xbf16>
    %c0_15 = arith.constant 0 : index
    %c0_16 = arith.constant 0 : index
    %20 = vector.load %arg7[%c0_15, %c0_16] : memref<300x128xbf16, #tpu.memory_space<vmem>>, vector<300x128xbf16>
    %cst_17 = arith.constant dense<0.000000e+00> : vector<256x128xf32>
    %21 = tpu.matmul %19, %20, %cst_17 {dimension_numbers = #tpu.dot_dimension_numbers<[1], [0], [0], [1], [0, 0, 1, 1], [], []>} : vector<256x300xbf16>, vector<300x128xbf16>, vector<256x128xf32> -> vector<256x128xf32>
    %c0_18 = arith.constant 0 : index
    %c0_19 = arith.constant 0 : index
    %22 = vector.load %arg8[%c0_18, %c0_19] : memref<1x128xf32, #tpu.memory_space<vmem>>, vector<1x128xf32>
    %23 = vector.broadcast %22 : vector<1x128xf32> to vector<256x128xf32>
    %24 = arith.addf %21, %23 : vector<256x128xf32>
    %c0_20 = arith.constant 0 : index
    %c0_21 = arith.constant 0 : index
    %25 = vector.load %arg9[%c0_20, %c0_21] : memref<256x128xf32, #tpu.memory_space<vmem>>, vector<256x128xf32>
    tpu.vector_store %arg9[%c0_20, %c0_21], %24 {strides = array<i32>} : memref<256x128xf32, #tpu.memory_space<vmem>>, vector<256x128xf32>,
    return
  }
  func.func @transform_0(%arg0: i32) -> (i32, i32) {
    %c0_i32 = arith.constant 0 : i32
    %c0_i32_0 = arith.constant 0 : i32
    return %arg0, %c0_i32 : i32, i32
  }
  func.func @transform_1(%arg0: i32) -> (i32, i32) {
    %c0_i32 = arith.constant 0 : i32
    %c0_i32_0 = arith.constant 0 : i32
    %c0_i32_1 = arith.constant 0 : i32
    return %c0_i32, %c0_i32_0 : i32, i32
  }
  func.func @transform_2(%arg0: i32) -> (i32, i32) {
    %c0_i32 = arith.constant 0 : i32
    %c0_i32_0 = arith.constant 0 : i32
    %c0_i32_1 = arith.constant 0 : i32
    return %c0_i32, %c0_i32_0 : i32, i32
  }
  func.func @transform_3(%arg0: i32) -> (i32, i32) {
    %c0_i32 = arith.constant 0 : i32
    %c0_i32_0 = arith.constant 0 : i32
    %c0_i32_1 = arith.constant 0 : i32
    return %c0_i32, %c0_i32_0 : i32, i32
  }
  func.func @transform_4(%arg0: i32) -> (i32, i32) {
    %c0_i32 = arith.constant 0 : i32
    %c0_i32_0 = arith.constant 0 : i32
    %c0_i32_1 = arith.constant 0 : i32
    return %c0_i32, %c0_i32_0 : i32, i32
  }
  func.func @transform_5(%arg0: i32) -> (i32, i32) {
    %c0_i32 = arith.constant 0 : i32
    %c0_i32_0 = arith.constant 0 : i32
    %c0_i32_1 = arith.constant 0 : i32
    return %c0_i32, %c0_i32_0 : i32, i32
  }
  func.func @transform_6(%arg0: i32) -> (i32, i32) {
    %c0_i32 = arith.constant 0 : i32
    %c0_i32_0 = arith.constant 0 : i32
    %c0_i32_1 = arith.constant 0 : i32
    return %c0_i32, %c0_i32_0 : i32, i32
  }
  func.func @transform_7(%arg0: i32) -> (i32, i32) {
    %c0_i32 = arith.constant 0 : i32
    %c0_i32_0 = arith.constant 0 : i32
    %c0_i32_1 = arith.constant 0 : i32
    return %c0_i32, %c0_i32_0 : i32, i32
  }
  func.func @transform_8(%arg0: i32) -> (i32, i32) {
    %c0_i32 = arith.constant 0 : i32
    %c0_i32_0 = arith.constant 0 : i32
    return %arg0, %c0_i32 : i32, i32
  }
}

</mosaic_0001>

<llo_original>
// kernel: tpu_custom_call.1
$region0: #{tpu_custom_call.1}
  #allocation0 [shape = 'u32[]', space=smem, size = 0x4, offset = 0x4, fixed_abs, tag = 'smem constant byte address 0x4 - core index']
  #allocation1 [shape = 'u32[144,128]{1,0:T(1,128)}', space=vmem, size = 0x12000, scoped, tag = 'internal scratch']
  %s0 = inlined_call_operand.vmem [shape: bf16[256,16], index: 0, kind: input, shape index: {}]
  %s1 = inlined_call_operand.hbm [shape: bf16[16,400], index: 1, kind: input, shape index: {}]
  %s2 = inlined_call_operand.vmem [shape: f32[1,400], index: 2, kind: input, shape index: {}]
  %s3 = inlined_call_operand.hbm [shape: bf16[400,300], index: 3, kind: input, shape index: {}]
  %s4 = inlined_call_operand.hbm [shape: bf16[16,300], index: 4, kind: input, shape index: {}]
  %s5 = inlined_call_operand.vmem [shape: f32[1,300], index: 5, kind: input, shape index: {}]
  %s6 = inlined_call_operand.vmem [shape: bf16[300,128], index: 6, kind: input, shape index: {}]
  %s7 = inlined_call_operand.vmem [shape: f32[1,128], index: 7, kind: input, shape index: {}]
  %s8 = inlined_call_operand.hbm [shape: f32[256,128], index: 8, kind: output, shape index: {}]
  %s9 = sld [smem:[#allocation0]]
  $region54: #{tpu_custom_call.1} parent=0
    _
  %s11 = ssub.s32 1, %s9
  %s12 = scalar_select 0, %s11, %s9
  $region1: #{tpu_custom_call.1} parent=0
    #allocation2 [shape = 'u8[16384]{0}', space=vmem, size = 0x4000, scoped, tag = 'input window, operand 1, single buffered']
    #allocation3 [shape = 's32[1]{0}', space=sflag, size = 0x4, scoped, tag = 'scoped memory for tpu_custom_call.1']
    #allocation4 [shape = 's32[1]{0}', space=sflag, size = 0x4, scoped, tag = 'scoped memory for tpu_custom_call.1']
    #allocation5 [shape = 'u8[307200]{0}', space=vmem, size = 0x4b000, scoped, tag = 'input window, operand 3, single buffered']
    #allocation6 [shape = 's32[1]{0}', space=sflag, size = 0x4, scoped, tag = 'scoped memory for tpu_custom_call.1']
    #allocation7 [shape = 'u8[12288]{0}', space=vmem, size = 0x3000, scoped, tag = 'input window, operand 4, single buffered']
    #allocation8 [shape = 'u8[131072]{0}', space=vmem, size = 0x20000, scoped, tag = 'output window, operand 0, single buffered']
    %13 = vsyncpa [#allocation3], 0
    %14 = vsyncpa [#allocation6], 0
    %15 = vsyncpa [#allocation4], 0
    // Predicated region
    $region2: #{tpu_custom_call.1} parent=1 // pred_check
      _
    $region3: #{tpu_custom_call.1} parent=1 // pred_check_branch
      %17 = sbr.rel (0) target = $region5
    $region4: #{tpu_custom_call.1} parent=1 // pred_region
      _
    $region5: #{tpu_custom_call.1} parent=1 // pred_fallthru
      _
    // Predicated region
    $region6: #{tpu_custom_call.1} parent=1 // pred_check
      _
    $region7: #{tpu_custom_call.1} parent=1 // pred_check_branch
      %19 = sbr.rel (0) target = $region9
    $region8: #{tpu_custom_call.1} parent=1 // pred_region
      %s21 = ssub.s32 512, 512
      %22 = vsyncadd [#allocation3], %s21
      %s23 = sshll.u32 [#allocation2], 4
      %s24 = int_to_ptr.vmem [resolvable:$true] %s23
      %29 = dma.hbm_to_vmem [thread:$0]  %s1, 512, %s24, [#allocation3], 256, 256, 16
    $region9: #{tpu_custom_call.1} parent=1 // pred_fallthru
      _
    // Predicated region
    $region10: #{tpu_custom_call.1} parent=1 // pred_check
      _
    $region11: #{tpu_custom_call.1} parent=1 // pred_check_branch
      %31 = sbr.rel (0) target = $region13
    $region12: #{tpu_custom_call.1} parent=1 // pred_region
      _
    $region13: #{tpu_custom_call.1} parent=1 // pred_fallthru
      _
    // Predicated region
    $region14: #{tpu_custom_call.1} parent=1 // pred_check
      _
    $region15: #{tpu_custom_call.1} parent=1 // pred_check_branch
      %33 = sbr.rel (0) target = $region17
    $region16: #{tpu_custom_call.1} parent=1 // pred_region
      %s35 = ssub.s32 9600, 9600
      %36 = vsyncadd [#allocation6], %s35
      %s37 = sshll.u32 [#allocation5], 4
      %s38 = int_to_ptr.vmem [resolvable:$true] %s37
      %43 = dma.hbm_to_vmem [thread:$0]  %s3, 9600, %s38, [#allocation6], 192, 192, 12
    $region17: #{tpu_custom_call.1} parent=1 // pred_fallthru
      _
    // Predicated region
    $region18: #{tpu_custom_call.1} parent=1 // pred_check
      _
    $region19: #{tpu_custom_call.1} parent=1 // pred_check_branch
      %45 = sbr.rel (0) target = $region21
    $region20: #{tpu_custom_call.1} parent=1 // pred_region
      %s47 = ssub.s32 384, 384
      %48 = vsyncadd [#allocation6], %s47
      %s49 = sshll.u32 [#allocation7], 4
      %s50 = int_to_ptr.vmem [resolvable:$true] %s49
      %55 = dma.hbm_to_vmem [thread:$0]  %s4, 384, %s50, [#allocation6], 192, 192, 12
    $region21: #{tpu_custom_call.1} parent=1 // pred_fallthru
      _
    // Predicated region
    $region22: #{tpu_custom_call.1} parent=1 // pred_check
      _
    $region23: #{tpu_custom_call.1} parent=1 // pred_check_branch
      %57 = sbr.rel (0) target = $region25
    $region24: #{tpu_custom_call.1} parent=1 // pred_region
      _
    $region25: #{tpu_custom_call.1} parent=1 // pred_fallthru
      _
    // Predicated region
    $region26: #{tpu_custom_call.1} parent=1 // pred_check
      _
    $region27: #{tpu_custom_call.1} parent=1 // pred_check_branch
      %59 = sbr.rel (0) target = $region29
    $region28: #{tpu_custom_call.1} parent=1 // pred_region
      _
    $region29: #{tpu_custom_call.1} parent=1 // pred_fallthru
      _
    // Predicated region
    $region30: #{tpu_custom_call.1} parent=1 // pred_check
      _
    $region31: #{tpu_custom_call.1} parent=1 // pred_check_branch
      %61 = sbr.rel (0) target = $region33
    $region32: #{tpu_custom_call.1} parent=1 // pred_region
      _
    $region33: #{tpu_custom_call.1} parent=1 // pred_fallthru
      _
    // Predicated region
    $region34: #{tpu_custom_call.1} parent=1 // pred_check
      _
    $region35: #{tpu_custom_call.1} parent=1 // pred_check_branch
      %63 = sbr.rel (0) target = $region37
    $region36: #{tpu_custom_call.1} parent=1 // pred_region
      %64 = dma.done [#allocation3], 512
    $region37: #{tpu_custom_call.1} parent=1 // pred_fallthru
      _
    // Predicated region
    $region38: #{tpu_custom_call.1} parent=1 // pred_check
      _
    $region39: #{tpu_custom_call.1} parent=1 // pred_check_branch
      %66 = sbr.rel (0) target = $region41
    $region40: #{tpu_custom_call.1} parent=1 // pred_region
      %67 = dma.done [#allocation6], 9600
    $region41: #{tpu_custom_call.1} parent=1 // pred_fallthru
      _
    // Predicated region
    $region42: #{tpu_custom_call.1} parent=1 // pred_check
      _
    $region43: #{tpu_custom_call.1} parent=1 // pred_check_branch
      %69 = sbr.rel (0) target = $region45
    $region44: #{tpu_custom_call.1} parent=1 // pred_region
      %70 = dma.done [#allocation6], 384
    $region45: #{tpu_custom_call.1} parent=1 // pred_fallthru
      _
    %v72 = vld [vmem:[%s0] sm:$0xf]
    %v73 = vld [vmem:[%s0 + $0x4] sm:$0xf]
    %v74 = vld [vmem:[%s0 + $0x8] sm:$0xf]
    %v75 = vld [vmem:[%s0 + $0xc] sm:$0xf]
    %v76 = vld [vmem:[%s0 + $0x10] sm:$0xf]
    %v77 = vld [vmem:[%s0 + $0x14] sm:$0xf]
    %v78 = vld [vmem:[%s0 + $0x18] sm:$0xf]
    %v79 = vld [vmem:[%s0 + $0x1c] sm:$0xf]
    %v80 = vld [vmem:[%s0 + $0x20] sm:$0xf]
    %v81 = vld [vmem:[%s0 + $0x24] sm:$0xf]
    %v82 = vld [vmem:[%s0 + $0x28] sm:$0xf]
    %v83 = vld [vmem:[%s0 + $0x2c] sm:$0xf]
    %v84 = vld [vmem:[%s0 + $0x30] sm:$0xf]
    %v85 = vld [vmem:[%s0 + $0x34] sm:$0xf]
    %v86 = vld [vmem:[%s0 + $0x38] sm:$0xf]
    %v87 = vld [vmem:[%s0 + $0x3c] sm:$0xf]
    %v88 = vld [vmem:[%s0 + $0x40] sm:$0xf]
    %v89 = vld [vmem:[%s0 + $0x44] sm:$0xf]
    %v90 = vld [vmem:[%s0 + $0x48] sm:$0xf]
    %v91 = vld [vmem:[%s0 + $0x4c] sm:$0xf]
    %v92 = vld [vmem:[%s0 + $0x50] sm:$0xf]
    %v93 = vld [vmem:[%s0 + $0x54] sm:$0xf]
    %v94 = vld [vmem:[%s0 + $0x58] sm:$0xf]
    %v95 = vld [vmem:[%s0 + $0x5c] sm:$0xf]
    %v96 = vld [vmem:[%s0 + $0x60] sm:$0xf]
    %v97 = vld [vmem:[%s0 + $0x64] sm:$0xf]
    %v98 = vld [vmem:[%s0 + $0x68] sm:$0xf]
    %v99 = vld [vmem:[%s0 + $0x6c] sm:$0xf]
    %v100 = vld [vmem:[%s0 + $0x70] sm:$0xf]
    %v101 = vld [vmem:[%s0 + $0x74] sm:$0xf]
    %v102 = vld [vmem:[%s0 + $0x78] sm:$0xf]
    %v103 = vld [vmem:[%s0 + $0x7c] sm:$0xf]
    %v104 = vld [vmem:[#allocation2] sm:$0xff]
    %v105 = vld [vmem:[#allocation2 + $0x8] sm:$0xff]
    %v106 = vld [vmem:[#allocation2 + $0x10] sm:$0xff]
    %v107 = vld [vmem:[#allocation2 + $0x18] sm:$0xff]
    %v108 = vld [vmem:[%s2] sm:$0xf]
    %v110 = vlaneseq
    %v111 = vshrl.u32 %v110, 7
    %v112 = vsub.s32 0, %v111
    %v113 = vrot.slane %v108, %v112
    %v114 = vlaneseq
    %v115 = vshrl.u32 %v114, 7
    %v116 = vsub.s32 1, %v115
    %v117 = vrot.slane %v108, %v116
    %v118 = vlaneseq
    %v119 = vshrl.u32 %v118, 7
    %v120 = vsub.s32 2, %v119
    %v121 = vrot.slane %v108, %v120
    %v122 = vlaneseq
    %v123 = vshrl.u32 %v122, 7
    %v124 = vsub.s32 3, %v123
    %v125 = vrot.slane %v108, %v124
    %v162 = vunpack.c.l.b16 %v72
    %v163 = vunpack.c.l.b16 %v73
    %v164 = vunpack.c.l.b16 %v74
    %v165 = vunpack.c.l.b16 %v75
    %v166 = vunpack.c.l.b16 %v76
    %v167 = vunpack.c.l.b16 %v77
    %v168 = vunpack.c.l.b16 %v78
    %v169 = vunpack.c.l.b16 %v79
    %v170 = vunpack.c.l.b16 %v80
    %v171 = vunpack.c.l.b16 %v81
    %v172 = vunpack.c.l.b16 %v82
    %v173 = vunpack.c.l.b16 %v83
    %v174 = vunpack.c.l.b16 %v84
    %v175 = vunpack.c.l.b16 %v85
    %v176 = vunpack.c.l.b16 %v86
    %v177 = vunpack.c.l.b16 %v87
    %v178 = vunpack.c.l.b16 %v88
    %v179 = vunpack.c.l.b16 %v89
    %v180 = vunpack.c.l.b16 %v90
    %v181 = vunpack.c.l.b16 %v91
    %v182 = vunpack.c.l.b16 %v92
    %v183 = vunpack.c.l.b16 %v93
    %v184 = vunpack.c.l.b16 %v94
    %v185 = vunpack.c.l.b16 %v95
    %v186 = vunpack.c.l.b16 %v96
    %v187 = vunpack.c.l.b16 %v97
    %v188 = vunpack.c.l.b16 %v98
    %v189 = vunpack.c.l.b16 %v99
    %v190 = vunpack.c.l.b16 %v100
    %v191 = vunpack.c.l.b16 %v101
    %v192 = vunpack.c.l.b16 %v102
    %v193 = vunpack.c.l.b16 %v103
    %v194 = vpack.c.b16 %v163, %v162
    %v195 = vpack.c.b16 %v165, %v164
    %v196 = vpack.c.b16 %v167, %v166
    %v197 = vpack.c.b16 %v169, %v168
    %v198 = vpack.c.b16 %v171, %v170
    %v199 = vpack.c.b16 %v173, %v172
    %v200 = vpack.c.b16 %v175, %v174
    %v201 = vpack.c.b16 %v177, %v176
    %v202 = vpack.c.b16 %v179, %v178
    %v203 = vpack.c.b16 %v181, %v180
    %v204 = vpack.c.b16 %v183, %v182
    %v205 = vpack.c.b16 %v185, %v184
    %v206 = vpack.c.b16 %v187, %v186
    %v207 = vpack.c.b16 %v189, %v188
    %v208 = vpack.c.b16 %v191, %v190
    %v209 = vpack.c.b16 %v193, %v192
    %v214 = vunpack.c.l.b16 %v104
    %v215 = vunpack.c.h.b16 %v104
    %v216 = vunpack.c.l.b16 %v105
    %v217 = vunpack.c.h.b16 %v105
    %v218 = vunpack.c.l.b16 %v106
    %v219 = vunpack.c.h.b16 %v106
    %v220 = vunpack.c.l.b16 %v107
    %v221 = vunpack.c.h.b16 %v107
    %v222 = vpack.c.b16 %v218, %v214
    %v223 = vpack.c.b16 %v219, %v215
    %v224 = vpack.c.b16 %v220, %v216
    %v225 = vpack.c.b16 %v221, %v217
    %vm230 = vcmask 130048
    %v232 = vsel %vm230, %v194, 0
    %v235 = vsel %vm230, %v195, 0
    %v238 = vsel %vm230, %v196, 0
    %v241 = vsel %vm230, %v197, 0
    %v244 = vsel %vm230, %v198, 0
    %v247 = vsel %vm230, %v199, 0
    %v250 = vsel %vm230, %v200, 0
    %v253 = vsel %vm230, %v201, 0
    %v256 = vsel %vm230, %v202, 0
    %v259 = vsel %vm230, %v203, 0
    %v262 = vsel %vm230, %v204, 0
    %v265 = vsel %vm230, %v205, 0
    %v268 = vsel %vm230, %v206, 0
    %v271 = vsel %vm230, %v207, 0
    %v274 = vsel %vm230, %v208, 0
    %v277 = vsel %vm230, %v209, 0
    %279 = vmatprep.subr.bf16.mxu0 %v223
    %280 = vmatpush1.bf16.msra.mxu0 %v222
    %281 = vmatprep.subr.bf16.mxu0 0
    %282 = vmatpush1.bf16.msra.mxu0 0
    %283 = vmatprep.subr.bf16.mxu0 0
    %284 = vmatpush1.bf16.msra.mxu0 0
    %285 = vmatprep.subr.bf16.mxu0 0
    %286 = vmatpush1.bf16.msra.mxu0 0
    %287 = vmatprep.subr.bf16.mxu0 0
    %288 = vmatpush1.bf16.msra.mxu0 0
    %289 = vmatprep.subr.bf16.mxu0 0
    %290 = vmatpush1.bf16.msra.mxu0 0
    %291 = vmatprep.subr.bf16.mxu0 0
    %292 = vmatpush1.bf16.msra.mxu0 0
    %293 = vmatprep.subr.bf16.mxu0 0
    %294 = vmatpush1.bf16.msra.mxu0 0
    %295 = vmatprep.subr.bf16.mxu0 0
    %296 = vmatpush1.bf16.msra.mxu0 0
    %297 = vmatprep.subr.bf16.mxu0 0
    %298 = vmatpush1.bf16.msra.mxu0 0
    %299 = vmatprep.subr.bf16.mxu0 0
    %300 = vmatpush1.bf16.msra.mxu0 0
    %301 = vmatprep.subr.bf16.mxu0 0
    %302 = vmatpush1.bf16.msra.mxu0 0
    %303 = vmatprep.subr.bf16.mxu0 0
    %304 = vmatpush1.bf16.msra.mxu0 0
    %305 = vmatprep.subr.bf16.mxu0 0
    %306 = vmatpush1.bf16.msra.mxu0 0
    %307 = vmatprep.subr.bf16.mxu0 0
    %308 = vmatpush1.bf16.msra.mxu0 0
    %309 = vmatprep.subr.bf16.mxu0 0
    %310 = vmatpush1.bf16.msra.mxu0 0
    %311 = vmatprep.mubr.bf16.mxu0 0
    %312 = vmatmul.mubr.bf16.gmra.mrb[0].mxu0 %v232
    %v313 = vpop.f32.mrb[0].mxu0
    %v314 = vadd.f32 %v113, %v313
    %v315 = vpop.f32.mrb[0].mxu0
    %v316 = vadd.f32 %v117, %v315
    %v317 = vpop.f32.mrb[0].mxu0
    %v318 = vadd.f32 %v113, %v317
    %v319 = vpop.f32.mrb[0].mxu0
    %v320 = vadd.f32 %v117, %v319
    %321 = vmatprep.mubr.bf16.mxu0 0
    %322 = vmatmul.mubr.bf16.gmra.mrb[0].mxu0 %v235
    %v323 = vpop.f32.mrb[0].mxu0
    %v324 = vadd.f32 %v113, %v323
    %v325 = vpop.f32.mrb[0].mxu0
    %v326 = vadd.f32 %v117, %v325
    %v327 = vpop.f32.mrb[0].mxu0
    %v328 = vadd.f32 %v113, %v327
    %v329 = vpop.f32.mrb[0].mxu0
    %v330 = vadd.f32 %v117, %v329
    %331 = vmatprep.mubr.bf16.mxu0 0
    %332 = vmatmul.mubr.bf16.gmra.mrb[0].mxu0 %v238
    %v333 = vpop.f32.mrb[0].mxu0
    %v334 = vadd.f32 %v113, %v333
    %v335 = vpop.f32.mrb[0].mxu0
    %v336 = vadd.f32 %v117, %v335
    %v337 = vpop.f32.mrb[0].mxu0
    %v338 = vadd.f32 %v113, %v337
    %v339 = vpop.f32.mrb[0].mxu0
    %v340 = vadd.f32 %v117, %v339
    %341 = vmatprep.mubr.bf16.mxu0 0
    %342 = vmatmul.mubr.bf16.gmra.mrb[0].mxu0 %v241
    %v343 = vpop.f32.mrb[0].mxu0
    %v344 = vadd.f32 %v113, %v343
    %v345 = vpop.f32.mrb[0].mxu0
    %v346 = vadd.f32 %v117, %v345
    %v347 = vpop.f32.mrb[0].mxu0
    %v348 = vadd.f32 %v113, %v347
    %v349 = vpop.f32.mrb[0].mxu0
    %v350 = vadd.f32 %v117, %v349
    %351 = vmatprep.mubr.bf16.mxu0 0
    %352 = vmatmul.mubr.bf16.gmra.mrb[0].mxu0 %v244
    %v353 = vpop.f32.mrb[0].mxu0
    %v354 = vadd.f32 %v113, %v353
    %v355 = vpop.f32.mrb[0].mxu0
    %v356 = vadd.f32 %v117, %v355
    %v357 = vpop.f32.mrb[0].mxu0
    %v358 = vadd.f32 %v113, %v357
    %v359 = vpop.f32.mrb[0].mxu0
    %v360 = vadd.f32 %v117, %v359
    %361 = vmatprep.mubr.bf16.mxu0 0
    %362 = vmatmul.mubr.bf16.gmra.mrb[0].mxu0 %v247
    %v363 = vpop.f32.mrb[0].mxu0
    %v364 = vadd.f32 %v113, %v363
    %v365 = vpop.f32.mrb[0].mxu0
    %v366 = vadd.f32 %v117, %v365
    %v367 = vpop.f32.mrb[0].mxu0
    %v368 = vadd.f32 %v113, %v367
    %v369 = vpop.f32.mrb[0].mxu0
    %v370 = vadd.f32 %v117, %v369
    %371 = vmatprep.mubr.bf16.mxu0 0
    %372 = vmatmul.mubr.bf16.gmra.mrb[0].mxu0 %v250
    %v373 = vpop.f32.mrb[0].mxu0
    %v374 = vadd.f32 %v113, %v373
    %v375 = vpop.f32.mrb[0].mxu0
    %v376 = vadd.f32 %v117, %v375
    %v377 = vpop.f32.mrb[0].mxu0
    %v378 = vadd.f32 %v113, %v377
    %v379 = vpop.f32.mrb[0].mxu0
    %v380 = vadd.f32 %v117, %v379
    %381 = vmatprep.mubr.bf16.mxu0 0
    %382 = vmatmul.mubr.bf16.gmra.mrb[0].mxu0 %v253
    %v383 = vpop.f32.mrb[0].mxu0
    %v384 = vadd.f32 %v113, %v383
    %v385 = vpop.f32.mrb[0].mxu0
    %v386 = vadd.f32 %v117, %v385
    %v387 = vpop.f32.mrb[0].mxu0
    %v388 = vadd.f32 %v113, %v387
    %v389 = vpop.f32.mrb[0].mxu0
    %v390 = vadd.f32 %v117, %v389
    %391 = vmatprep.mubr.bf16.mxu0 0
    %392 = vmatmul.mubr.bf16.gmra.mrb[0].mxu0 %v256
    %v393 = vpop.f32.mrb[0].mxu0
    %v394 = vadd.f32 %v113, %v393
    %v395 = vpop.f32.mrb[0].mxu0
    %v396 = vadd.f32 %v117, %v395
    %v397 = vpop.f32.mrb[0].mxu0
    %v398 = vadd.f32 %v113, %v397
    %v399 = vpop.f32.mrb[0].mxu0
    %v400 = vadd.f32 %v117, %v399
    %401 = vmatprep.mubr.bf16.mxu0 0
    %402 = vmatmul.mubr.bf16.gmra.mrb[0].mxu0 %v259
    %v403 = vpop.f32.mrb[0].mxu0
    %v404 = vadd.f32 %v113, %v403
    %v405 = vpop.f32.mrb[0].mxu0
    %v406 = vadd.f32 %v117, %v405
    %v407 = vpop.f32.mrb[0].mxu0
    %v408 = vadd.f32 %v113, %v407
    %v409 = vpop.f32.mrb[0].mxu0
    %v410 = vadd.f32 %v117, %v409
    %411 = vmatprep.mubr.bf16.mxu0 0
    %412 = vmatmul.mubr.bf16.gmra.mrb[0].mxu0 %v262
    %v413 = vpop.f32.mrb[0].mxu0
    %v414 = vadd.f32 %v113, %v413
    %v415 = vpop.f32.mrb[0].mxu0
    %v416 = vadd.f32 %v117, %v415
    %v417 = vpop.f32.mrb[0].mxu0
    %v418 = vadd.f32 %v113, %v417
    %v419 = vpop.f32.mrb[0].mxu0
    %v420 = vadd.f32 %v117, %v419
    %421 = vmatprep.mubr.bf16.mxu0 0
    %422 = vmatmul.mubr.bf16.gmra.mrb[0].mxu0 %v265
    %v423 = vpop.f32.mrb[0].mxu0
    %v424 = vadd.f32 %v113, %v423
    %v425 = vpop.f32.mrb[0].mxu0
    %v426 = vadd.f32 %v117, %v425
    %v427 = vpop.f32.mrb[0].mxu0
    %v428 = vadd.f32 %v113, %v427
    %v429 = vpop.f32.mrb[0].mxu0
    %v430 = vadd.f32 %v117, %v429
    %431 = vmatprep.mubr.bf16.mxu0 0
    %432 = vmatmul.mubr.bf16.gmra.mrb[0].mxu0 %v268
    %v433 = vpop.f32.mrb[0].mxu0
    %v434 = vadd.f32 %v113, %v433
    %v435 = vpop.f32.mrb[0].mxu0
    %v436 = vadd.f32 %v117, %v435
    %v437 = vpop.f32.mrb[0].mxu0
    %v438 = vadd.f32 %v113, %v437
    %v439 = vpop.f32.mrb[0].mxu0
    %v440 = vadd.f32 %v117, %v439
    %441 = vmatprep.mubr.bf16.mxu0 0
    %442 = vmatmul.mubr.bf16.gmra.mrb[0].mxu0 %v271
    %v443 = vpop.f32.mrb[0].mxu0
    %v444 = vadd.f32 %v113, %v443
    %v445 = vpop.f32.mrb[0].mxu0
    %v446 = vadd.f32 %v117, %v445
    %v447 = vpop.f32.mrb[0].mxu0
    %v448 = vadd.f32 %v113, %v447
    %v449 = vpop.f32.mrb[0].mxu0
    %v450 = vadd.f32 %v117, %v449
    %451 = vmatprep.mubr.bf16.mxu0 0
    %452 = vmatmul.mubr.bf16.gmra.mrb[0].mxu0 %v274
    %v453 = vpop.f32.mrb[0].mxu0
    %v454 = vadd.f32 %v113, %v453
    %v455 = vpop.f32.mrb[0].mxu0
    %v456 = vadd.f32 %v117, %v455
    %v457 = vpop.f32.mrb[0].mxu0
    %v458 = vadd.f32 %v113, %v457
    %v459 = vpop.f32.mrb[0].mxu0
    %v460 = vadd.f32 %v117, %v459
    %461 = vmatprep.mubr.bf16.mxu0 0
    %462 = vmatmul.mubr.bf16.gmra.mrb[0].mxu0 %v277
    %v463 = vpop.f32.mrb[0].mxu0
    %v464 = vadd.f32 %v113, %v463
    %v465 = vpop.f32.mrb[0].mxu0
    %v466 = vadd.f32 %v117, %v465
    %v467 = vpop.f32.mrb[0].mxu0
    %v468 = vadd.f32 %v113, %v467
    %v469 = vpop.f32.mrb[0].mxu0
    %v470 = vadd.f32 %v117, %v469
    %471 = vdwg.mxu0
    %472 = vmatprep.subr.bf16.mxu0 %v225
    %473 = vmatpush1.bf16.msra.mxu0 %v224
    %474 = vmatprep.subr.bf16.mxu0 0
    %475 = vmatpush1.bf16.msra.mxu0 0
    %476 = vmatprep.subr.bf16.mxu0 0
    %477 = vmatpush1.bf16.msra.mxu0 0
    %478 = vmatprep.subr.bf16.mxu0 0
    %479 = vmatpush1.bf16.msra.mxu0 0
    %480 = vmatprep.subr.bf16.mxu0 0
    %481 = vmatpush1.bf16.msra.mxu0 0
    %482 = vmatprep.subr.bf16.mxu0 0
    %483 = vmatpush1.bf16.msra.mxu0 0
    %484 = vmatprep.subr.bf16.mxu0 0
    %485 = vmatpush1.bf16.msra.mxu0 0
    %486 = vmatprep.subr.bf16.mxu0 0
    %487 = vmatpush1.bf16.msra.mxu0 0
    %488 = vmatprep.subr.bf16.mxu0 0
    %489 = vmatpush1.bf16.msra.mxu0 0
    %490 = vmatprep.subr.bf16.mxu0 0
    %491 = vmatpush1.bf16.msra.mxu0 0
    %492 = vmatprep.subr.bf16.mxu0 0
    %493 = vmatpush1.bf16.msra.mxu0 0
    %494 = vmatprep.subr.bf16.mxu0 0
    %495 = vmatpush1.bf16.msra.mxu0 0
    %496 = vmatprep.subr.bf16.mxu0 0
    %497 = vmatpush1.bf16.msra.mxu0 0
    %498 = vmatprep.subr.bf16.mxu0 0
    %499 = vmatpush1.bf16.msra.mxu0 0
    %500 = vmatprep.subr.bf16.mxu0 0
    %501 = vmatpush1.bf16.msra.mxu0 0
    %502 = vmatprep.subr.bf16.mxu0 0
    %503 = vmatpush1.bf16.msra.mxu0 0
    %504 = vmatprep.mubr.bf16.mxu0 0
    %505 = vmatmul.mubr.bf16.gmra.mrb[0].mxu0 %v232
    %v506 = vpop.f32.mrb[0].mxu0
    %v507 = vadd.f32 %v121, %v506
    %v508 = vpop.f32.mrb[0].mxu0
    %v509 = vadd.f32 %v125, %v508
    %v510 = vpop.f32.mrb[0].mxu0
    %v511 = vadd.f32 %v121, %v510
    %v512 = vpop.f32.mrb[0].mxu0
    %v513 = vadd.f32 %v125, %v512
    %514 = vmatprep.mubr.bf16.mxu0 0
    %515 = vmatmul.mubr.bf16.gmra.mrb[0].mxu0 %v235
    %v516 = vpop.f32.mrb[0].mxu0
    %v517 = vadd.f32 %v121, %v516
    %v518 = vpop.f32.mrb[0].mxu0
    %v519 = vadd.f32 %v125, %v518
    %v520 = vpop.f32.mrb[0].mxu0
    %v521 = vadd.f32 %v121, %v520
    %v522 = vpop.f32.mrb[0].mxu0
    %v523 = vadd.f32 %v125, %v522
    %524 = vmatprep.mubr.bf16.mxu0 0
    %525 = vmatmul.mubr.bf16.gmra.mrb[0].mxu0 %v238
    %v526 = vpop.f32.mrb[0].mxu0
    %v527 = vadd.f32 %v121, %v526
    %v528 = vpop.f32.mrb[0].mxu0
    %v529 = vadd.f32 %v125, %v528
    %v530 = vpop.f32.mrb[0].mxu0
    %v531 = vadd.f32 %v121, %v530
    %v532 = vpop.f32.mrb[0].mxu0
    %v533 = vadd.f32 %v125, %v532
    %534 = vmatprep.mubr.bf16.mxu0 0
    %535 = vmatmul.mubr.bf16.gmra.mrb[0].mxu0 %v241
    %v536 = vpop.f32.mrb[0].mxu0
    %v537 = vadd.f32 %v121, %v536
    %v538 = vpop.f32.mrb[0].mxu0
    %v539 = vadd.f32 %v125, %v538
    %v540 = vpop.f32.mrb[0].mxu0
    %v541 = vadd.f32 %v121, %v540
    %v542 = vpop.f32.mrb[0].mxu0
    %v543 = vadd.f32 %v125, %v542
    %544 = vmatprep.mubr.bf16.mxu0 0
    %545 = vmatmul.mubr.bf16.gmra.mrb[0].mxu0 %v244
    %v546 = vpop.f32.mrb[0].mxu0
    %v547 = vadd.f32 %v121, %v546
    %v548 = vpop.f32.mrb[0].mxu0
    %v549 = vadd.f32 %v125, %v548
    %v550 = vpop.f32.mrb[0].mxu0
    %v551 = vadd.f32 %v121, %v550
    %v552 = vpop.f32.mrb[0].mxu0
    %v553 = vadd.f32 %v125, %v552
    %554 = vmatprep.mubr.bf16.mxu0 0
    %555 = vmatmul.mubr.bf16.gmra.mrb[0].mxu0 %v247
    %v556 = vpop.f32.mrb[0].mxu0
    %v557 = vadd.f32 %v121, %v556
    %v558 = vpop.f32.mrb[0].mxu0
    %v559 = vadd.f32 %v125, %v558
    %v560 = vpop.f32.mrb[0].mxu0
    %v561 = vadd.f32 %v121, %v560
    %v562 = vpop.f32.mrb[0].mxu0
    %v563 = vadd.f32 %v125, %v562
    %564 = vmatprep.mubr.bf16.mxu0 0
    %565 = vmatmul.mubr.bf16.gmra.mrb[0].mxu0 %v250
    %v566 = vpop.f32.mrb[0].mxu0
    %v567 = vadd.f32 %v121, %v566
    %v568 = vpop.f32.mrb[0].mxu0
    %v569 = vadd.f32 %v125, %v568
    %v570 = vpop.f32.mrb[0].mxu0
    %v571 = vadd.f32 %v121, %v570
    %v572 = vpop.f32.mrb[0].mxu0
    %v573 = vadd.f32 %v125, %v572
    %574 = vmatprep.mubr.bf16.mxu0 0
    %575 = vmatmul.mubr.bf16.gmra.mrb[0].mxu0 %v253
    %v576 = vpop.f32.mrb[0].mxu0
    %v577 = vadd.f32 %v121, %v576
    %v578 = vpop.f32.mrb[0].mxu0
    %v579 = vadd.f32 %v125, %v578
    %v580 = vpop.f32.mrb[0].mxu0
    %v581 = vadd.f32 %v121, %v580
    %v582 = vpop.f32.mrb[0].mxu0
    %v583 = vadd.f32 %v125, %v582
    %584 = vmatprep.mubr.bf16.mxu0 0
    %585 = vmatmul.mubr.bf16.gmra.mrb[0].mxu0 %v256
    %v586 = vpop.f32.mrb[0].mxu0
    %v587 = vadd.f32 %v121, %v586
    %v588 = vpop.f32.mrb[0].mxu0
    %v589 = vadd.f32 %v125, %v588
    %v590 = vpop.f32.mrb[0].mxu0
    %v591 = vadd.f32 %v121, %v590
    %v592 = vpop.f32.mrb[0].mxu0
    %v593 = vadd.f32 %v125, %v592
    %594 = vmatprep.mubr.bf16.mxu0 0
    %595 = vmatmul.mubr.bf16.gmra.mrb[0].mxu0 %v259
    %v596 = vpop.f32.mrb[0].mxu0
    %v597 = vadd.f32 %v121, %v596
    %v598 = vpop.f32.mrb[0].mxu0
    %v599 = vadd.f32 %v125, %v598
    %v600 = vpop.f32.mrb[0].mxu0
    %v601 = vadd.f32 %v121, %v600
    %v602 = vpop.f32.mrb[0].mxu0
    %v603 = vadd.f32 %v125, %v602
    %604 = vmatprep.mubr.bf16.mxu0 0
    %605 = vmatmul.mubr.bf16.gmra.mrb[0].mxu0 %v262
    %v606 = vpop.f32.mrb[0].mxu0
    %v607 = vadd.f32 %v121, %v606
    %v608 = vpop.f32.mrb[0].mxu0
    %v609 = vadd.f32 %v125, %v608
    %v610 = vpop.f32.mrb[0].mxu0
    %v611 = vadd.f32 %v121, %v610
    %v612 = vpop.f32.mrb[0].mxu0
    %v613 = vadd.f32 %v125, %v612
    %614 = vmatprep.mubr.bf16.mxu0 0
    %615 = vmatmul.mubr.bf16.gmra.mrb[0].mxu0 %v265
    %v616 = vpop.f32.mrb[0].mxu0
    %v617 = vadd.f32 %v121, %v616
    %v618 = vpop.f32.mrb[0].mxu0
    %v619 = vadd.f32 %v125, %v618
    %v620 = vpop.f32.mrb[0].mxu0
    %v621 = vadd.f32 %v121, %v620
    %v622 = vpop.f32.mrb[0].mxu0
    %v623 = vadd.f32 %v125, %v622
    %624 = vmatprep.mubr.bf16.mxu0 0
    %625 = vmatmul.mubr.bf16.gmra.mrb[0].mxu0 %v268
    %v626 = vpop.f32.mrb[0].mxu0
    %v627 = vadd.f32 %v121, %v626
    %v628 = vpop.f32.mrb[0].mxu0
    %v629 = vadd.f32 %v125, %v628
    %v630 = vpop.f32.mrb[0].mxu0
    %v631 = vadd.f32 %v121, %v630
    %v632 = vpop.f32.mrb[0].mxu0
    %v633 = vadd.f32 %v125, %v632
    %634 = vmatprep.mubr.bf16.mxu0 0
    %635 = vmatmul.mubr.bf16.gmra.mrb[0].mxu0 %v271
    %v636 = vpop.f32.mrb[0].mxu0
    %v637 = vadd.f32 %v121, %v636
    %v638 = vpop.f32.mrb[0].mxu0
    %v639 = vadd.f32 %v125, %v638
    %v640 = vpop.f32.mrb[0].mxu0
    %v641 = vadd.f32 %v121, %v640
    %v642 = vpop.f32.mrb[0].mxu0
    %v643 = vadd.f32 %v125, %v642
    %644 = vmatprep.mubr.bf16.mxu0 0
    %645 = vmatmul.mubr.bf16.gmra.mrb[0].mxu0 %v274
    %v646 = vpop.f32.mrb[0].mxu0
    %v647 = vadd.f32 %v121, %v646
    %v648 = vpop.f32.mrb[0].mxu0
    %v649 = vadd.f32 %v125, %v648
    %v650 = vpop.f32.mrb[0].mxu0
    %v651 = vadd.f32 %v121, %v650
    %v652 = vpop.f32.mrb[0].mxu0
    %v653 = vadd.f32 %v125, %v652
    %654 = vmatprep.mubr.bf16.mxu0 0
    %655 = vmatmul.mubr.bf16.gmra.mrb[0].mxu0 %v277
    %v656 = vpop.f32.mrb[0].mxu0
    %v657 = vadd.f32 %v121, %v656
    %v658 = vpop.f32.mrb[0].mxu0
    %v659 = vadd.f32 %v125, %v658
    %v660 = vpop.f32.mrb[0].mxu0
    %v661 = vadd.f32 %v121, %v660
    %v662 = vpop.f32.mrb[0].mxu0
    %v663 = vadd.f32 %v125, %v662
    %664 = vdwg.mxu0
    %v665 = vmax.f32 %v314, 0.0
    %v666 = vmax.f32 %v316, 0.0
    %v667 = vmax.f32 %v507, 0.0
    %v668 = vmax.f32 %v509, 0.0
    %v669 = vmax.f32 %v318, 0.0
    %v670 = vmax.f32 %v320, 0.0
    %v671 = vmax.f32 %v511, 0.0
    %v672 = vmax.f32 %v513, 0.0
    %v673 = vmax.f32 %v324, 0.0
    %v674 = vmax.f32 %v326, 0.0
    %v675 = vmax.f32 %v517, 0.0
    %v676 = vmax.f32 %v519, 0.0
    %v677 = vmax.f32 %v328, 0.0
    %v678 = vmax.f32 %v330, 0.0
    %v679 = vmax.f32 %v521, 0.0
    %v680 = vmax.f32 %v523, 0.0
    %v681 = vmax.f32 %v334, 0.0
    %v682 = vmax.f32 %v336, 0.0
    %v683 = vmax.f32 %v527, 0.0
    %v684 = vmax.f32 %v529, 0.0
    %v685 = vmax.f32 %v338, 0.0
    %v686 = vmax.f32 %v340, 0.0
    %v687 = vmax.f32 %v531, 0.0
    %v688 = vmax.f32 %v533, 0.0
    %v689 = vmax.f32 %v344, 0.0
    %v690 = vmax.f32 %v346, 0.0
    %v691 = vmax.f32 %v537, 0.0
    %v692 = vmax.f32 %v539, 0.0
    %v693 = vmax.f32 %v348, 0.0
    %v694 = vmax.f32 %v350, 0.0
    %v695 = vmax.f32 %v541, 0.0
    %v696 = vmax.f32 %v543, 0.0
    %v697 = vmax.f32 %v354, 0.0
    %v698 = vmax.f32 %v356, 0.0
    %v699 = vmax.f32 %v547, 0.0
    %v700 = vmax.f32 %v549, 0.0
    %v701 = vmax.f32 %v358, 0.0
    %v702 = vmax.f32 %v360, 0.0
    %v703 = vmax.f32 %v551, 0.0
    %v704 = vmax.f32 %v553, 0.0
    %v705 = vmax.f32 %v364, 0.0
    %v706 = vmax.f32 %v366, 0.0
    %v707 = vmax.f32 %v557, 0.0
    %v708 = vmax.f32 %v559, 0.0
    %v709 = vmax.f32 %v368, 0.0
    %v710 = vmax.f32 %v370, 0.0
    %v711 = vmax.f32 %v561, 0.0
    %v712 = vmax.f32 %v563, 0.0
    %v713 = vmax.f32 %v374, 0.0
    %v714 = vmax.f32 %v376, 0.0
    %v715 = vmax.f32 %v567, 0.0
    %v716 = vmax.f32 %v569, 0.0
    %v717 = vmax.f32 %v378, 0.0
    %v718 = vmax.f32 %v380, 0.0
    %v719 = vmax.f32 %v571, 0.0
    %v720 = vmax.f32 %v573, 0.0
    %v721 = vmax.f32 %v384, 0.0
    %v722 = vmax.f32 %v386, 0.0
    %v723 = vmax.f32 %v577, 0.0
    %v724 = vmax.f32 %v579, 0.0
    %v725 = vmax.f32 %v388, 0.0
    %v726 = vmax.f32 %v390, 0.0
    %v727 = vmax.f32 %v581, 0.0
    %v728 = vmax.f32 %v583, 0.0
    %v729 = vmax.f32 %v394, 0.0
    %v730 = vmax.f32 %v396, 0.0
    %v731 = vmax.f32 %v587, 0.0
    %v732 = vmax.f32 %v589, 0.0
    %v733 = vmax.f32 %v398, 0.0
    %v734 = vmax.f32 %v400, 0.0
    %v735 = vmax.f32 %v591, 0.0
    %v736 = vmax.f32 %v593, 0.0
    %v737 = vmax.f32 %v404, 0.0
    %v738 = vmax.f32 %v406, 0.0
    %v739 = vmax.f32 %v597, 0.0
    %v740 = vmax.f32 %v599, 0.0
    %v741 = vmax.f32 %v408, 0.0
    %v742 = vmax.f32 %v410, 0.0
    %v743 = vmax.f32 %v601, 0.0
    %v744 = vmax.f32 %v603, 0.0
    %v745 = vmax.f32 %v414, 0.0
    %v746 = vmax.f32 %v416, 0.0
    %v747 = vmax.f32 %v607, 0.0
    %v748 = vmax.f32 %v609, 0.0
    %v749 = vmax.f32 %v418, 0.0
    %v750 = vmax.f32 %v420, 0.0
    %v751 = vmax.f32 %v611, 0.0
    %v752 = vmax.f32 %v613, 0.0
    %v753 = vmax.f32 %v424, 0.0
    %v754 = vmax.f32 %v426, 0.0
    %v755 = vmax.f32 %v617, 0.0
    %v756 = vmax.f32 %v619, 0.0
    %v757 = vmax.f32 %v428, 0.0
    %v758 = vmax.f32 %v430, 0.0
    %v759 = vmax.f32 %v621, 0.0
    %v760 = vmax.f32 %v623, 0.0
    %v761 = vmax.f32 %v434, 0.0
    %v762 = vmax.f32 %v436, 0.0
    %v763 = vmax.f32 %v627, 0.0
    %v764 = vmax.f32 %v629, 0.0
    %v765 = vmax.f32 %v438, 0.0
    %v766 = vmax.f32 %v440, 0.0
    %v767 = vmax.f32 %v631, 0.0
    %v768 = vmax.f32 %v633, 0.0
    %v769 = vmax.f32 %v444, 0.0
    %v770 = vmax.f32 %v446, 0.0
    %v771 = vmax.f32 %v637, 0.0
    %v772 = vmax.f32 %v639, 0.0
    %v773 = vmax.f32 %v448, 0.0
    %v774 = vmax.f32 %v450, 0.0
    %v775 = vmax.f32 %v641, 0.0
    %v776 = vmax.f32 %v643, 0.0
    %v777 = vmax.f32 %v454, 0.0
    %v778 = vmax.f32 %v456, 0.0
    %v779 = vmax.f32 %v647, 0.0
    %v780 = vmax.f32 %v649, 0.0
    %v781 = vmax.f32 %v458, 0.0
    %v782 = vmax.f32 %v460, 0.0
    %v783 = vmax.f32 %v651, 0.0
    %v784 = vmax.f32 %v653, 0.0
    %v785 = vmax.f32 %v464, 0.0
    %v786 = vmax.f32 %v466, 0.0
    %v787 = vmax.f32 %v657, 0.0
    %v788 = vmax.f32 %v659, 0.0
    %v789 = vmax.f32 %v468, 0.0
    %v790 = vmax.f32 %v470, 0.0
    %v791 = vmax.f32 %v661, 0.0
    %v792 = vmax.f32 %v663, 0.0
    %v793 = vpack.c.bf16 %v669, %v665
    %v794 = vpack.c.bf16 %v670, %v666
    %v795 = vpack.c.bf16 %v671, %v667
    %v796 = vpack.c.bf16 %v672, %v668
    %v797 = vpack.c.bf16 %v677, %v673
    %v798 = vpack.c.bf16 %v678, %v674
    %v799 = vpack.c.bf16 %v679, %v675
    %v800 = vpack.c.bf16 %v680, %v676
    %v801 = vpack.c.bf16 %v685, %v681
    %v802 = vpack.c.bf16 %v686, %v682
    %v803 = vpack.c.bf16 %v687, %v683
    %v804 = vpack.c.bf16 %v688, %v684
    %v805 = vpack.c.bf16 %v693, %v689
    %v806 = vpack.c.bf16 %v694, %v690
    %v807 = vpack.c.bf16 %v695, %v691
    %v808 = vpack.c.bf16 %v696, %v692
    %v809 = vpack.c.bf16 %v701, %v697
    %v810 = vpack.c.bf16 %v702, %v698
    %v811 = vpack.c.bf16 %v703, %v699
    %v812 = vpack.c.bf16 %v704, %v700
    %v813 = vpack.c.bf16 %v709, %v705
    %v814 = vpack.c.bf16 %v710, %v706
    %v815 = vpack.c.bf16 %v711, %v707
    %v816 = vpack.c.bf16 %v712, %v708
    %v817 = vpack.c.bf16 %v717, %v713
    %v818 = vpack.c.bf16 %v718, %v714
    %v819 = vpack.c.bf16 %v719, %v715
    %v820 = vpack.c.bf16 %v720, %v716
    %v821 = vpack.c.bf16 %v725, %v721
    %v822 = vpack.c.bf16 %v726, %v722
    %v823 = vpack.c.bf16 %v727, %v723
    %v824 = vpack.c.bf16 %v728, %v724
    %v825 = vpack.c.bf16 %v733, %v729
    %v826 = vpack.c.bf16 %v734, %v730
    %v827 = vpack.c.bf16 %v735, %v731
    %v828 = vpack.c.bf16 %v736, %v732
    %v829 = vpack.c.bf16 %v741, %v737
    %v830 = vpack.c.bf16 %v742, %v738
    %v831 = vpack.c.bf16 %v743, %v739
    %v832 = vpack.c.bf16 %v744, %v740
    %v833 = vpack.c.bf16 %v749, %v745
    %v834 = vpack.c.bf16 %v750, %v746
    %v835 = vpack.c.bf16 %v751, %v747
    %v836 = vpack.c.bf16 %v752, %v748
    %v837 = vpack.c.bf16 %v757, %v753
    %v838 = vpack.c.bf16 %v758, %v754
    %v839 = vpack.c.bf16 %v759, %v755
    %v840 = vpack.c.bf16 %v760, %v756
    %v841 = vpack.c.bf16 %v765, %v761
    %v842 = vpack.c.bf16 %v766, %v762
    %v843 = vpack.c.bf16 %v767, %v763
    %v844 = vpack.c.bf16 %v768, %v764
    %v845 = vpack.c.bf16 %v773, %v769
    %v846 = vpack.c.bf16 %v774, %v770
    %v847 = vpack.c.bf16 %v775, %v771
    %v848 = vpack.c.bf16 %v776, %v772
    %v849 = vpack.c.bf16 %v781, %v777
    %v850 = vpack.c.bf16 %v782, %v778
    %v851 = vpack.c.bf16 %v783, %v779
    %v852 = vpack.c.bf16 %v784, %v780
    %v853 = vpack.c.bf16 %v789, %v785
    %v854 = vpack.c.bf16 %v790, %v786
    %v855 = vpack.c.bf16 %v791, %v787
    %v856 = vpack.c.bf16 %v792, %v788
    %v857 = vld [vmem:[#allocation5] sm:$0xff]
    %v858 = vld [vmem:[#allocation5 + $0x8] sm:$0xf]
    %v859 = vld [vmem:[#allocation5 + $0xc] sm:$0xff]
    %v860 = vld [vmem:[#allocation5 + $0x14] sm:$0xf]
    %v861 = vld [vmem:[#allocation5 + $0x18] sm:$0xff]
    %v862 = vld [vmem:[#allocation5 + $0x20] sm:$0xf]
    %v863 = vld [vmem:[#allocation5 + $0x24] sm:$0xff]
    %v864 = vld [vmem:[#allocation5 + $0x2c] sm:$0xf]
    %v865 = vld [vmem:[#allocation5 + $0x30] sm:$0xff]
    %v866 = vld [vmem:[#allocation5 + $0x38] sm:$0xf]
    %v867 = vld [vmem:[#allocation5 + $0x3c] sm:$0xff]
    %v868 = vld [vmem:[#allocation5 + $0x44] sm:$0xf]
    %v869 = vld [vmem:[#allocation5 + $0x48] sm:$0xff]
    %v870 = vld [vmem:[#allocation5 + $0x50] sm:$0xf]
    %v871 = vld [vmem:[#allocation5 + $0x54] sm:$0xff]
    %v872 = vld [vmem:[#allocation5 + $0x5c] sm:$0xf]
    %v873 = vld [vmem:[#allocation5 + $0x60] sm:$0xff]
    %v874 = vld [vmem:[#allocation5 + $0x68] sm:$0xf]
    %v875 = vld [vmem:[#allocation5 + $0x6c] sm:$0xff]
    %v876 = vld [vmem:[#allocation5 + $0x74] sm:$0xf]
    %v877 = vld [vmem:[#allocation5 + $0x78] sm:$0xff]
    %v878 = vld [vmem:[#allocation5 + $0x80] sm:$0xf]
    %v879 = vld [vmem:[#allocation5 + $0x84] sm:$0xff]
    %v880 = vld [vmem:[#allocation5 + $0x8c] sm:$0xf]
    %v881 = vld [vmem:[#allocation5 + $0x90] sm:$0xff]
    %v882 = vld [vmem:[#allocation5 + $0x98] sm:$0xf]
    %v883 = vld [vmem:[#allocation5 + $0x9c] sm:$0xff]
    %v884 = vld [vmem:[#allocation5 + $0xa4] sm:$0xf]
    %v885 = vld [vmem:[#allocation5 + $0xa8] sm:$0xff]
    %v886 = vld [vmem:[#allocation5 + $0xb0] sm:$0xf]
    %v887 = vld [vmem:[#allocation5 + $0xb4] sm:$0xff]
    %v888 = vld [vmem:[#allocation5 + $0xbc] sm:$0xf]
    %v889 = vld [vmem:[#allocation5 + $0xc0] sm:$0xff]
    %v890 = vld [vmem:[#allocation5 + $0xc8] sm:$0xf]
    %v891 = vld [vmem:[#allocation5 + $0xcc] sm:$0xff]
    %v892 = vld [vmem:[#allocation5 + $0xd4] sm:$0xf]
    %v893 = vld [vmem:[#allocation5 + $0xd8] sm:$0xff]
    %v894 = vld [vmem:[#allocation5 + $0xe0] sm:$0xf]
    %v895 = vld [vmem:[#allocation5 + $0xe4] sm:$0xff]
    %v896 = vld [vmem:[#allocation5 + $0xec] sm:$0xf]
    %v897 = vld [vmem:[#allocation5 + $0xf0] sm:$0xff]
    %v898 = vld [vmem:[#allocation5 + $0xf8] sm:$0xf]
    %v899 = vld [vmem:[#allocation5 + $0xfc] sm:$0xff]
    %v900 = vld [vmem:[#allocation5 + $0x104] sm:$0xf]
    %v901 = vld [vmem:[#allocation5 + $0x108] sm:$0xff]
    %v902 = vld [vmem:[#allocation5 + $0x110] sm:$0xf]
    %v903 = vld [vmem:[#allocation5 + $0x114] sm:$0xff]
    %v904 = vld [vmem:[#allocation5 + $0x11c] sm:$0xf]
    %v905 = vld [vmem:[#allocation5 + $0x120] sm:$0xff]
    %v906 = vld [vmem:[#allocation5 + $0x128] sm:$0xf]
    %v907 = vld [vmem:[#allocation5 + $0x12c] sm:$0xff]
    %v908 = vld [vmem:[#allocation5 + $0x134] sm:$0xf]
    %v909 = vld [vmem:[#allocation5 + $0x138] sm:$0xff]
    %v910 = vld [vmem:[#allocation5 + $0x140] sm:$0xf]
    %v911 = vld [vmem:[#allocation5 + $0x144] sm:$0xff]
    %v912 = vld [vmem:[#allocation5 + $0x14c] sm:$0xf]
    %v913 = vld [vmem:[#allocation5 + $0x150] sm:$0xff]
    %v914 = vld [vmem:[#allocation5 + $0x158] sm:$0xf]
    %v915 = vld [vmem:[#allocation5 + $0x15c] sm:$0xff]
    %v916 = vld [vmem:[#allocation5 + $0x164] sm:$0xf]
    %v917 = vld [vmem:[#allocation5 + $0x168] sm:$0xff]
    %v918 = vld [vmem:[#allocation5 + $0x170] sm:$0xf]
    %v919 = vld [vmem:[#allocation5 + $0x174] sm:$0xff]
    %v920 = vld [vmem:[#allocation5 + $0x17c] sm:$0xf]
    %v921 = vld [vmem:[#allocation5 + $0x180] sm:$0xff]
    %v922 = vld [vmem:[#allocation5 + $0x188] sm:$0xf]
    %v923 = vld [vmem:[#allocation5 + $0x18c] sm:$0xff]
    %v924 = vld [vmem:[#allocation5 + $0x194] sm:$0xf]
    %v925 = vld [vmem:[#allocation5 + $0x198] sm:$0xff]
    %v926 = vld [vmem:[#allocation5 + $0x1a0] sm:$0xf]
    %v927 = vld [vmem:[#allocation5 + $0x1a4] sm:$0xff]
    %v928 = vld [vmem:[#allocation5 + $0x1ac] sm:$0xf]
    %v929 = vld [vmem:[#allocation5 + $0x1b0] sm:$0xff]
    %v930 = vld [vmem:[#allocation5 + $0x1b8] sm:$0xf]
    %v931 = vld [vmem:[#allocation5 + $0x1bc] sm:$0xff]
    %v932 = vld [vmem:[#allocation5 + $0x1c4] sm:$0xf]
    %v933 = vld [vmem:[#allocation5 + $0x1c8] sm:$0xff]
    %v934 = vld [vmem:[#allocation5 + $0x1d0] sm:$0xf]
    %v935 = vld [vmem:[#allocation5 + $0x1d4] sm:$0xff]
    %v936 = vld [vmem:[#allocation5 + $0x1dc] sm:$0xf]
    %v937 = vld [vmem:[#allocation5 + $0x1e0] sm:$0xff]
    %v938 = vld [vmem:[#allocation5 + $0x1e8] sm:$0xf]
    %v939 = vld [vmem:[#allocation5 + $0x1ec] sm:$0xff]
    %v940 = vld [vmem:[#allocation5 + $0x1f4] sm:$0xf]
    %v941 = vld [vmem:[#allocation5 + $0x1f8] sm:$0xff]
    %v942 = vld [vmem:[#allocation5 + $0x200] sm:$0xf]
    %v943 = vld [vmem:[#allocation5 + $0x204] sm:$0xff]
    %v944 = vld [vmem:[#allocation5 + $0x20c] sm:$0xf]
    %v945 = vld [vmem:[#allocation5 + $0x210] sm:$0xff]
    %v946 = vld [vmem:[#allocation5 + $0x218] sm:$0xf]
    %v947 = vld [vmem:[#allocation5 + $0x21c] sm:$0xff]
    %v948 = vld [vmem:[#allocation5 + $0x224] sm:$0xf]
    %v949 = vld [vmem:[#allocation5 + $0x228] sm:$0xff]
    %v950 = vld [vmem:[#allocation5 + $0x230] sm:$0xf]
    %v951 = vld [vmem:[#allocation5 + $0x234] sm:$0xff]
    %v952 = vld [vmem:[#allocation5 + $0x23c] sm:$0xf]
    %v953 = vld [vmem:[#allocation5 + $0x240] sm:$0xff]
    %v954 = vld [vmem:[#allocation5 + $0x248] sm:$0xf]
    %v955 = vld [vmem:[#allocation5 + $0x24c] sm:$0xff]
    %v956 = vld [vmem:[#allocation5 + $0x254] sm:$0xf]
    %v957 = vld [vmem:[#allocation7] sm:$0xff]
    %v958 = vld [vmem:[#allocation7 + $0x8] sm:$0xf]
    %v959 = vld [vmem:[#allocation7 + $0xc] sm:$0xff]
    %v960 = vld [vmem:[#allocation7 + $0x14] sm:$0xf]
    %v965 = vunpack.c.l.b16 %v957
    %v966 = vunpack.c.h.b16 %v957
    %v967 = vunpack.c.l.b16 %v958
    %v968 = vunpack.c.l.b16 %v959
    %v969 = vunpack.c.h.b16 %v959
    %v970 = vunpack.c.l.b16 %v960
    %v971 = vpack.c.b16 %v968, %v965
    %v972 = vpack.c.b16 %v969, %v966
    %v973 = vpack.c.b16 %v970, %v967
    %977 = vmatprep.subr.bf16.mxu0 %v972
    %978 = vmatpush1.bf16.msra.mxu0 %v971
    %979 = vmatprep.subr.bf16.mxu0 0
    %980 = vmatpush1.bf16.msra.mxu0 0
    %981 = vmatprep.subr.bf16.mxu0 0
    %982 = vmatpush1.bf16.msra.mxu0 0
    %983 = vmatprep.subr.bf16.mxu0 0
    %984 = vmatpush1.bf16.msra.mxu0 0
    %985 = vmatprep.subr.bf16.mxu0 0
    %986 = vmatpush1.bf16.msra.mxu0 0
    %987 = vmatprep.subr.bf16.mxu0 0
    %988 = vmatpush1.bf16.msra.mxu0 0
    %989 = vmatprep.subr.bf16.mxu0 0
    %990 = vmatpush1.bf16.msra.mxu0 0
    %991 = vmatprep.subr.bf16.mxu0 0
    %992 = vmatpush1.bf16.msra.mxu0 0
    %993 = vmatprep.subr.bf16.mxu0 0
    %994 = vmatpush1.bf16.msra.mxu0 0
    %995 = vmatprep.subr.bf16.mxu0 0
    %996 = vmatpush1.bf16.msra.mxu0 0
    %997 = vmatprep.subr.bf16.mxu0 0
    %998 = vmatpush1.bf16.msra.mxu0 0
    %999 = vmatprep.subr.bf16.mxu0 0
    %1000 = vmatpush1.bf16.msra.mxu0 0
    %1001 = vmatprep.subr.bf16.mxu0 0
    %1002 = vmatpush1.bf16.msra.mxu0 0
    %1003 = vmatprep.subr.bf16.mxu0 0
    %1004 = vmatpush1.bf16.msra.mxu0 0
    %1005 = vmatprep.subr.bf16.mxu0 0
    %1006 = vmatpush1.bf16.msra.mxu0 0
    %1007 = vmatprep.subr.bf16.mxu0 0
    %1008 = vmatpush1.bf16.msra.mxu0 0
    %1009 = vmatprep.mubr.bf16.mxu0 0
    %1010 = vmatmul.mubr.bf16.gmra.mrb[0].mxu0 %v232
    %v1011 = vpop.f32.mrb[0].mxu0
    %v1012 = vadd.f32 0.0, %v1011
    %v1013 = vpop.f32.mrb[0].mxu0
    %v1014 = vadd.f32 0.0, %v1013
    %v1015 = vpop.f32.mrb[0].mxu0
    %v1016 = vadd.f32 0.0, %v1015
    %v1017 = vpop.f32.mrb[0].mxu0
    %v1018 = vadd.f32 0.0, %v1017
    %1019 = vmatprep.mubr.bf16.mxu0 0
    %1020 = vmatmul.mubr.bf16.gmra.mrb[0].mxu0 %v235
    %v1021 = vpop.f32.mrb[0].mxu0
    %v1022 = vadd.f32 0.0, %v1021
    %v1023 = vpop.f32.mrb[0].mxu0
    %v1024 = vadd.f32 0.0, %v1023
    %v1025 = vpop.f32.mrb[0].mxu0
    %v1026 = vadd.f32 0.0, %v1025
    %v1027 = vpop.f32.mrb[0].mxu0
    %v1028 = vadd.f32 0.0, %v1027
    %1029 = vmatprep.mubr.bf16.mxu0 0
    %1030 = vmatmul.mubr.bf16.gmra.mrb[0].mxu0 %v238
    %v1031 = vpop.f32.mrb[0].mxu0
    %v1032 = vadd.f32 0.0, %v1031
    %v1033 = vpop.f32.mrb[0].mxu0
    %v1034 = vadd.f32 0.0, %v1033
    %v1035 = vpop.f32.mrb[0].mxu0
    %v1036 = vadd.f32 0.0, %v1035
    %v1037 = vpop.f32.mrb[0].mxu0
    %v1038 = vadd.f32 0.0, %v1037
    %1039 = vmatprep.mubr.bf16.mxu0 0
    %1040 = vmatmul.mubr.bf16.gmra.mrb[0].mxu0 %v241
    %v1041 = vpop.f32.mrb[0].mxu0
    %v1042 = vadd.f32 0.0, %v1041
    %v1043 = vpop.f32.mrb[0].mxu0
    %v1044 = vadd.f32 0.0, %v1043
    %v1045 = vpop.f32.mrb[0].mxu0
    %v1046 = vadd.f32 0.0, %v1045
    %v1047 = vpop.f32.mrb[0].mxu0
    %v1048 = vadd.f32 0.0, %v1047
    %1049 = vmatprep.mubr.bf16.mxu0 0
    %1050 = vmatmul.mubr.bf16.gmra.mrb[0].mxu0 %v244
    %v1051 = vpop.f32.mrb[0].mxu0
    %v1052 = vadd.f32 0.0, %v1051
    %v1053 = vpop.f32.mrb[0].mxu0
    %v1054 = vadd.f32 0.0, %v1053
    %v1055 = vpop.f32.mrb[0].mxu0
    %v1056 = vadd.f32 0.0, %v1055
    %v1057 = vpop.f32.mrb[0].mxu0
    %v1058 = vadd.f32 0.0, %v1057
    %1059 = vmatprep.mubr.bf16.mxu0 0
    %1060 = vmatmul.mubr.bf16.gmra.mrb[0].mxu0 %v247
    %v1061 = vpop.f32.mrb[0].mxu0
    %v1062 = vadd.f32 0.0, %v1061
    %v1063 = vpop.f32.mrb[0].mxu0
    %v1064 = vadd.f32 0.0, %v1063
    %v1065 = vpop.f32.mrb[0].mxu0
    %v1066 = vadd.f32 0.0, %v1065
    %v1067 = vpop.f32.mrb[0].mxu0
    %v1068 = vadd.f32 0.0, %v1067
    %1069 = vmatprep.mubr.bf16.mxu0 0
    %1070 = vmatmul.mubr.bf16.gmra.mrb[0].mxu0 %v250
    %v1071 = vpop.f32.mrb[0].mxu0
    %v1072 = vadd.f32 0.0, %v1071
    %v1073 = vpop.f32.mrb[0].mxu0
    %v1074 = vadd.f32 0.0, %v1073
    %v1075 = vpop.f32.mrb[0].mxu0
    %v1076 = vadd.f32 0.0, %v1075
    %v1077 = vpop.f32.mrb[0].mxu0
    %v1078 = vadd.f32 0.0, %v1077
    %1079 = vmatprep.mubr.bf16.mxu0 0
    %1080 = vmatmul.mubr.bf16.gmra.mrb[0].mxu0 %v253
    %v1081 = vpop.f32.mrb[0].mxu0
    %v1082 = vadd.f32 0.0, %v1081
    %v1083 = vpop.f32.mrb[0].mxu0
    %v1084 = vadd.f32 0.0, %v1083
    %v1085 = vpop.f32.mrb[0].mxu0
    %v1086 = vadd.f32 0.0, %v1085
    %v1087 = vpop.f32.mrb[0].mxu0
    %v1088 = vadd.f32 0.0, %v1087
    %1089 = vmatprep.mubr.bf16.mxu0 0
    %1090 = vmatmul.mubr.bf16.gmra.mrb[0].mxu0 %v256
    %v1091 = vpop.f32.mrb[0].mxu0
    %v1092 = vadd.f32 0.0, %v1091
    %v1093 = vpop.f32.mrb[0].mxu0
    %v1094 = vadd.f32 0.0, %v1093
    %v1095 = vpop.f32.mrb[0].mxu0
    %v1096 = vadd.f32 0.0, %v1095
    %v1097 = vpop.f32.mrb[0].mxu0
    %v1098 = vadd.f32 0.0, %v1097
    %1099 = vmatprep.mubr.bf16.mxu0 0
    %1100 = vmatmul.mubr.bf16.gmra.mrb[0].mxu0 %v259
    %v1101 = vpop.f32.mrb[0].mxu0
    %v1102 = vadd.f32 0.0, %v1101
    %v1103 = vpop.f32.mrb[0].mxu0
    %v1104 = vadd.f32 0.0, %v1103
    %v1105 = vpop.f32.mrb[0].mxu0
    %v1106 = vadd.f32 0.0, %v1105
    %v1107 = vpop.f32.mrb[0].mxu0
    %v1108 = vadd.f32 0.0, %v1107
    %1109 = vmatprep.mubr.bf16.mxu0 0
    %1110 = vmatmul.mubr.bf16.gmra.mrb[0].mxu0 %v262
    %v1111 = vpop.f32.mrb[0].mxu0
    %v1112 = vadd.f32 0.0, %v1111
    %v1113 = vpop.f32.mrb[0].mxu0
    %v1114 = vadd.f32 0.0, %v1113
    %v1115 = vpop.f32.mrb[0].mxu0
    %v1116 = vadd.f32 0.0, %v1115
    %v1117 = vpop.f32.mrb[0].mxu0
    %v1118 = vadd.f32 0.0, %v1117
    %1119 = vmatprep.mubr.bf16.mxu0 0
    %1120 = vmatmul.mubr.bf16.gmra.mrb[0].mxu0 %v265
    %v1121 = vpop.f32.mrb[0].mxu0
    %v1122 = vadd.f32 0.0, %v1121
    %v1123 = vpop.f32.mrb[0].mxu0
    %v1124 = vadd.f32 0.0, %v1123
    %v1125 = vpop.f32.mrb[0].mxu0
    %v1126 = vadd.f32 0.0, %v1125
    %v1127 = vpop.f32.mrb[0].mxu0
    %v1128 = vadd.f32 0.0, %v1127
    %1129 = vmatprep.mubr.bf16.mxu0 0
    %1130 = vmatmul.mubr.bf16.gmra.mrb[0].mxu0 %v268
    %v1131 = vpop.f32.mrb[0].mxu0
    %v1132 = vadd.f32 0.0, %v1131
    %v1133 = vpop.f32.mrb[0].mxu0
    %v1134 = vadd.f32 0.0, %v1133
    %v1135 = vpop.f32.mrb[0].mxu0
    %v1136 = vadd.f32 0.0, %v1135
    %v1137 = vpop.f32.mrb[0].mxu0
    %v1138 = vadd.f32 0.0, %v1137
    %1139 = vmatprep.mubr.bf16.mxu0 0
    %1140 = vmatmul.mubr.bf16.gmra.mrb[0].mxu0 %v271
    %v1141 = vpop.f32.mrb[0].mxu0
    %v1142 = vadd.f32 0.0, %v1141
    %v1143 = vpop.f32.mrb[0].mxu0
    %v1144 = vadd.f32 0.0, %v1143
    %v1145 = vpop.f32.mrb[0].mxu0
    %v1146 = vadd.f32 0.0, %v1145
    %v1147 = vpop.f32.mrb[0].mxu0
    %v1148 = vadd.f32 0.0, %v1147
    %1149 = vmatprep.mubr.bf16.mxu0 0
    %1150 = vmatmul.mubr.bf16.gmra.mrb[0].mxu0 %v274
    %v1151 = vpop.f32.mrb[0].mxu0
    %v1152 = vadd.f32 0.0, %v1151
    %v1153 = vpop.f32.mrb[0].mxu0
    %v1154 = vadd.f32 0.0, %v1153
    %v1155 = vpop.f32.mrb[0].mxu0
    %v1156 = vadd.f32 0.0, %v1155
    %v1157 = vpop.f32.mrb[0].mxu0
    %v1158 = vadd.f32 0.0, %v1157
    %1159 = vmatprep.mubr.bf16.mxu0 0
    %1160 = vmatmul.mubr.bf16.gmra.mrb[0].mxu0 %v277
    %v1161 = vpop.f32.mrb[0].mxu0
    %v1162 = vadd.f32 0.0, %v1161
    %v1163 = vpop.f32.mrb[0].mxu0
    %v1164 = vadd.f32 0.0, %v1163
    %v1165 = vpop.f32.mrb[0].mxu0
    %v1166 = vadd.f32 0.0, %v1165
    %v1167 = vpop.f32.mrb[0].mxu0
    %v1168 = vadd.f32 0.0, %v1167
    %1169 = vdwg.mxu0
    %1170 = vmatprep.subr.bf16.mxu0 0
    %1171 = vmatpush1.bf16.msra.mxu0 %v973
    %1172 = vmatprep.subr.bf16.mxu0 0
    %1173 = vmatpush1.bf16.msra.mxu0 0
    %1174 = vmatprep.subr.bf16.mxu0 0
    %1175 = vmatpush1.bf16.msra.mxu0 0
    %1176 = vmatprep.subr.bf16.mxu0 0
    %1177 = vmatpush1.bf16.msra.mxu0 0
    %1178 = vmatprep.subr.bf16.mxu0 0
    %1179 = vmatpush1.bf16.msra.mxu0 0
    %1180 = vmatprep.subr.bf16.mxu0 0
    %1181 = vmatpush1.bf16.msra.mxu0 0
    %1182 = vmatprep.subr.bf16.mxu0 0
    %1183 = vmatpush1.bf16.msra.mxu0 0
    %1184 = vmatprep.subr.bf16.mxu0 0
    %1185 = vmatpush1.bf16.msra.mxu0 0
    %1186 = vmatprep.subr.bf16.mxu0 0
    %1187 = vmatpush1.bf16.msra.mxu0 0
    %1188 = vmatprep.subr.bf16.mxu0 0
    %1189 = vmatpush1.bf16.msra.mxu0 0
    %1190 = vmatprep.subr.bf16.mxu0 0
    %1191 = vmatpush1.bf16.msra.mxu0 0
    %1192 = vmatprep.subr.bf16.mxu0 0
    %1193 = vmatpush1.bf16.msra.mxu0 0
    %1194 = vmatprep.subr.bf16.mxu0 0
    %1195 = vmatpush1.bf16.msra.mxu0 0
    %1196 = vmatprep.subr.bf16.mxu0 0
    %1197 = vmatpush1.bf16.msra.mxu0 0
    %1198 = vmatprep.subr.bf16.mxu0 0
    %1199 = vmatpush1.bf16.msra.mxu0 0
    %1200 = vmatprep.subr.bf16.mxu0 0
    %1201 = vmatpush1.bf16.msra.mxu0 0
    %1202 = vmatprep.mubr.bf16.mxu0 0
    %1203 = vmatmul.mubr.bf16.gmra.mrb[0].mxu0 %v232
    %v1204 = vpop.f32.mrb[0].mxu0
    %v1205 = vadd.f32 0.0, %v1204
    %v1206 = vpop.f32.mrb[0].mxu0
    %v1207 = vpop.f32.mrb[0].mxu0
    %v1208 = vadd.f32 0.0, %v1207
    %v1209 = vpop.f32.mrb[0].mxu0
    %1210 = vmatprep.mubr.bf16.mxu0 0
    %1211 = vmatmul.mubr.bf16.gmra.mrb[0].mxu0 %v235
    %v1212 = vpop.f32.mrb[0].mxu0
    %v1213 = vadd.f32 0.0, %v1212
    %v1214 = vpop.f32.mrb[0].mxu0
    %v1215 = vpop.f32.mrb[0].mxu0
    %v1216 = vadd.f32 0.0, %v1215
    %v1217 = vpop.f32.mrb[0].mxu0
    %1218 = vmatprep.mubr.bf16.mxu0 0
    %1219 = vmatmul.mubr.bf16.gmra.mrb[0].mxu0 %v238
    %v1220 = vpop.f32.mrb[0].mxu0
    %v1221 = vadd.f32 0.0, %v1220
    %v1222 = vpop.f32.mrb[0].mxu0
    %v1223 = vpop.f32.mrb[0].mxu0
    %v1224 = vadd.f32 0.0, %v1223
    %v1225 = vpop.f32.mrb[0].mxu0
    %1226 = vmatprep.mubr.bf16.mxu0 0
    %1227 = vmatmul.mubr.bf16.gmra.mrb[0].mxu0 %v241
    %v1228 = vpop.f32.mrb[0].mxu0
    %v1229 = vadd.f32 0.0, %v1228
    %v1230 = vpop.f32.mrb[0].mxu0
    %v1231 = vpop.f32.mrb[0].mxu0
    %v1232 = vadd.f32 0.0, %v1231
    %v1233 = vpop.f32.mrb[0].mxu0
    %1234 = vmatprep.mubr.bf16.mxu0 0
    %1235 = vmatmul.mubr.bf16.gmra.mrb[0].mxu0 %v244
    %v1236 = vpop.f32.mrb[0].mxu0
    %v1237 = vadd.f32 0.0, %v1236
    %v1238 = vpop.f32.mrb[0].mxu0
    %v1239 = vpop.f32.mrb[0].mxu0
    %v1240 = vadd.f32 0.0, %v1239
    %v1241 = vpop.f32.mrb[0].mxu0
    %1242 = vmatprep.mubr.bf16.mxu0 0
    %1243 = vmatmul.mubr.bf16.gmra.mrb[0].mxu0 %v247
    %v1244 = vpop.f32.mrb[0].mxu0
    %v1245 = vadd.f32 0.0, %v1244
    %v1246 = vpop.f32.mrb[0].mxu0
    %v1247 = vpop.f32.mrb[0].mxu0
    %v1248 = vadd.f32 0.0, %v1247
    %v1249 = vpop.f32.mrb[0].mxu0
    %1250 = vmatprep.mubr.bf16.mxu0 0
    %1251 = vmatmul.mubr.bf16.gmra.mrb[0].mxu0 %v250
    %v1252 = vpop.f32.mrb[0].mxu0
    %v1253 = vadd.f32 0.0, %v1252
    %v1254 = vpop.f32.mrb[0].mxu0
    %v1255 = vpop.f32.mrb[0].mxu0
    %v1256 = vadd.f32 0.0, %v1255
    %v1257 = vpop.f32.mrb[0].mxu0
    %1258 = vmatprep.mubr.bf16.mxu0 0
    %1259 = vmatmul.mubr.bf16.gmra.mrb[0].mxu0 %v253
    %v1260 = vpop.f32.mrb[0].mxu0
    %v1261 = vadd.f32 0.0, %v1260
    %v1262 = vpop.f32.mrb[0].mxu0
    %v1263 = vpop.f32.mrb[0].mxu0
    %v1264 = vadd.f32 0.0, %v1263
    %v1265 = vpop.f32.mrb[0].mxu0
    %1266 = vmatprep.mubr.bf16.mxu0 0
    %1267 = vmatmul.mubr.bf16.gmra.mrb[0].mxu0 %v256
    %v1268 = vpop.f32.mrb[0].mxu0
    %v1269 = vadd.f32 0.0, %v1268
    %v1270 = vpop.f32.mrb[0].mxu0
    %v1271 = vpop.f32.mrb[0].mxu0
    %v1272 = vadd.f32 0.0, %v1271
    %v1273 = vpop.f32.mrb[0].mxu0
    %1274 = vmatprep.mubr.bf16.mxu0 0
    %1275 = vmatmul.mubr.bf16.gmra.mrb[0].mxu0 %v259
    %v1276 = vpop.f32.mrb[0].mxu0
    %v1277 = vadd.f32 0.0, %v1276
    %v1278 = vpop.f32.mrb[0].mxu0
    %v1279 = vpop.f32.mrb[0].mxu0
    %v1280 = vadd.f32 0.0, %v1279
    %v1281 = vpop.f32.mrb[0].mxu0
    %1282 = vmatprep.mubr.bf16.mxu0 0
    %1283 = vmatmul.mubr.bf16.gmra.mrb[0].mxu0 %v262
    %v1284 = vpop.f32.mrb[0].mxu0
    %v1285 = vadd.f32 0.0, %v1284
    %v1286 = vpop.f32.mrb[0].mxu0
    %v1287 = vpop.f32.mrb[0].mxu0
    %v1288 = vadd.f32 0.0, %v1287
    %v1289 = vpop.f32.mrb[0].mxu0
    %1290 = vmatprep.mubr.bf16.mxu0 0
    %1291 = vmatmul.mubr.bf16.gmra.mrb[0].mxu0 %v265
    %v1292 = vpop.f32.mrb[0].mxu0
    %v1293 = vadd.f32 0.0, %v1292
    %v1294 = vpop.f32.mrb[0].mxu0
    %v1295 = vpop.f32.mrb[0].mxu0
    %v1296 = vadd.f32 0.0, %v1295
    %v1297 = vpop.f32.mrb[0].mxu0
    %1298 = vmatprep.mubr.bf16.mxu0 0
    %1299 = vmatmul.mubr.bf16.gmra.mrb[0].mxu0 %v268
    %v1300 = vpop.f32.mrb[0].mxu0
    %v1301 = vadd.f32 0.0, %v1300
    %v1302 = vpop.f32.mrb[0].mxu0
    %v1303 = vpop.f32.mrb[0].mxu0
    %v1304 = vadd.f32 0.0, %v1303
    %v1305 = vpop.f32.mrb[0].mxu0
    %1306 = vmatprep.mubr.bf16.mxu0 0
    %1307 = vmatmul.mubr.bf16.gmra.mrb[0].mxu0 %v271
    %v1308 = vpop.f32.mrb[0].mxu0
    %v1309 = vadd.f32 0.0, %v1308
    %v1310 = vpop.f32.mrb[0].mxu0
    %v1311 = vpop.f32.mrb[0].mxu0
    %v1312 = vadd.f32 0.0, %v1311
    %v1313 = vpop.f32.mrb[0].mxu0
    %1314 = vmatprep.mubr.bf16.mxu0 0
    %1315 = vmatmul.mubr.bf16.gmra.mrb[0].mxu0 %v274
    %v1316 = vpop.f32.mrb[0].mxu0
    %v1317 = vadd.f32 0.0, %v1316
    %v1318 = vpop.f32.mrb[0].mxu0
    %v1319 = vpop.f32.mrb[0].mxu0
    %v1320 = vadd.f32 0.0, %v1319
    %v1321 = vpop.f32.mrb[0].mxu0
    %1322 = vmatprep.mubr.bf16.mxu0 0
    %1323 = vmatmul.mubr.bf16.gmra.mrb[0].mxu0 %v277
    %v1324 = vpop.f32.mrb[0].mxu0
    %v1325 = vadd.f32 0.0, %v1324
    %v1326 = vpop.f32.mrb[0].mxu0
    %v1327 = vpop.f32.mrb[0].mxu0
    %v1328 = vadd.f32 0.0, %v1327
    %v1329 = vpop.f32.mrb[0].mxu0
    %1330 = vdwg.mxu0
    %v1431 = vunpack.c.l.b16 %v857
    %v1432 = vunpack.c.h.b16 %v857
    %v1433 = vunpack.c.l.b16 %v858
    %v1434 = vunpack.c.l.b16 %v859
    %v1435 = vunpack.c.h.b16 %v859
    %v1436 = vunpack.c.l.b16 %v860
    %v1437 = vunpack.c.l.b16 %v861
    %v1438 = vunpack.c.h.b16 %v861
    %v1439 = vunpack.c.l.b16 %v862
    %v1440 = vunpack.c.l.b16 %v863
    %v1441 = vunpack.c.h.b16 %v863
    %v1442 = vunpack.c.l.b16 %v864
    %v1443 = vunpack.c.l.b16 %v865
    %v1444 = vunpack.c.h.b16 %v865
    %v1445 = vunpack.c.l.b16 %v866
    %v1446 = vunpack.c.l.b16 %v867
    %v1447 = vunpack.c.h.b16 %v867
    %v1448 = vunpack.c.l.b16 %v868
    %v1449 = vunpack.c.l.b16 %v869
    %v1450 = vunpack.c.h.b16 %v869
    %v1451 = vunpack.c.l.b16 %v870
    %v1452 = vunpack.c.l.b16 %v871
    %v1453 = vunpack.c.h.b16 %v871
    %v1454 = vunpack.c.l.b16 %v872
    %v1455 = vunpack.c.l.b16 %v873
    %v1456 = vunpack.c.h.b16 %v873
    %v1457 = vunpack.c.l.b16 %v874
    %v1458 = vunpack.c.l.b16 %v875
    %v1459 = vunpack.c.h.b16 %v875
    %v1460 = vunpack.c.l.b16 %v876
    %v1461 = vunpack.c.l.b16 %v877
    %v1462 = vunpack.c.h.b16 %v877
    %v1463 = vunpack.c.l.b16 %v878
    %v1464 = vunpack.c.l.b16 %v879
    %v1465 = vunpack.c.h.b16 %v879
    %v1466 = vunpack.c.l.b16 %v880
    %v1467 = vunpack.c.l.b16 %v881
    %v1468 = vunpack.c.h.b16 %v881
    %v1469 = vunpack.c.l.b16 %v882
    %v1470 = vunpack.c.l.b16 %v883
    %v1471 = vunpack.c.h.b16 %v883
    %v1472 = vunpack.c.l.b16 %v884
    %v1473 = vunpack.c.l.b16 %v885
    %v1474 = vunpack.c.h.b16 %v885
    %v1475 = vunpack.c.l.b16 %v886
    %v1476 = vunpack.c.l.b16 %v887
    %v1477 = vunpack.c.h.b16 %v887
    %v1478 = vunpack.c.l.b16 %v888
    %v1479 = vunpack.c.l.b16 %v889
    %v1480 = vunpack.c.h.b16 %v889
    %v1481 = vunpack.c.l.b16 %v890
    %v1482 = vunpack.c.l.b16 %v891
    %v1483 = vunpack.c.h.b16 %v891
    %v1484 = vunpack.c.l.b16 %v892
    %v1485 = vunpack.c.l.b16 %v893
    %v1486 = vunpack.c.h.b16 %v893
    %v1487 = vunpack.c.l.b16 %v894
    %v1488 = vunpack.c.l.b16 %v895
    %v1489 = vunpack.c.h.b16 %v895
    %v1490 = vunpack.c.l.b16 %v896
    %v1491 = vunpack.c.l.b16 %v897
    %v1492 = vunpack.c.h.b16 %v897
    %v1493 = vunpack.c.l.b16 %v898
    %v1494 = vunpack.c.l.b16 %v899
    %v1495 = vunpack.c.h.b16 %v899
    %v1496 = vunpack.c.l.b16 %v900
    %v1497 = vunpack.c.l.b16 %v901
    %v1498 = vunpack.c.h.b16 %v901
    %v1499 = vunpack.c.l.b16 %v902
    %v1500 = vunpack.c.l.b16 %v903
    %v1501 = vunpack.c.h.b16 %v903
    %v1502 = vunpack.c.l.b16 %v904
    %v1503 = vunpack.c.l.b16 %v905
    %v1504 = vunpack.c.h.b16 %v905
    %v1505 = vunpack.c.l.b16 %v906
    %v1506 = vunpack.c.l.b16 %v907
    %v1507 = vunpack.c.h.b16 %v907
    %v1508 = vunpack.c.l.b16 %v908
    %v1509 = vunpack.c.l.b16 %v909
    %v1510 = vunpack.c.h.b16 %v909
    %v1511 = vunpack.c.l.b16 %v910
    %v1512 = vunpack.c.l.b16 %v911
    %v1513 = vunpack.c.h.b16 %v911
    %v1514 = vunpack.c.l.b16 %v912
    %v1515 = vunpack.c.l.b16 %v913
    %v1516 = vunpack.c.h.b16 %v913
    %v1517 = vunpack.c.l.b16 %v914
    %v1518 = vunpack.c.l.b16 %v915
    %v1519 = vunpack.c.h.b16 %v915
    %v1520 = vunpack.c.l.b16 %v916
    %v1521 = vunpack.c.l.b16 %v917
    %v1522 = vunpack.c.h.b16 %v917
    %v1523 = vunpack.c.l.b16 %v918
    %v1524 = vunpack.c.l.b16 %v919
    %v1525 = vunpack.c.h.b16 %v919
    %v1526 = vunpack.c.l.b16 %v920
    %v1527 = vunpack.c.l.b16 %v921
    %v1528 = vunpack.c.h.b16 %v921
    %v1529 = vunpack.c.l.b16 %v922
    %v1530 = vunpack.c.l.b16 %v923
    %v1531 = vunpack.c.h.b16 %v923
    %v1532 = vunpack.c.l.b16 %v924
    %v1533 = vunpack.c.l.b16 %v925
    %v1534 = vunpack.c.h.b16 %v925
    %v1535 = vunpack.c.l.b16 %v926
    %v1536 = vunpack.c.l.b16 %v927
    %v1537 = vunpack.c.h.b16 %v927
    %v1538 = vunpack.c.l.b16 %v928
    %v1539 = vunpack.c.l.b16 %v929
    %v1540 = vunpack.c.h.b16 %v929
    %v1541 = vunpack.c.l.b16 %v930
    %v1542 = vunpack.c.l.b16 %v931
    %v1543 = vunpack.c.h.b16 %v931
    %v1544 = vunpack.c.l.b16 %v932
    %v1545 = vunpack.c.l.b16 %v933
    %v1546 = vunpack.c.h.b16 %v933
    %v1547 = vunpack.c.l.b16 %v934
    %v1548 = vunpack.c.l.b16 %v935
    %v1549 = vunpack.c.h.b16 %v935
    %v1550 = vunpack.c.l.b16 %v936
    %v1551 = vunpack.c.l.b16 %v937
    %v1552 = vunpack.c.h.b16 %v937
    %v1553 = vunpack.c.l.b16 %v938
    %v1554 = vunpack.c.l.b16 %v939
    %v1555 = vunpack.c.h.b16 %v939
    %v1556 = vunpack.c.l.b16 %v940
    %v1557 = vunpack.c.l.b16 %v941
    %v1558 = vunpack.c.h.b16 %v941
    %v1559 = vunpack.c.l.b16 %v942
    %v1560 = vunpack.c.l.b16 %v943
    %v1561 = vunpack.c.h.b16 %v943
    %v1562 = vunpack.c.l.b16 %v944
    %v1563 = vunpack.c.l.b16 %v945
    %v1564 = vunpack.c.h.b16 %v945
    %v1565 = vunpack.c.l.b16 %v946
    %v1566 = vunpack.c.l.b16 %v947
    %v1567 = vunpack.c.h.b16 %v947
    %v1568 = vunpack.c.l.b16 %v948
    %v1569 = vunpack.c.l.b16 %v949
    %v1570 = vunpack.c.h.b16 %v949
    %v1571 = vunpack.c.l.b16 %v950
    %v1572 = vunpack.c.l.b16 %v951
    %v1573 = vunpack.c.h.b16 %v951
    %v1574 = vunpack.c.l.b16 %v952
    %v1575 = vunpack.c.l.b16 %v953
    %v1576 = vunpack.c.h.b16 %v953
    %v1577 = vunpack.c.l.b16 %v954
    %v1578 = vunpack.c.l.b16 %v955
    %v1579 = vunpack.c.h.b16 %v955
    %v1580 = vunpack.c.l.b16 %v956
    %v1581 = vpack.c.b16 %v1434, %v1431
    %v1582 = vpack.c.b16 %v1435, %v1432
    %v1583 = vpack.c.b16 %v1436, %v1433
    %v1584 = vpack.c.b16 %v1440, %v1437
    %v1585 = vpack.c.b16 %v1441, %v1438
    %v1586 = vpack.c.b16 %v1442, %v1439
    %v1587 = vpack.c.b16 %v1446, %v1443
    %v1588 = vpack.c.b16 %v1447, %v1444
    %v1589 = vpack.c.b16 %v1448, %v1445
    %v1590 = vpack.c.b16 %v1452, %v1449
    %v1591 = vpack.c.b16 %v1453, %v1450
    %v1592 = vpack.c.b16 %v1454, %v1451
    %v1593 = vpack.c.b16 %v1458, %v1455
    %v1594 = vpack.c.b16 %v1459, %v1456
    %v1595 = vpack.c.b16 %v1460, %v1457
    %v1596 = vpack.c.b16 %v1464, %v1461
    %v1597 = vpack.c.b16 %v1465, %v1462
    %v1598 = vpack.c.b16 %v1466, %v1463
    %v1599 = vpack.c.b16 %v1470, %v1467
    %v1600 = vpack.c.b16 %v1471, %v1468
    %v1601 = vpack.c.b16 %v1472, %v1469
    %v1602 = vpack.c.b16 %v1476, %v1473
    %v1603 = vpack.c.b16 %v1477, %v1474
    %v1604 = vpack.c.b16 %v1478, %v1475
    %v1605 = vpack.c.b16 %v1482, %v1479
    %v1606 = vpack.c.b16 %v1483, %v1480
    %v1607 = vpack.c.b16 %v1484, %v1481
    %v1608 = vpack.c.b16 %v1488, %v1485
    %v1609 = vpack.c.b16 %v1489, %v1486
    %v1610 = vpack.c.b16 %v1490, %v1487
    %v1611 = vpack.c.b16 %v1494, %v1491
    %v1612 = vpack.c.b16 %v1495, %v1492
    %v1613 = vpack.c.b16 %v1496, %v1493
    %v1614 = vpack.c.b16 %v1500, %v1497
    %v1615 = vpack.c.b16 %v1501, %v1498
    %v1616 = vpack.c.b16 %v1502, %v1499
    %v1617 = vpack.c.b16 %v1506, %v1503
    %v1618 = vpack.c.b16 %v1507, %v1504
    %v1619 = vpack.c.b16 %v1508, %v1505
    %v1620 = vpack.c.b16 %v1512, %v1509
    %v1621 = vpack.c.b16 %v1513, %v1510
    %v1622 = vpack.c.b16 %v1514, %v1511
    %v1623 = vpack.c.b16 %v1518, %v1515
    %v1624 = vpack.c.b16 %v1519, %v1516
    %v1625 = vpack.c.b16 %v1520, %v1517
    %v1626 = vpack.c.b16 %v1524, %v1521
    %v1627 = vpack.c.b16 %v1525, %v1522
    %v1628 = vpack.c.b16 %v1526, %v1523
    %v1629 = vpack.c.b16 %v1530, %v1527
    %v1630 = vpack.c.b16 %v1531, %v1528
    %v1631 = vpack.c.b16 %v1532, %v1529
    %v1632 = vpack.c.b16 %v1536, %v1533
    %v1633 = vpack.c.b16 %v1537, %v1534
    %v1634 = vpack.c.b16 %v1538, %v1535
    %v1635 = vpack.c.b16 %v1542, %v1539
    %v1636 = vpack.c.b16 %v1543, %v1540
    %v1637 = vpack.c.b16 %v1544, %v1541
    %v1638 = vpack.c.b16 %v1548, %v1545
    %v1639 = vpack.c.b16 %v1549, %v1546
    %v1640 = vpack.c.b16 %v1550, %v1547
    %v1641 = vpack.c.b16 %v1554, %v1551
    %v1642 = vpack.c.b16 %v1555, %v1552
    %v1643 = vpack.c.b16 %v1556, %v1553
    %v1644 = vpack.c.b16 %v1560, %v1557
    %v1645 = vpack.c.b16 %v1561, %v1558
    %v1646 = vpack.c.b16 %v1562, %v1559
    %v1647 = vpack.c.b16 %v1566, %v1563
    %v1648 = vpack.c.b16 %v1567, %v1564
    %v1649 = vpack.c.b16 %v1568, %v1565
    %v1650 = vpack.c.b16 %v1572, %v1569
    %v1651 = vpack.c.b16 %v1573, %v1570
    %v1652 = vpack.c.b16 %v1574, %v1571
    %v1653 = vpack.c.b16 %v1578, %v1575
    %v1654 = vpack.c.b16 %v1579, %v1576
    %v1655 = vpack.c.b16 %v1580, %v1577
    %v1732 = vsel %vm230, %v796, 0
    %v1735 = vsel %vm230, %v800, 0
    %v1738 = vsel %vm230, %v804, 0
    %v1741 = vsel %vm230, %v808, 0
    %v1744 = vsel %vm230, %v812, 0
    %v1747 = vsel %vm230, %v816, 0
    %v1750 = vsel %vm230, %v820, 0
    %v1753 = vsel %vm230, %v824, 0
    %v1756 = vsel %vm230, %v828, 0
    %v1759 = vsel %vm230, %v832, 0
    %v1762 = vsel %vm230, %v836, 0
    %v1765 = vsel %vm230, %v840, 0
    %v1768 = vsel %vm230, %v844, 0
    %v1771 = vsel %vm230, %v848, 0
    %v1774 = vsel %vm230, %v852, 0
    %v1777 = vsel %vm230, %v856, 0
    %1779 = vmatprep.subr.bf16.mxu0 %v1582
    %1780 = vmatpush1.bf16.msra.mxu0 %v1581
    %1781 = vmatprep.subr.bf16.mxu0 %v1585
    %1782 = vmatpush1.bf16.msra.mxu0 %v1584
    %1783 = vmatprep.subr.bf16.mxu0 %v1588
    %1784 = vmatpush1.bf16.msra.mxu0 %v1587
    %1785 = vmatprep.subr.bf16.mxu0 %v1591
    %1786 = vmatpush1.bf16.msra.mxu0 %v1590
    %1787 = vmatprep.subr.bf16.mxu0 %v1594
    %1788 = vmatpush1.bf16.msra.mxu0 %v1593
    %1789 = vmatprep.subr.bf16.mxu0 %v1597
    %1790 = vmatpush1.bf16.msra.mxu0 %v1596
    %1791 = vmatprep.subr.bf16.mxu0 %v1600
    %1792 = vmatpush1.bf16.msra.mxu0 %v1599
    %1793 = vmatprep.subr.bf16.mxu0 %v1603
    %1794 = vmatpush1.bf16.msra.mxu0 %v1602
    %1795 = vmatprep.subr.bf16.mxu0 %v1606
    %1796 = vmatpush1.bf16.msra.mxu0 %v1605
    %1797 = vmatprep.subr.bf16.mxu0 %v1609
    %1798 = vmatpush1.bf16.msra.mxu0 %v1608
    %1799 = vmatprep.subr.bf16.mxu0 %v1612
    %1800 = vmatpush1.bf16.msra.mxu0 %v1611
    %1801 = vmatprep.subr.bf16.mxu0 %v1615
    %1802 = vmatpush1.bf16.msra.mxu0 %v1614
    %1803 = vmatprep.subr.bf16.mxu0 %v1618
    %1804 = vmatpush1.bf16.msra.mxu0 %v1617
    %1805 = vmatprep.subr.bf16.mxu0 %v1621
    %1806 = vmatpush1.bf16.msra.mxu0 %v1620
    %1807 = vmatprep.subr.bf16.mxu0 %v1624
    %1808 = vmatpush1.bf16.msra.mxu0 %v1623
    %1809 = vmatprep.subr.bf16.mxu0 %v1627
    %1810 = vmatpush1.bf16.msra.mxu0 %v1626
    %1811 = vmatprep.mubr.bf16.mxu0 %v794
    %1812 = vmatmul.mubr.bf16.gmra.mrb[0].mxu0 %v793
    %v1813 = vpop.f32.mrb[0].mxu0
    %v1814 = vadd.f32 %v1012, %v1813
    %v1815 = vpop.f32.mrb[0].mxu0
    %v1816 = vadd.f32 %v1014, %v1815
    %v1817 = vpop.f32.mrb[0].mxu0
    %v1818 = vadd.f32 %v1016, %v1817
    %v1819 = vpop.f32.mrb[0].mxu0
    %v1820 = vadd.f32 %v1018, %v1819
    %1821 = vmatprep.mubr.bf16.mxu0 %v798
    %1822 = vmatmul.mubr.bf16.gmra.mrb[0].mxu0 %v797
    %v1823 = vpop.f32.mrb[0].mxu0
    %v1824 = vadd.f32 %v1022, %v1823
    %v1825 = vpop.f32.mrb[0].mxu0
    %v1826 = vadd.f32 %v1024, %v1825
    %v1827 = vpop.f32.mrb[0].mxu0
    %v1828 = vadd.f32 %v1026, %v1827
    %v1829 = vpop.f32.mrb[0].mxu0
    %v1830 = vadd.f32 %v1028, %v1829
    %1831 = vmatprep.mubr.bf16.mxu0 %v802
    %1832 = vmatmul.mubr.bf16.gmra.mrb[0].mxu0 %v801
    %v1833 = vpop.f32.mrb[0].mxu0
    %v1834 = vadd.f32 %v1032, %v1833
    %v1835 = vpop.f32.mrb[0].mxu0
    %v1836 = vadd.f32 %v1034, %v1835
    %v1837 = vpop.f32.mrb[0].mxu0
    %v1838 = vadd.f32 %v1036, %v1837
    %v1839 = vpop.f32.mrb[0].mxu0
    %v1840 = vadd.f32 %v1038, %v1839
    %1841 = vmatprep.mubr.bf16.mxu0 %v806
    %1842 = vmatmul.mubr.bf16.gmra.mrb[0].mxu0 %v805
    %v1843 = vpop.f32.mrb[0].mxu0
    %v1844 = vadd.f32 %v1042, %v1843
    %v1845 = vpop.f32.mrb[0].mxu0
    %v1846 = vadd.f32 %v1044, %v1845
    %v1847 = vpop.f32.mrb[0].mxu0
    %v1848 = vadd.f32 %v1046, %v1847
    %v1849 = vpop.f32.mrb[0].mxu0
    %v1850 = vadd.f32 %v1048, %v1849
    %1851 = vmatprep.mubr.bf16.mxu0 %v810
    %1852 = vmatmul.mubr.bf16.gmra.mrb[0].mxu0 %v809
    %v1853 = vpop.f32.mrb[0].mxu0
    %v1854 = vadd.f32 %v1052, %v1853
    %v1855 = vpop.f32.mrb[0].mxu0
    %v1856 = vadd.f32 %v1054, %v1855
    %v1857 = vpop.f32.mrb[0].mxu0
    %v1858 = vadd.f32 %v1056, %v1857
    %v1859 = vpop.f32.mrb[0].mxu0
    %v1860 = vadd.f32 %v1058, %v1859
    %1861 = vmatprep.mubr.bf16.mxu0 %v814
    %1862 = vmatmul.mubr.bf16.gmra.mrb[0].mxu0 %v813
    %v1863 = vpop.f32.mrb[0].mxu0
    %v1864 = vadd.f32 %v1062, %v1863
    %v1865 = vpop.f32.mrb[0].mxu0
    %v1866 = vadd.f32 %v1064, %v1865
    %v1867 = vpop.f32.mrb[0].mxu0
    %v1868 = vadd.f32 %v1066, %v1867
    %v1869 = vpop.f32.mrb[0].mxu0
    %v1870 = vadd.f32 %v1068, %v1869
    %1871 = vmatprep.mubr.bf16.mxu0 %v818
    %1872 = vmatmul.mubr.bf16.gmra.mrb[0].mxu0 %v817
    %v1873 = vpop.f32.mrb[0].mxu0
    %v1874 = vadd.f32 %v1072, %v1873
    %v1875 = vpop.f32.mrb[0].mxu0
    %v1876 = vadd.f32 %v1074, %v1875
    %v1877 = vpop.f32.mrb[0].mxu0
    %v1878 = vadd.f32 %v1076, %v1877
    %v1879 = vpop.f32.mrb[0].mxu0
    %v1880 = vadd.f32 %v1078, %v1879
    %1881 = vmatprep.mubr.bf16.mxu0 %v822
    %1882 = vmatmul.mubr.bf16.gmra.mrb[0].mxu0 %v821
    %v1883 = vpop.f32.mrb[0].mxu0
    %v1884 = vadd.f32 %v1082, %v1883
    %v1885 = vpop.f32.mrb[0].mxu0
    %v1886 = vadd.f32 %v1084, %v1885
    %v1887 = vpop.f32.mrb[0].mxu0
    %v1888 = vadd.f32 %v1086, %v1887
    %v1889 = vpop.f32.mrb[0].mxu0
    %v1890 = vadd.f32 %v1088, %v1889
    %1891 = vmatprep.mubr.bf16.mxu0 %v826
    %1892 = vmatmul.mubr.bf16.gmra.mrb[0].mxu0 %v825
    %v1893 = vpop.f32.mrb[0].mxu0
    %v1894 = vadd.f32 %v1092, %v1893
    %v1895 = vpop.f32.mrb[0].mxu0
    %v1896 = vadd.f32 %v1094, %v1895
    %v1897 = vpop.f32.mrb[0].mxu0
    %v1898 = vadd.f32 %v1096, %v1897
    %v1899 = vpop.f32.mrb[0].mxu0
    %v1900 = vadd.f32 %v1098, %v1899
    %1901 = vmatprep.mubr.bf16.mxu0 %v830
    %1902 = vmatmul.mubr.bf16.gmra.mrb[0].mxu0 %v829
    %v1903 = vpop.f32.mrb[0].mxu0
    %v1904 = vadd.f32 %v1102, %v1903
    %v1905 = vpop.f32.mrb[0].mxu0
    %v1906 = vadd.f32 %v1104, %v1905
    %v1907 = vpop.f32.mrb[0].mxu0
    %v1908 = vadd.f32 %v1106, %v1907
    %v1909 = vpop.f32.mrb[0].mxu0
    %v1910 = vadd.f32 %v1108, %v1909
    %1911 = vmatprep.mubr.bf16.mxu0 %v834
    %1912 = vmatmul.mubr.bf16.gmra.mrb[0].mxu0 %v833
    %v1913 = vpop.f32.mrb[0].mxu0
    %v1914 = vadd.f32 %v1112, %v1913
    %v1915 = vpop.f32.mrb[0].mxu0
    %v1916 = vadd.f32 %v1114, %v1915
    %v1917 = vpop.f32.mrb[0].mxu0
    %v1918 = vadd.f32 %v1116, %v1917
    %v1919 = vpop.f32.mrb[0].mxu0
    %v1920 = vadd.f32 %v1118, %v1919
    %1921 = vmatprep.mubr.bf16.mxu0 %v838
    %1922 = vmatmul.mubr.bf16.gmra.mrb[0].mxu0 %v837
    %v1923 = vpop.f32.mrb[0].mxu0
    %v1924 = vadd.f32 %v1122, %v1923
    %v1925 = vpop.f32.mrb[0].mxu0
    %v1926 = vadd.f32 %v1124, %v1925
    %v1927 = vpop.f32.mrb[0].mxu0
    %v1928 = vadd.f32 %v1126, %v1927
    %v1929 = vpop.f32.mrb[0].mxu0
    %v1930 = vadd.f32 %v1128, %v1929
    %1931 = vmatprep.mubr.bf16.mxu0 %v842
    %1932 = vmatmul.mubr.bf16.gmra.mrb[0].mxu0 %v841
    %v1933 = vpop.f32.mrb[0].mxu0
    %v1934 = vadd.f32 %v1132, %v1933
    %v1935 = vpop.f32.mrb[0].mxu0
    %v1936 = vadd.f32 %v1134, %v1935
    %v1937 = vpop.f32.mrb[0].mxu0
    %v1938 = vadd.f32 %v1136, %v1937
    %v1939 = vpop.f32.mrb[0].mxu0
    %v1940 = vadd.f32 %v1138, %v1939
    %1941 = vmatprep.mubr.bf16.mxu0 %v846
    %1942 = vmatmul.mubr.bf16.gmra.mrb[0].mxu0 %v845
    %v1943 = vpop.f32.mrb[0].mxu0
    %v1944 = vadd.f32 %v1142, %v1943
    %v1945 = vpop.f32.mrb[0].mxu0
    %v1946 = vadd.f32 %v1144, %v1945
    %v1947 = vpop.f32.mrb[0].mxu0
    %v1948 = vadd.f32 %v1146, %v1947
    %v1949 = vpop.f32.mrb[0].mxu0
    %v1950 = vadd.f32 %v1148, %v1949
    %1951 = vmatprep.mubr.bf16.mxu0 %v850
    %1952 = vmatmul.mubr.bf16.gmra.mrb[0].mxu0 %v849
    %v1953 = vpop.f32.mrb[0].mxu0
    %v1954 = vadd.f32 %v1152, %v1953
    %v1955 = vpop.f32.mrb[0].mxu0
    %v1956 = vadd.f32 %v1154, %v1955
    %v1957 = vpop.f32.mrb[0].mxu0
    %v1958 = vadd.f32 %v1156, %v1957
    %v1959 = vpop.f32.mrb[0].mxu0
    %v1960 = vadd.f32 %v1158, %v1959
    %1961 = vmatprep.mubr.bf16.mxu0 %v854
    %1962 = vmatmul.mubr.bf16.gmra.mrb[0].mxu0 %v853
    %v1963 = vpop.f32.mrb[0].mxu0
    %v1964 = vadd.f32 %v1162, %v1963
    %v1965 = vpop.f32.mrb[0].mxu0
    %v1966 = vadd.f32 %v1164, %v1965
    %v1967 = vpop.f32.mrb[0].mxu0
    %v1968 = vadd.f32 %v1166, %v1967
    %v1969 = vpop.f32.mrb[0].mxu0
    %v1970 = vadd.f32 %v1168, %v1969
    %1971 = vdwg.mxu0
    %1972 = vmatprep.subr.bf16.mxu0 %v1630
    %1973 = vmatpush1.bf16.msra.mxu0 %v1629
    %1974 = vmatprep.subr.bf16.mxu0 %v1633
    %1975 = vmatpush1.bf16.msra.mxu0 %v1632
    %1976 = vmatprep.subr.bf16.mxu0 %v1636
    %1977 = vmatpush1.bf16.msra.mxu0 %v1635
    %1978 = vmatprep.subr.bf16.mxu0 %v1639
    %1979 = vmatpush1.bf16.msra.mxu0 %v1638
    %1980 = vmatprep.subr.bf16.mxu0 %v1642
    %1981 = vmatpush1.bf16.msra.mxu0 %v1641
    %1982 = vmatprep.subr.bf16.mxu0 %v1645
    %1983 = vmatpush1.bf16.msra.mxu0 %v1644
    %1984 = vmatprep.subr.bf16.mxu0 %v1648
    %1985 = vmatpush1.bf16.msra.mxu0 %v1647
    %1986 = vmatprep.subr.bf16.mxu0 %v1651
    %1987 = vmatpush1.bf16.msra.mxu0 %v1650
    %1988 = vmatprep.subr.bf16.mxu0 %v1654
    %1989 = vmatpush1.bf16.msra.mxu0 %v1653
    %1990 = vmatprep.subr.bf16.mxu0 0
    %1991 = vmatpush1.bf16.msra.mxu0 0
    %1992 = vmatprep.subr.bf16.mxu0 0
    %1993 = vmatpush1.bf16.msra.mxu0 0
    %1994 = vmatprep.subr.bf16.mxu0 0
    %1995 = vmatpush1.bf16.msra.mxu0 0
    %1996 = vmatprep.subr.bf16.mxu0 0
    %1997 = vmatpush1.bf16.msra.mxu0 0
    %1998 = vmatprep.subr.bf16.mxu0 0
    %1999 = vmatpush1.bf16.msra.mxu0 0
    %2000 = vmatprep.subr.bf16.mxu0 0
    %2001 = vmatpush1.bf16.msra.mxu0 0
    %2002 = vmatprep.subr.bf16.mxu0 0
    %2003 = vmatpush1.bf16.msra.mxu0 0
    %2004 = vmatprep.mubr.bf16.mxu0 %v1732
    %2005 = vmatmul.mubr.bf16.gmra.mrb[0].mxu0 %v795
    %v2006 = vpop.f32.mrb[0].mxu0
    %v2007 = vadd.f32 %v1814, %v2006
    %v2008 = vpop.f32.mrb[0].mxu0
    %v2009 = vadd.f32 %v1816, %v2008
    %v2010 = vpop.f32.mrb[0].mxu0
    %v2011 = vadd.f32 %v1818, %v2010
    %v2012 = vpop.f32.mrb[0].mxu0
    %v2013 = vadd.f32 %v1820, %v2012
    %2014 = vmatprep.mubr.bf16.mxu0 %v1735
    %2015 = vmatmul.mubr.bf16.gmra.mrb[0].mxu0 %v799
    %v2016 = vpop.f32.mrb[0].mxu0
    %v2017 = vadd.f32 %v1824, %v2016
    %v2018 = vpop.f32.mrb[0].mxu0
    %v2019 = vadd.f32 %v1826, %v2018
    %v2020 = vpop.f32.mrb[0].mxu0
    %v2021 = vadd.f32 %v1828, %v2020
    %v2022 = vpop.f32.mrb[0].mxu0
    %v2023 = vadd.f32 %v1830, %v2022
    %2024 = vmatprep.mubr.bf16.mxu0 %v1738
    %2025 = vmatmul.mubr.bf16.gmra.mrb[0].mxu0 %v803
    %v2026 = vpop.f32.mrb[0].mxu0
    %v2027 = vadd.f32 %v1834, %v2026
    %v2028 = vpop.f32.mrb[0].mxu0
    %v2029 = vadd.f32 %v1836, %v2028
    %v2030 = vpop.f32.mrb[0].mxu0
    %v2031 = vadd.f32 %v1838, %v2030
    %v2032 = vpop.f32.mrb[0].mxu0
    %v2033 = vadd.f32 %v1840, %v2032
    %2034 = vmatprep.mubr.bf16.mxu0 %v1741
    %2035 = vmatmul.mubr.bf16.gmra.mrb[0].mxu0 %v807
    %v2036 = vpop.f32.mrb[0].mxu0
    %v2037 = vadd.f32 %v1844, %v2036
    %v2038 = vpop.f32.mrb[0].mxu0
    %v2039 = vadd.f32 %v1846, %v2038
    %v2040 = vpop.f32.mrb[0].mxu0
    %v2041 = vadd.f32 %v1848, %v2040
    %v2042 = vpop.f32.mrb[0].mxu0
    %v2043 = vadd.f32 %v1850, %v2042
    %2044 = vmatprep.mubr.bf16.mxu0 %v1744
    %2045 = vmatmul.mubr.bf16.gmra.mrb[0].mxu0 %v811
    %v2046 = vpop.f32.mrb[0].mxu0
    %v2047 = vadd.f32 %v1854, %v2046
    %v2048 = vpop.f32.mrb[0].mxu0
    %v2049 = vadd.f32 %v1856, %v2048
    %v2050 = vpop.f32.mrb[0].mxu0
    %v2051 = vadd.f32 %v1858, %v2050
    %v2052 = vpop.f32.mrb[0].mxu0
    %v2053 = vadd.f32 %v1860, %v2052
    %2054 = vmatprep.mubr.bf16.mxu0 %v1747
    %2055 = vmatmul.mubr.bf16.gmra.mrb[0].mxu0 %v815
    %v2056 = vpop.f32.mrb[0].mxu0
    %v2057 = vadd.f32 %v1864, %v2056
    %v2058 = vpop.f32.mrb[0].mxu0
    %v2059 = vadd.f32 %v1866, %v2058
    %v2060 = vpop.f32.mrb[0].mxu0
    %v2061 = vadd.f32 %v1868, %v2060
    %v2062 = vpop.f32.mrb[0].mxu0
    %v2063 = vadd.f32 %v1870, %v2062
    %2064 = vmatprep.mubr.bf16.mxu0 %v1750
    %2065 = vmatmul.mubr.bf16.gmra.mrb[0].mxu0 %v819
    %v2066 = vpop.f32.mrb[0].mxu0
    %v2067 = vadd.f32 %v1874, %v2066
    %v2068 = vpop.f32.mrb[0].mxu0
    %v2069 = vadd.f32 %v1876, %v2068
    %v2070 = vpop.f32.mrb[0].mxu0
    %v2071 = vadd.f32 %v1878, %v2070
    %v2072 = vpop.f32.mrb[0].mxu0
    %v2073 = vadd.f32 %v1880, %v2072
    %2074 = vmatprep.mubr.bf16.mxu0 %v1753
    %2075 = vmatmul.mubr.bf16.gmra.mrb[0].mxu0 %v823
    %v2076 = vpop.f32.mrb[0].mxu0
    %v2077 = vadd.f32 %v1884, %v2076
    %v2078 = vpop.f32.mrb[0].mxu0
    %v2079 = vadd.f32 %v1886, %v2078
    %v2080 = vpop.f32.mrb[0].mxu0
    %v2081 = vadd.f32 %v1888, %v2080
    %v2082 = vpop.f32.mrb[0].mxu0
    %v2083 = vadd.f32 %v1890, %v2082
    %2084 = vmatprep.mubr.bf16.mxu0 %v1756
    %2085 = vmatmul.mubr.bf16.gmra.mrb[0].mxu0 %v827
    %v2086 = vpop.f32.mrb[0].mxu0
    %v2087 = vadd.f32 %v1894, %v2086
    %v2088 = vpop.f32.mrb[0].mxu0
    %v2089 = vadd.f32 %v1896, %v2088
    %v2090 = vpop.f32.mrb[0].mxu0
    %v2091 = vadd.f32 %v1898, %v2090
    %v2092 = vpop.f32.mrb[0].mxu0
    %v2093 = vadd.f32 %v1900, %v2092
    %2094 = vmatprep.mubr.bf16.mxu0 %v1759
    %2095 = vmatmul.mubr.bf16.gmra.mrb[0].mxu0 %v831
    %v2096 = vpop.f32.mrb[0].mxu0
    %v2097 = vadd.f32 %v1904, %v2096
    %v2098 = vpop.f32.mrb[0].mxu0
    %v2099 = vadd.f32 %v1906, %v2098
    %v2100 = vpop.f32.mrb[0].mxu0
    %v2101 = vadd.f32 %v1908, %v2100
    %v2102 = vpop.f32.mrb[0].mxu0
    %v2103 = vadd.f32 %v1910, %v2102
    %2104 = vmatprep.mubr.bf16.mxu0 %v1762
    %2105 = vmatmul.mubr.bf16.gmra.mrb[0].mxu0 %v835
    %v2106 = vpop.f32.mrb[0].mxu0
    %v2107 = vadd.f32 %v1914, %v2106
    %v2108 = vpop.f32.mrb[0].mxu0
    %v2109 = vadd.f32 %v1916, %v2108
    %v2110 = vpop.f32.mrb[0].mxu0
    %v2111 = vadd.f32 %v1918, %v2110
    %v2112 = vpop.f32.mrb[0].mxu0
    %v2113 = vadd.f32 %v1920, %v2112
    %2114 = vmatprep.mubr.bf16.mxu0 %v1765
    %2115 = vmatmul.mubr.bf16.gmra.mrb[0].mxu0 %v839
    %v2116 = vpop.f32.mrb[0].mxu0
    %v2117 = vadd.f32 %v1924, %v2116
    %v2118 = vpop.f32.mrb[0].mxu0
    %v2119 = vadd.f32 %v1926, %v2118
    %v2120 = vpop.f32.mrb[0].mxu0
    %v2121 = vadd.f32 %v1928, %v2120
    %v2122 = vpop.f32.mrb[0].mxu0
    %v2123 = vadd.f32 %v1930, %v2122
    %2124 = vmatprep.mubr.bf16.mxu0 %v1768
    %2125 = vmatmul.mubr.bf16.gmra.mrb[0].mxu0 %v843
    %v2126 = vpop.f32.mrb[0].mxu0
    %v2127 = vadd.f32 %v1934, %v2126
    %v2128 = vpop.f32.mrb[0].mxu0
    %v2129 = vadd.f32 %v1936, %v2128
    %v2130 = vpop.f32.mrb[0].mxu0
    %v2131 = vadd.f32 %v1938, %v2130
    %v2132 = vpop.f32.mrb[0].mxu0
    %v2133 = vadd.f32 %v1940, %v2132
    %2134 = vmatprep.mubr.bf16.mxu0 %v1771
    %2135 = vmatmul.mubr.bf16.gmra.mrb[0].mxu0 %v847
    %v2136 = vpop.f32.mrb[0].mxu0
    %v2137 = vadd.f32 %v1944, %v2136
    %v2138 = vpop.f32.mrb[0].mxu0
    %v2139 = vadd.f32 %v1946, %v2138
    %v2140 = vpop.f32.mrb[0].mxu0
    %v2141 = vadd.f32 %v1948, %v2140
    %v2142 = vpop.f32.mrb[0].mxu0
    %v2143 = vadd.f32 %v1950, %v2142
    %2144 = vmatprep.mubr.bf16.mxu0 %v1774
    %2145 = vmatmul.mubr.bf16.gmra.mrb[0].mxu0 %v851
    %v2146 = vpop.f32.mrb[0].mxu0
    %v2147 = vadd.f32 %v1954, %v2146
    %v2148 = vpop.f32.mrb[0].mxu0
    %v2149 = vadd.f32 %v1956, %v2148
    %v2150 = vpop.f32.mrb[0].mxu0
    %v2151 = vadd.f32 %v1958, %v2150
    %v2152 = vpop.f32.mrb[0].mxu0
    %v2153 = vadd.f32 %v1960, %v2152
    %2154 = vmatprep.mubr.bf16.mxu0 %v1777
    %2155 = vmatmul.mubr.bf16.gmra.mrb[0].mxu0 %v855
    %v2156 = vpop.f32.mrb[0].mxu0
    %v2157 = vadd.f32 %v1964, %v2156
    %v2158 = vpop.f32.mrb[0].mxu0
    %v2159 = vadd.f32 %v1966, %v2158
    %v2160 = vpop.f32.mrb[0].mxu0
    %v2161 = vadd.f32 %v1968, %v2160
    %v2162 = vpop.f32.mrb[0].mxu0
    %v2163 = vadd.f32 %v1970, %v2162
    %2164 = vdwg.mxu0
    %2165 = vmatprep.subr.bf16.mxu0 0
    %2166 = vmatpush1.bf16.msra.mxu0 %v1583
    %2167 = vmatprep.subr.bf16.mxu0 0
    %2168 = vmatpush1.bf16.msra.mxu0 %v1586
    %2169 = vmatprep.subr.bf16.mxu0 0
    %2170 = vmatpush1.bf16.msra.mxu0 %v1589
    %2171 = vmatprep.subr.bf16.mxu0 0
    %2172 = vmatpush1.bf16.msra.mxu0 %v1592
    %2173 = vmatprep.subr.bf16.mxu0 0
    %2174 = vmatpush1.bf16.msra.mxu0 %v1595
    %2175 = vmatprep.subr.bf16.mxu0 0
    %2176 = vmatpush1.bf16.msra.mxu0 %v1598
    %2177 = vmatprep.subr.bf16.mxu0 0
    %2178 = vmatpush1.bf16.msra.mxu0 %v1601
    %2179 = vmatprep.subr.bf16.mxu0 0
    %2180 = vmatpush1.bf16.msra.mxu0 %v1604
    %2181 = vmatprep.subr.bf16.mxu0 0
    %2182 = vmatpush1.bf16.msra.mxu0 %v1607
    %2183 = vmatprep.subr.bf16.mxu0 0
    %2184 = vmatpush1.bf16.msra.mxu0 %v1610
    %2185 = vmatprep.subr.bf16.mxu0 0
    %2186 = vmatpush1.bf16.msra.mxu0 %v1613
    %2187 = vmatprep.subr.bf16.mxu0 0
    %2188 = vmatpush1.bf16.msra.mxu0 %v1616
    %2189 = vmatprep.subr.bf16.mxu0 0
    %2190 = vmatpush1.bf16.msra.mxu0 %v1619
    %2191 = vmatprep.subr.bf16.mxu0 0
    %2192 = vmatpush1.bf16.msra.mxu0 %v1622
    %2193 = vmatprep.subr.bf16.mxu0 0
    %2194 = vmatpush1.bf16.msra.mxu0 %v1625
    %2195 = vmatprep.subr.bf16.mxu0 0
    %2196 = vmatpush1.bf16.msra.mxu0 %v1628
    %2197 = vmatprep.mubr.bf16.mxu0 %v794
    %2198 = vmatmul.mubr.bf16.gmra.mrb[0].mxu0 %v793
    %v2199 = vpop.f32.mrb[0].mxu0
    %v2200 = vadd.f32 %v1205, %v2199
    %v2201 = vpop.f32.mrb[0].mxu0
    %v2202 = vpop.f32.mrb[0].mxu0
    %v2203 = vadd.f32 %v1208, %v2202
    %v2204 = vpop.f32.mrb[0].mxu0
    %2205 = vmatprep.mubr.bf16.mxu0 %v798
    %2206 = vmatmul.mubr.bf16.gmra.mrb[0].mxu0 %v797
    %v2207 = vpop.f32.mrb[0].mxu0
    %v2208 = vadd.f32 %v1213, %v2207
    %v2209 = vpop.f32.mrb[0].mxu0
    %v2210 = vpop.f32.mrb[0].mxu0
    %v2211 = vadd.f32 %v1216, %v2210
    %v2212 = vpop.f32.mrb[0].mxu0
    %2213 = vmatprep.mubr.bf16.mxu0 %v802
    %2214 = vmatmul.mubr.bf16.gmra.mrb[0].mxu0 %v801
    %v2215 = vpop.f32.mrb[0].mxu0
    %v2216 = vadd.f32 %v1221, %v2215
    %v2217 = vpop.f32.mrb[0].mxu0
    %v2218 = vpop.f32.mrb[0].mxu0
    %v2219 = vadd.f32 %v1224, %v2218
    %v2220 = vpop.f32.mrb[0].mxu0
    %2221 = vmatprep.mubr.bf16.mxu0 %v806
    %2222 = vmatmul.mubr.bf16.gmra.mrb[0].mxu0 %v805
    %v2223 = vpop.f32.mrb[0].mxu0
    %v2224 = vadd.f32 %v1229, %v2223
    %v2225 = vpop.f32.mrb[0].mxu0
    %v2226 = vpop.f32.mrb[0].mxu0
    %v2227 = vadd.f32 %v1232, %v2226
    %v2228 = vpop.f32.mrb[0].mxu0
    %2229 = vmatprep.mubr.bf16.mxu0 %v810
    %2230 = vmatmul.mubr.bf16.gmra.mrb[0].mxu0 %v809
    %v2231 = vpop.f32.mrb[0].mxu0
    %v2232 = vadd.f32 %v1237, %v2231
    %v2233 = vpop.f32.mrb[0].mxu0
    %v2234 = vpop.f32.mrb[0].mxu0
    %v2235 = vadd.f32 %v1240, %v2234
    %v2236 = vpop.f32.mrb[0].mxu0
    %2237 = vmatprep.mubr.bf16.mxu0 %v814
    %2238 = vmatmul.mubr.bf16.gmra.mrb[0].mxu0 %v813
    %v2239 = vpop.f32.mrb[0].mxu0
    %v2240 = vadd.f32 %v1245, %v2239
    %v2241 = vpop.f32.mrb[0].mxu0
    %v2242 = vpop.f32.mrb[0].mxu0
    %v2243 = vadd.f32 %v1248, %v2242
    %v2244 = vpop.f32.mrb[0].mxu0
    %2245 = vmatprep.mubr.bf16.mxu0 %v818
    %2246 = vmatmul.mubr.bf16.gmra.mrb[0].mxu0 %v817
    %v2247 = vpop.f32.mrb[0].mxu0
    %v2248 = vadd.f32 %v1253, %v2247
    %v2249 = vpop.f32.mrb[0].mxu0
    %v2250 = vpop.f32.mrb[0].mxu0
    %v2251 = vadd.f32 %v1256, %v2250
    %v2252 = vpop.f32.mrb[0].mxu0
    %2253 = vmatprep.mubr.bf16.mxu0 %v822
    %2254 = vmatmul.mubr.bf16.gmra.mrb[0].mxu0 %v821
    %v2255 = vpop.f32.mrb[0].mxu0
    %v2256 = vadd.f32 %v1261, %v2255
    %v2257 = vpop.f32.mrb[0].mxu0
    %v2258 = vpop.f32.mrb[0].mxu0
    %v2259 = vadd.f32 %v1264, %v2258
    %v2260 = vpop.f32.mrb[0].mxu0
    %2261 = vmatprep.mubr.bf16.mxu0 %v826
    %2262 = vmatmul.mubr.bf16.gmra.mrb[0].mxu0 %v825
    %v2263 = vpop.f32.mrb[0].mxu0
    %v2264 = vadd.f32 %v1269, %v2263
    %v2265 = vpop.f32.mrb[0].mxu0
    %v2266 = vpop.f32.mrb[0].mxu0
    %v2267 = vadd.f32 %v1272, %v2266
    %v2268 = vpop.f32.mrb[0].mxu0
    %2269 = vmatprep.mubr.bf16.mxu0 %v830
    %2270 = vmatmul.mubr.bf16.gmra.mrb[0].mxu0 %v829
    %v2271 = vpop.f32.mrb[0].mxu0
    %v2272 = vadd.f32 %v1277, %v2271
    %v2273 = vpop.f32.mrb[0].mxu0
    %v2274 = vpop.f32.mrb[0].mxu0
    %v2275 = vadd.f32 %v1280, %v2274
    %v2276 = vpop.f32.mrb[0].mxu0
    %2277 = vmatprep.mubr.bf16.mxu0 %v834
    %2278 = vmatmul.mubr.bf16.gmra.mrb[0].mxu0 %v833
    %v2279 = vpop.f32.mrb[0].mxu0
    %v2280 = vadd.f32 %v1285, %v2279
    %v2281 = vpop.f32.mrb[0].mxu0
    %v2282 = vpop.f32.mrb[0].mxu0
    %v2283 = vadd.f32 %v1288, %v2282
    %v2284 = vpop.f32.mrb[0].mxu0
    %2285 = vmatprep.mubr.bf16.mxu0 %v838
    %2286 = vmatmul.mubr.bf16.gmra.mrb[0].mxu0 %v837
    %v2287 = vpop.f32.mrb[0].mxu0
    %v2288 = vadd.f32 %v1293, %v2287
    %v2289 = vpop.f32.mrb[0].mxu0
    %v2290 = vpop.f32.mrb[0].mxu0
    %v2291 = vadd.f32 %v1296, %v2290
    %v2292 = vpop.f32.mrb[0].mxu0
    %2293 = vmatprep.mubr.bf16.mxu0 %v842
    %2294 = vmatmul.mubr.bf16.gmra.mrb[0].mxu0 %v841
    %v2295 = vpop.f32.mrb[0].mxu0
    %v2296 = vadd.f32 %v1301, %v2295
    %v2297 = vpop.f32.mrb[0].mxu0
    %v2298 = vpop.f32.mrb[0].mxu0
    %v2299 = vadd.f32 %v1304, %v2298
    %v2300 = vpop.f32.mrb[0].mxu0
    %2301 = vmatprep.mubr.bf16.mxu0 %v846
    %2302 = vmatmul.mubr.bf16.gmra.mrb[0].mxu0 %v845
    %v2303 = vpop.f32.mrb[0].mxu0
    %v2304 = vadd.f32 %v1309, %v2303
    %v2305 = vpop.f32.mrb[0].mxu0
    %v2306 = vpop.f32.mrb[0].mxu0
    %v2307 = vadd.f32 %v1312, %v2306
    %v2308 = vpop.f32.mrb[0].mxu0
    %2309 = vmatprep.mubr.bf16.mxu0 %v850
    %2310 = vmatmul.mubr.bf16.gmra.mrb[0].mxu0 %v849
    %v2311 = vpop.f32.mrb[0].mxu0
    %v2312 = vadd.f32 %v1317, %v2311
    %v2313 = vpop.f32.mrb[0].mxu0
    %v2314 = vpop.f32.mrb[0].mxu0
    %v2315 = vadd.f32 %v1320, %v2314
    %v2316 = vpop.f32.mrb[0].mxu0
    %2317 = vmatprep.mubr.bf16.mxu0 %v854
    %2318 = vmatmul.mubr.bf16.gmra.mrb[0].mxu0 %v853
    %v2319 = vpop.f32.mrb[0].mxu0
    %v2320 = vadd.f32 %v1325, %v2319
    %v2321 = vpop.f32.mrb[0].mxu0
    %v2322 = vpop.f32.mrb[0].mxu0
    %v2323 = vadd.f32 %v1328, %v2322
    %v2324 = vpop.f32.mrb[0].mxu0
    %2325 = vdwg.mxu0
    %2326 = vmatprep.subr.bf16.mxu0 0
    %2327 = vmatpush1.bf16.msra.mxu0 %v1631
    %2328 = vmatprep.subr.bf16.mxu0 0
    %2329 = vmatpush1.bf16.msra.mxu0 %v1634
    %2330 = vmatprep.subr.bf16.mxu0 0
    %2331 = vmatpush1.bf16.msra.mxu0 %v1637
    %2332 = vmatprep.subr.bf16.mxu0 0
    %2333 = vmatpush1.bf16.msra.mxu0 %v1640
    %2334 = vmatprep.subr.bf16.mxu0 0
    %2335 = vmatpush1.bf16.msra.mxu0 %v1643
    %2336 = vmatprep.subr.bf16.mxu0 0
    %2337 = vmatpush1.bf16.msra.mxu0 %v1646
    %2338 = vmatprep.subr.bf16.mxu0 0
    %2339 = vmatpush1.bf16.msra.mxu0 %v1649
    %2340 = vmatprep.subr.bf16.mxu0 0
    %2341 = vmatpush1.bf16.msra.mxu0 %v1652
    %2342 = vmatprep.subr.bf16.mxu0 0
    %2343 = vmatpush1.bf16.msra.mxu0 %v1655
    %2344 = vmatprep.subr.bf16.mxu0 0
    %2345 = vmatpush1.bf16.msra.mxu0 0
    %2346 = vmatprep.subr.bf16.mxu0 0
    %2347 = vmatpush1.bf16.msra.mxu0 0
    %2348 = vmatprep.subr.bf16.mxu0 0
    %2349 = vmatpush1.bf16.msra.mxu0 0
    %2350 = vmatprep.subr.bf16.mxu0 0
    %2351 = vmatpush1.bf16.msra.mxu0 0
    %2352 = vmatprep.subr.bf16.mxu0 0
    %2353 = vmatpush1.bf16.msra.mxu0 0
    %2354 = vmatprep.subr.bf16.mxu0 0
    %2355 = vmatpush1.bf16.msra.mxu0 0
    %2356 = vmatprep.subr.bf16.mxu0 0
    %2357 = vmatpush1.bf16.msra.mxu0 0
    %2358 = vmatprep.mubr.bf16.mxu0 %v1732
    %2359 = vmatmul.mubr.bf16.gmra.mrb[0].mxu0 %v795
    %v2360 = vpop.f32.mrb[0].mxu0
    %v2361 = vadd.f32 %v2200, %v2360
    %v2362 = vpop.f32.mrb[0].mxu0
    %v2363 = vpop.f32.mrb[0].mxu0
    %v2364 = vadd.f32 %v2203, %v2363
    %v2365 = vpop.f32.mrb[0].mxu0
    %2366 = vmatprep.mubr.bf16.mxu0 %v1735
    %2367 = vmatmul.mubr.bf16.gmra.mrb[0].mxu0 %v799
    %v2368 = vpop.f32.mrb[0].mxu0
    %v2369 = vadd.f32 %v2208, %v2368
    %v2370 = vpop.f32.mrb[0].mxu0
    %v2371 = vpop.f32.mrb[0].mxu0
    %v2372 = vadd.f32 %v2211, %v2371
    %v2373 = vpop.f32.mrb[0].mxu0
    %2374 = vmatprep.mubr.bf16.mxu0 %v1738
    %2375 = vmatmul.mubr.bf16.gmra.mrb[0].mxu0 %v803
    %v2376 = vpop.f32.mrb[0].mxu0
    %v2377 = vadd.f32 %v2216, %v2376
    %v2378 = vpop.f32.mrb[0].mxu0
    %v2379 = vpop.f32.mrb[0].mxu0
    %v2380 = vadd.f32 %v2219, %v2379
    %v2381 = vpop.f32.mrb[0].mxu0
    %2382 = vmatprep.mubr.bf16.mxu0 %v1741
    %2383 = vmatmul.mubr.bf16.gmra.mrb[0].mxu0 %v807
    %v2384 = vpop.f32.mrb[0].mxu0
    %v2385 = vadd.f32 %v2224, %v2384
    %v2386 = vpop.f32.mrb[0].mxu0
    %v2387 = vpop.f32.mrb[0].mxu0
    %v2388 = vadd.f32 %v2227, %v2387
    %v2389 = vpop.f32.mrb[0].mxu0
    %2390 = vmatprep.mubr.bf16.mxu0 %v1744
    %2391 = vmatmul.mubr.bf16.gmra.mrb[0].mxu0 %v811
    %v2392 = vpop.f32.mrb[0].mxu0
    %v2393 = vadd.f32 %v2232, %v2392
    %v2394 = vpop.f32.mrb[0].mxu0
    %v2395 = vpop.f32.mrb[0].mxu0
    %v2396 = vadd.f32 %v2235, %v2395
    %v2397 = vpop.f32.mrb[0].mxu0
    %2398 = vmatprep.mubr.bf16.mxu0 %v1747
    %2399 = vmatmul.mubr.bf16.gmra.mrb[0].mxu0 %v815
    %v2400 = vpop.f32.mrb[0].mxu0
    %v2401 = vadd.f32 %v2240, %v2400
    %v2402 = vpop.f32.mrb[0].mxu0
    %v2403 = vpop.f32.mrb[0].mxu0
    %v2404 = vadd.f32 %v2243, %v2403
    %v2405 = vpop.f32.mrb[0].mxu0
    %2406 = vmatprep.mubr.bf16.mxu0 %v1750
    %2407 = vmatmul.mubr.bf16.gmra.mrb[0].mxu0 %v819
    %v2408 = vpop.f32.mrb[0].mxu0
    %v2409 = vadd.f32 %v2248, %v2408
    %v2410 = vpop.f32.mrb[0].mxu0
    %v2411 = vpop.f32.mrb[0].mxu0
    %v2412 = vadd.f32 %v2251, %v2411
    %v2413 = vpop.f32.mrb[0].mxu0
    %2414 = vmatprep.mubr.bf16.mxu0 %v1753
    %2415 = vmatmul.mubr.bf16.gmra.mrb[0].mxu0 %v823
    %v2416 = vpop.f32.mrb[0].mxu0
    %v2417 = vadd.f32 %v2256, %v2416
    %v2418 = vpop.f32.mrb[0].mxu0
    %v2419 = vpop.f32.mrb[0].mxu0
    %v2420 = vadd.f32 %v2259, %v2419
    %v2421 = vpop.f32.mrb[0].mxu0
    %2422 = vmatprep.mubr.bf16.mxu0 %v1756
    %2423 = vmatmul.mubr.bf16.gmra.mrb[0].mxu0 %v827
    %v2424 = vpop.f32.mrb[0].mxu0
    %v2425 = vadd.f32 %v2264, %v2424
    %v2426 = vpop.f32.mrb[0].mxu0
    %v2427 = vpop.f32.mrb[0].mxu0
    %v2428 = vadd.f32 %v2267, %v2427
    %v2429 = vpop.f32.mrb[0].mxu0
    %2430 = vmatprep.mubr.bf16.mxu0 %v1759
    %2431 = vmatmul.mubr.bf16.gmra.mrb[0].mxu0 %v831
    %v2432 = vpop.f32.mrb[0].mxu0
    %v2433 = vadd.f32 %v2272, %v2432
    %v2434 = vpop.f32.mrb[0].mxu0
    %v2435 = vpop.f32.mrb[0].mxu0
    %v2436 = vadd.f32 %v2275, %v2435
    %v2437 = vpop.f32.mrb[0].mxu0
    %2438 = vmatprep.mubr.bf16.mxu0 %v1762
    %2439 = vmatmul.mubr.bf16.gmra.mrb[0].mxu0 %v835
    %v2440 = vpop.f32.mrb[0].mxu0
    %v2441 = vadd.f32 %v2280, %v2440
    %v2442 = vpop.f32.mrb[0].mxu0
    %v2443 = vpop.f32.mrb[0].mxu0
    %v2444 = vadd.f32 %v2283, %v2443
    %v2445 = vpop.f32.mrb[0].mxu0
    %2446 = vmatprep.mubr.bf16.mxu0 %v1765
    %2447 = vmatmul.mubr.bf16.gmra.mrb[0].mxu0 %v839
    %v2448 = vpop.f32.mrb[0].mxu0
    %v2449 = vadd.f32 %v2288, %v2448
    %v2450 = vpop.f32.mrb[0].mxu0
    %v2451 = vpop.f32.mrb[0].mxu0
    %v2452 = vadd.f32 %v2291, %v2451
    %v2453 = vpop.f32.mrb[0].mxu0
    %2454 = vmatprep.mubr.bf16.mxu0 %v1768
    %2455 = vmatmul.mubr.bf16.gmra.mrb[0].mxu0 %v843
    %v2456 = vpop.f32.mrb[0].mxu0
    %v2457 = vadd.f32 %v2296, %v2456
    %v2458 = vpop.f32.mrb[0].mxu0
    %v2459 = vpop.f32.mrb[0].mxu0
    %v2460 = vadd.f32 %v2299, %v2459
    %v2461 = vpop.f32.mrb[0].mxu0
    %2462 = vmatprep.mubr.bf16.mxu0 %v1771
    %2463 = vmatmul.mubr.bf16.gmra.mrb[0].mxu0 %v847
    %v2464 = vpop.f32.mrb[0].mxu0
    %v2465 = vadd.f32 %v2304, %v2464
    %v2466 = vpop.f32.mrb[0].mxu0
    %v2467 = vpop.f32.mrb[0].mxu0
    %v2468 = vadd.f32 %v2307, %v2467
    %v2469 = vpop.f32.mrb[0].mxu0
    %2470 = vmatprep.mubr.bf16.mxu0 %v1774
    %2471 = vmatmul.mubr.bf16.gmra.mrb[0].mxu0 %v851
    %v2472 = vpop.f32.mrb[0].mxu0
    %v2473 = vadd.f32 %v2312, %v2472
    %v2474 = vpop.f32.mrb[0].mxu0
    %v2475 = vpop.f32.mrb[0].mxu0
    %v2476 = vadd.f32 %v2315, %v2475
    %v2477 = vpop.f32.mrb[0].mxu0
    %2478 = vmatprep.mubr.bf16.mxu0 %v1777
    %2479 = vmatmul.mubr.bf16.gmra.mrb[0].mxu0 %v855
    %v2480 = vpop.f32.mrb[0].mxu0
    %v2481 = vadd.f32 %v2320, %v2480
    %v2482 = vpop.f32.mrb[0].mxu0
    %v2483 = vpop.f32.mrb[0].mxu0
    %v2484 = vadd.f32 %v2323, %v2483
    %v2485 = vpop.f32.mrb[0].mxu0
    %2486 = vdwg.mxu0
    %v2487 = vld [vmem:[%s5] sm:$0x7]
    %v2489 = vlaneseq
    %v2490 = vshrl.u32 %v2489, 7
    %v2491 = vsub.s32 0, %v2490
    %v2492 = vrot.slane %v2487, %v2491
    %v2493 = vlaneseq
    %v2494 = vshrl.u32 %v2493, 7
    %v2495 = vsub.s32 1, %v2494
    %v2496 = vrot.slane %v2487, %v2495
    %v2497 = vlaneseq
    %v2498 = vshrl.u32 %v2497, 7
    %v2499 = vsub.s32 2, %v2498
    %v2500 = vrot.slane %v2487, %v2499
    %v2504 = vadd.f32 %v2007, %v2492
    %v2505 = vadd.f32 %v2009, %v2496
    %v2506 = vadd.f32 %v2361, %v2500
    %v2507 = vadd.f32 %v2011, %v2492
    %v2508 = vadd.f32 %v2013, %v2496
    %v2509 = vadd.f32 %v2364, %v2500
    %v2510 = vadd.f32 %v2017, %v2492
    %v2511 = vadd.f32 %v2019, %v2496
    %v2512 = vadd.f32 %v2369, %v2500
    %v2513 = vadd.f32 %v2021, %v2492
    %v2514 = vadd.f32 %v2023, %v2496
    %v2515 = vadd.f32 %v2372, %v2500
    %v2516 = vadd.f32 %v2027, %v2492
    %v2517 = vadd.f32 %v2029, %v2496
    %v2518 = vadd.f32 %v2377, %v2500
    %v2519 = vadd.f32 %v2031, %v2492
    %v2520 = vadd.f32 %v2033, %v2496
    %v2521 = vadd.f32 %v2380, %v2500
    %v2522 = vadd.f32 %v2037, %v2492
    %v2523 = vadd.f32 %v2039, %v2496
    %v2524 = vadd.f32 %v2385, %v2500
    %v2525 = vadd.f32 %v2041, %v2492
    %v2526 = vadd.f32 %v2043, %v2496
    %v2527 = vadd.f32 %v2388, %v2500
    %v2528 = vadd.f32 %v2047, %v2492
    %v2529 = vadd.f32 %v2049, %v2496
    %v2530 = vadd.f32 %v2393, %v2500
    %v2531 = vadd.f32 %v2051, %v2492
    %v2532 = vadd.f32 %v2053, %v2496
    %v2533 = vadd.f32 %v2396, %v2500
    %v2534 = vadd.f32 %v2057, %v2492
    %v2535 = vadd.f32 %v2059, %v2496
    %v2536 = vadd.f32 %v2401, %v2500
    %v2537 = vadd.f32 %v2061, %v2492
    %v2538 = vadd.f32 %v2063, %v2496
    %v2539 = vadd.f32 %v2404, %v2500
    %v2540 = vadd.f32 %v2067, %v2492
    %v2541 = vadd.f32 %v2069, %v2496
    %v2542 = vadd.f32 %v2409, %v2500
    %v2543 = vadd.f32 %v2071, %v2492
    %v2544 = vadd.f32 %v2073, %v2496
    %v2545 = vadd.f32 %v2412, %v2500
    %v2546 = vadd.f32 %v2077, %v2492
    %v2547 = vadd.f32 %v2079, %v2496
    %v2548 = vadd.f32 %v2417, %v2500
    %v2549 = vadd.f32 %v2081, %v2492
    %v2550 = vadd.f32 %v2083, %v2496
    %v2551 = vadd.f32 %v2420, %v2500
    %v2552 = vadd.f32 %v2087, %v2492
    %v2553 = vadd.f32 %v2089, %v2496
    %v2554 = vadd.f32 %v2425, %v2500
    %v2555 = vadd.f32 %v2091, %v2492
    %v2556 = vadd.f32 %v2093, %v2496
    %v2557 = vadd.f32 %v2428, %v2500
    %v2558 = vadd.f32 %v2097, %v2492
    %v2559 = vadd.f32 %v2099, %v2496
    %v2560 = vadd.f32 %v2433, %v2500
    %v2561 = vadd.f32 %v2101, %v2492
    %v2562 = vadd.f32 %v2103, %v2496
    %v2563 = vadd.f32 %v2436, %v2500
    %v2564 = vadd.f32 %v2107, %v2492
    %v2565 = vadd.f32 %v2109, %v2496
    %v2566 = vadd.f32 %v2441, %v2500
    %v2567 = vadd.f32 %v2111, %v2492
    %v2568 = vadd.f32 %v2113, %v2496
    %v2569 = vadd.f32 %v2444, %v2500
    %v2570 = vadd.f32 %v2117, %v2492
    %v2571 = vadd.f32 %v2119, %v2496
    %v2572 = vadd.f32 %v2449, %v2500
    %v2573 = vadd.f32 %v2121, %v2492
    %v2574 = vadd.f32 %v2123, %v2496
    %v2575 = vadd.f32 %v2452, %v2500
    %v2576 = vadd.f32 %v2127, %v2492
    %v2577 = vadd.f32 %v2129, %v2496
    %v2578 = vadd.f32 %v2457, %v2500
    %v2579 = vadd.f32 %v2131, %v2492
    %v2580 = vadd.f32 %v2133, %v2496
    %v2581 = vadd.f32 %v2460, %v2500
    %v2582 = vadd.f32 %v2137, %v2492
    %v2583 = vadd.f32 %v2139, %v2496
    %v2584 = vadd.f32 %v2465, %v2500
    %v2585 = vadd.f32 %v2141, %v2492
    %v2586 = vadd.f32 %v2143, %v2496
    %v2587 = vadd.f32 %v2468, %v2500
    %v2588 = vadd.f32 %v2147, %v2492
    %v2589 = vadd.f32 %v2149, %v2496
    %v2590 = vadd.f32 %v2473, %v2500
    %v2591 = vadd.f32 %v2151, %v2492
    %v2592 = vadd.f32 %v2153, %v2496
    %v2593 = vadd.f32 %v2476, %v2500
    %v2594 = vadd.f32 %v2157, %v2492
    %v2595 = vadd.f32 %v2159, %v2496
    %v2596 = vadd.f32 %v2481, %v2500
    %v2597 = vadd.f32 %v2161, %v2492
    %v2598 = vadd.f32 %v2163, %v2496
    %v2599 = vadd.f32 %v2484, %v2500
    %v2600 = vmax.f32 %v2504, 0.0
    %v2601 = vmax.f32 %v2505, 0.0
    %v2602 = vmax.f32 %v2506, 0.0
    %v2603 = vmax.f32 %v2507, 0.0
    %v2604 = vmax.f32 %v2508, 0.0
    %v2605 = vmax.f32 %v2509, 0.0
    %v2606 = vmax.f32 %v2510, 0.0
    %v2607 = vmax.f32 %v2511, 0.0
    %v2608 = vmax.f32 %v2512, 0.0
    %v2609 = vmax.f32 %v2513, 0.0
    %v2610 = vmax.f32 %v2514, 0.0
    %v2611 = vmax.f32 %v2515, 0.0
    %v2612 = vmax.f32 %v2516, 0.0
    %v2613 = vmax.f32 %v2517, 0.0
    %v2614 = vmax.f32 %v2518, 0.0
    %v2615 = vmax.f32 %v2519, 0.0
    %v2616 = vmax.f32 %v2520, 0.0
    %v2617 = vmax.f32 %v2521, 0.0
    %v2618 = vmax.f32 %v2522, 0.0
    %v2619 = vmax.f32 %v2523, 0.0
    %v2620 = vmax.f32 %v2524, 0.0
    %v2621 = vmax.f32 %v2525, 0.0
    %v2622 = vmax.f32 %v2526, 0.0
    %v2623 = vmax.f32 %v2527, 0.0
    %v2624 = vmax.f32 %v2528, 0.0
    %v2625 = vmax.f32 %v2529, 0.0
    %v2626 = vmax.f32 %v2530, 0.0
    %v2627 = vmax.f32 %v2531, 0.0
    %v2628 = vmax.f32 %v2532, 0.0
    %v2629 = vmax.f32 %v2533, 0.0
    %v2630 = vmax.f32 %v2534, 0.0
    %v2631 = vmax.f32 %v2535, 0.0
    %v2632 = vmax.f32 %v2536, 0.0
    %v2633 = vmax.f32 %v2537, 0.0
    %v2634 = vmax.f32 %v2538, 0.0
    %v2635 = vmax.f32 %v2539, 0.0
    %v2636 = vmax.f32 %v2540, 0.0
    %v2637 = vmax.f32 %v2541, 0.0
    %v2638 = vmax.f32 %v2542, 0.0
    %v2639 = vmax.f32 %v2543, 0.0
    %v2640 = vmax.f32 %v2544, 0.0
    %v2641 = vmax.f32 %v2545, 0.0
    %v2642 = vmax.f32 %v2546, 0.0
    %v2643 = vmax.f32 %v2547, 0.0
    %v2644 = vmax.f32 %v2548, 0.0
    %v2645 = vmax.f32 %v2549, 0.0
    %v2646 = vmax.f32 %v2550, 0.0
    %v2647 = vmax.f32 %v2551, 0.0
    %v2648 = vmax.f32 %v2552, 0.0
    %v2649 = vmax.f32 %v2553, 0.0
    %v2650 = vmax.f32 %v2554, 0.0
    %v2651 = vmax.f32 %v2555, 0.0
    %v2652 = vmax.f32 %v2556, 0.0
    %v2653 = vmax.f32 %v2557, 0.0
    %v2654 = vmax.f32 %v2558, 0.0
    %v2655 = vmax.f32 %v2559, 0.0
    %v2656 = vmax.f32 %v2560, 0.0
    %v2657 = vmax.f32 %v2561, 0.0
    %v2658 = vmax.f32 %v2562, 0.0
    %v2659 = vmax.f32 %v2563, 0.0
    %v2660 = vmax.f32 %v2564, 0.0
    %v2661 = vmax.f32 %v2565, 0.0
    %v2662 = vmax.f32 %v2566, 0.0
    %v2663 = vmax.f32 %v2567, 0.0
    %v2664 = vmax.f32 %v2568, 0.0
    %v2665 = vmax.f32 %v2569, 0.0
    %v2666 = vmax.f32 %v2570, 0.0
    %v2667 = vmax.f32 %v2571, 0.0
    %v2668 = vmax.f32 %v2572, 0.0
    %v2669 = vmax.f32 %v2573, 0.0
    %v2670 = vmax.f32 %v2574, 0.0
    %v2671 = vmax.f32 %v2575, 0.0
    %v2672 = vmax.f32 %v2576, 0.0
    %v2673 = vmax.f32 %v2577, 0.0
    %v2674 = vmax.f32 %v2578, 0.0
    %v2675 = vmax.f32 %v2579, 0.0
    %v2676 = vmax.f32 %v2580, 0.0
    %v2677 = vmax.f32 %v2581, 0.0
    %v2678 = vmax.f32 %v2582, 0.0
    %v2679 = vmax.f32 %v2583, 0.0
    %v2680 = vmax.f32 %v2584, 0.0
    %v2681 = vmax.f32 %v2585, 0.0
    %v2682 = vmax.f32 %v2586, 0.0
    %v2683 = vmax.f32 %v2587, 0.0
    %v2684 = vmax.f32 %v2588, 0.0
    %v2685 = vmax.f32 %v2589, 0.0
    %v2686 = vmax.f32 %v2590, 0.0
    %v2687 = vmax.f32 %v2591, 0.0
    %v2688 = vmax.f32 %v2592, 0.0
    %v2689 = vmax.f32 %v2593, 0.0
    %v2690 = vmax.f32 %v2594, 0.0
    %v2691 = vmax.f32 %v2595, 0.0
    %v2692 = vmax.f32 %v2596, 0.0
    %v2693 = vmax.f32 %v2597, 0.0
    %v2694 = vmax.f32 %v2598, 0.0
    %v2695 = vmax.f32 %v2599, 0.0
    %v2696 = vpack.c.bf16 %v2603, %v2600
    %v2697 = vpack.c.bf16 %v2604, %v2601
    %v2698 = vpack.c.bf16 %v2605, %v2602
    %v2699 = vpack.c.bf16 %v2609, %v2606
    %v2700 = vpack.c.bf16 %v2610, %v2607
    %v2701 = vpack.c.bf16 %v2611, %v2608
    %v2702 = vpack.c.bf16 %v2615, %v2612
    %v2703 = vpack.c.bf16 %v2616, %v2613
    %v2704 = vpack.c.bf16 %v2617, %v2614
    %v2705 = vpack.c.bf16 %v2621, %v2618
    %v2706 = vpack.c.bf16 %v2622, %v2619
    %v2707 = vpack.c.bf16 %v2623, %v2620
    %v2708 = vpack.c.bf16 %v2627, %v2624
    %v2709 = vpack.c.bf16 %v2628, %v2625
    %v2710 = vpack.c.bf16 %v2629, %v2626
    %v2711 = vpack.c.bf16 %v2633, %v2630
    %v2712 = vpack.c.bf16 %v2634, %v2631
    %v2713 = vpack.c.bf16 %v2635, %v2632
    %v2714 = vpack.c.bf16 %v2639, %v2636
    %v2715 = vpack.c.bf16 %v2640, %v2637
    %v2716 = vpack.c.bf16 %v2641, %v2638
    %v2717 = vpack.c.bf16 %v2645, %v2642
    %v2718 = vpack.c.bf16 %v2646, %v2643
    %v2719 = vpack.c.bf16 %v2647, %v2644
    %v2720 = vpack.c.bf16 %v2651, %v2648
    %v2721 = vpack.c.bf16 %v2652, %v2649
    %v2722 = vpack.c.bf16 %v2653, %v2650
    %v2723 = vpack.c.bf16 %v2657, %v2654
    %v2724 = vpack.c.bf16 %v2658, %v2655
    %v2725 = vpack.c.bf16 %v2659, %v2656
    %v2726 = vpack.c.bf16 %v2663, %v2660
    %v2727 = vpack.c.bf16 %v2664, %v2661
    %v2728 = vpack.c.bf16 %v2665, %v2662
    %v2729 = vpack.c.bf16 %v2669, %v2666
    %v2730 = vpack.c.bf16 %v2670, %v2667
    %v2731 = vpack.c.bf16 %v2671, %v2668
    %v2732 = vpack.c.bf16 %v2675, %v2672
    %v2733 = vpack.c.bf16 %v2676, %v2673
    %v2734 = vpack.c.bf16 %v2677, %v2674
    %v2735 = vpack.c.bf16 %v2681, %v2678
    %v2736 = vpack.c.bf16 %v2682, %v2679
    %v2737 = vpack.c.bf16 %v2683, %v2680
    %v2738 = vpack.c.bf16 %v2687, %v2684
    %v2739 = vpack.c.bf16 %v2688, %v2685
    %v2740 = vpack.c.bf16 %v2689, %v2686
    %v2741 = vpack.c.bf16 %v2693, %v2690
    %v2742 = vpack.c.bf16 %v2694, %v2691
    %v2743 = vpack.c.bf16 %v2695, %v2692
    %v2744 = vld [vmem:[%s6] sm:$0xf]
    %v2745 = vld [vmem:[%s6 + $0x4] sm:$0xf]
    %v2746 = vld [vmem:[%s6 + $0x8] sm:$0xf]
    %v2747 = vld [vmem:[%s6 + $0xc] sm:$0xf]
    %v2748 = vld [vmem:[%s6 + $0x10] sm:$0xf]
    %v2749 = vld [vmem:[%s6 + $0x14] sm:$0xf]
    %v2750 = vld [vmem:[%s6 + $0x18] sm:$0xf]
    %v2751 = vld [vmem:[%s6 + $0x1c] sm:$0xf]
    %v2752 = vld [vmem:[%s6 + $0x20] sm:$0xf]
    %v2753 = vld [vmem:[%s6 + $0x24] sm:$0xf]
    %v2754 = vld [vmem:[%s6 + $0x28] sm:$0xf]
    %v2755 = vld [vmem:[%s6 + $0x2c] sm:$0xf]
    %v2756 = vld [vmem:[%s6 + $0x30] sm:$0xf]
    %v2757 = vld [vmem:[%s6 + $0x34] sm:$0xf]
    %v2758 = vld [vmem:[%s6 + $0x38] sm:$0xf]
    %v2759 = vld [vmem:[%s6 + $0x3c] sm:$0xf]
    %v2760 = vld [vmem:[%s6 + $0x40] sm:$0xf]
    %v2761 = vld [vmem:[%s6 + $0x44] sm:$0xf]
    %v2762 = vld [vmem:[%s6 + $0x48] sm:$0xf]
    %v2763 = vld [vmem:[%s6 + $0x4c] sm:$0xf]
    %v2764 = vld [vmem:[%s6 + $0x50] sm:$0xf]
    %v2765 = vld [vmem:[%s6 + $0x54] sm:$0xf]
    %v2766 = vld [vmem:[%s6 + $0x58] sm:$0xf]
    %v2767 = vld [vmem:[%s6 + $0x5c] sm:$0xf]
    %v2768 = vld [vmem:[%s6 + $0x60] sm:$0xf]
    %v2769 = vld [vmem:[%s6 + $0x64] sm:$0xf]
    %v2770 = vld [vmem:[%s6 + $0x68] sm:$0xf]
    %v2771 = vld [vmem:[%s6 + $0x6c] sm:$0xf]
    %v2772 = vld [vmem:[%s6 + $0x70] sm:$0xf]
    %v2773 = vld [vmem:[%s6 + $0x74] sm:$0xf]
    %v2774 = vld [vmem:[%s6 + $0x78] sm:$0xf]
    %v2775 = vld [vmem:[%s6 + $0x7c] sm:$0xf]
    %v2776 = vld [vmem:[%s6 + $0x80] sm:$0xf]
    %v2777 = vld [vmem:[%s6 + $0x84] sm:$0xf]
    %v2778 = vld [vmem:[%s6 + $0x88] sm:$0xf]
    %v2779 = vld [vmem:[%s6 + $0x8c] sm:$0xf]
    %v2780 = vld [vmem:[%s6 + $0x90] sm:$0xf]
    %v2781 = vld [vmem:[%s6 + $0x94] sm:$0x3]
    %v2782 = vld [vmem:[%s7] sm:$0x1]
    %v2784 = vlaneseq
    %v2785 = vshrl.u32 %v2784, 7
    %v2786 = vsub.s32 0, %v2785
    %v2787 = vrot.slane %v2782, %v2786
    %v2827 = vunpack.c.l.b16 %v2744
    %v2828 = vunpack.c.l.b16 %v2745
    %v2829 = vunpack.c.l.b16 %v2746
    %v2830 = vunpack.c.l.b16 %v2747
    %v2831 = vunpack.c.l.b16 %v2748
    %v2832 = vunpack.c.l.b16 %v2749
    %v2833 = vunpack.c.l.b16 %v2750
    %v2834 = vunpack.c.l.b16 %v2751
    %v2835 = vunpack.c.l.b16 %v2752
    %v2836 = vunpack.c.l.b16 %v2753
    %v2837 = vunpack.c.l.b16 %v2754
    %v2838 = vunpack.c.l.b16 %v2755
    %v2839 = vunpack.c.l.b16 %v2756
    %v2840 = vunpack.c.l.b16 %v2757
    %v2841 = vunpack.c.l.b16 %v2758
    %v2842 = vunpack.c.l.b16 %v2759
    %v2843 = vunpack.c.l.b16 %v2760
    %v2844 = vunpack.c.l.b16 %v2761
    %v2845 = vunpack.c.l.b16 %v2762
    %v2846 = vunpack.c.l.b16 %v2763
    %v2847 = vunpack.c.l.b16 %v2764
    %v2848 = vunpack.c.l.b16 %v2765
    %v2849 = vunpack.c.l.b16 %v2766
    %v2850 = vunpack.c.l.b16 %v2767
    %v2851 = vunpack.c.l.b16 %v2768
    %v2852 = vunpack.c.l.b16 %v2769
    %v2853 = vunpack.c.l.b16 %v2770
    %v2854 = vunpack.c.l.b16 %v2771
    %v2855 = vunpack.c.l.b16 %v2772
    %v2856 = vunpack.c.l.b16 %v2773
    %v2857 = vunpack.c.l.b16 %v2774
    %v2858 = vunpack.c.l.b16 %v2775
    %v2859 = vunpack.c.l.b16 %v2776
    %v2860 = vunpack.c.l.b16 %v2777
    %v2861 = vunpack.c.l.b16 %v2778
    %v2862 = vunpack.c.l.b16 %v2779
    %v2863 = vunpack.c.l.b16 %v2780
    %v2864 = vunpack.c.l.b16 %v2781
    %v2865 = vpack.c.b16 %v2828, %v2827
    %v2866 = vpack.c.b16 %v2830, %v2829
    %v2867 = vpack.c.b16 %v2832, %v2831
    %v2868 = vpack.c.b16 %v2834, %v2833
    %v2869 = vpack.c.b16 %v2836, %v2835
    %v2870 = vpack.c.b16 %v2838, %v2837
    %v2871 = vpack.c.b16 %v2840, %v2839
    %v2872 = vpack.c.b16 %v2842, %v2841
    %v2873 = vpack.c.b16 %v2844, %v2843
    %v2874 = vpack.c.b16 %v2846, %v2845
    %v2875 = vpack.c.b16 %v2848, %v2847
    %v2876 = vpack.c.b16 %v2850, %v2849
    %v2877 = vpack.c.b16 %v2852, %v2851
    %v2878 = vpack.c.b16 %v2854, %v2853
    %v2879 = vpack.c.b16 %v2856, %v2855
    %v2880 = vpack.c.b16 %v2858, %v2857
    %v2881 = vpack.c.b16 %v2860, %v2859
    %v2882 = vpack.c.b16 %v2862, %v2861
    %v2883 = vpack.c.b16 %v2864, %v2863
    %vm2902 = vcmask 359424
    %v2904 = vsel %vm2902, %v2698, 0
    %v2907 = vsel %vm2902, %v2701, 0
    %v2910 = vsel %vm2902, %v2704, 0
    %v2913 = vsel %vm2902, %v2707, 0
    %v2916 = vsel %vm2902, %v2710, 0
    %v2919 = vsel %vm2902, %v2713, 0
    %v2922 = vsel %vm2902, %v2716, 0
    %v2925 = vsel %vm2902, %v2719, 0
    %v2928 = vsel %vm2902, %v2722, 0
    %v2931 = vsel %vm2902, %v2725, 0
    %v2934 = vsel %vm2902, %v2728, 0
    %v2937 = vsel %vm2902, %v2731, 0
    %v2940 = vsel %vm2902, %v2734, 0
    %v2943 = vsel %vm2902, %v2737, 0
    %v2946 = vsel %vm2902, %v2740, 0
    %v2949 = vsel %vm2902, %v2743, 0
    %vm2951 = vcmask 1045504
    %v2953 = vsel %vm2951, %v2883, 0
    %2955 = vmatprep.subr.bf16.mxu0 0
    %2956 = vmatpush1.bf16.msra.mxu0 %v2865
    %2957 = vmatprep.subr.bf16.mxu0 0
    %2958 = vmatpush1.bf16.msra.mxu0 %v2866
    %2959 = vmatprep.subr.bf16.mxu0 0
    %2960 = vmatpush1.bf16.msra.mxu0 %v2867
    %2961 = vmatprep.subr.bf16.mxu0 0
    %2962 = vmatpush1.bf16.msra.mxu0 %v2868
    %2963 = vmatprep.subr.bf16.mxu0 0
    %2964 = vmatpush1.bf16.msra.mxu0 %v2869
    %2965 = vmatprep.subr.bf16.mxu0 0
    %2966 = vmatpush1.bf16.msra.mxu0 %v2870
    %2967 = vmatprep.subr.bf16.mxu0 0
    %2968 = vmatpush1.bf16.msra.mxu0 %v2871
    %2969 = vmatprep.subr.bf16.mxu0 0
    %2970 = vmatpush1.bf16.msra.mxu0 %v2872
    %2971 = vmatprep.subr.bf16.mxu0 0
    %2972 = vmatpush1.bf16.msra.mxu0 %v2873
    %2973 = vmatprep.subr.bf16.mxu0 0
    %2974 = vmatpush1.bf16.msra.mxu0 %v2874
    %2975 = vmatprep.subr.bf16.mxu0 0
    %2976 = vmatpush1.bf16.msra.mxu0 %v2875
    %2977 = vmatprep.subr.bf16.mxu0 0
    %2978 = vmatpush1.bf16.msra.mxu0 %v2876
    %2979 = vmatprep.subr.bf16.mxu0 0
    %2980 = vmatpush1.bf16.msra.mxu0 %v2877
    %2981 = vmatprep.subr.bf16.mxu0 0
    %2982 = vmatpush1.bf16.msra.mxu0 %v2878
    %2983 = vmatprep.subr.bf16.mxu0 0
    %2984 = vmatpush1.bf16.msra.mxu0 %v2879
    %2985 = vmatprep.subr.bf16.mxu0 0
    %2986 = vmatpush1.bf16.msra.mxu0 %v2880
    %2987 = vmatprep.mubr.bf16.mxu0 %v2697
    %2988 = vmatmul.mubr.bf16.gmra.mrb[0].mxu0 %v2696
    %v2989 = vpop.f32.mrb[0].mxu0
    %v2990 = vadd.f32 %v2787, %v2989
    %v2991 = vpop.f32.mrb[0].mxu0
    %v2992 = vpop.f32.mrb[0].mxu0
    %v2993 = vadd.f32 %v2787, %v2992
    %v2994 = vpop.f32.mrb[0].mxu0
    %2995 = vmatprep.mubr.bf16.mxu0 %v2700
    %2996 = vmatmul.mubr.bf16.gmra.mrb[0].mxu0 %v2699
    %v2997 = vpop.f32.mrb[0].mxu0
    %v2998 = vadd.f32 %v2787, %v2997
    %v2999 = vpop.f32.mrb[0].mxu0
    %v3000 = vpop.f32.mrb[0].mxu0
    %v3001 = vadd.f32 %v2787, %v3000
    %v3002 = vpop.f32.mrb[0].mxu0
    %3003 = vmatprep.mubr.bf16.mxu0 %v2703
    %3004 = vmatmul.mubr.bf16.gmra.mrb[0].mxu0 %v2702
    %v3005 = vpop.f32.mrb[0].mxu0
    %v3006 = vadd.f32 %v2787, %v3005
    %v3007 = vpop.f32.mrb[0].mxu0
    %v3008 = vpop.f32.mrb[0].mxu0
    %v3009 = vadd.f32 %v2787, %v3008
    %v3010 = vpop.f32.mrb[0].mxu0
    %3011 = vmatprep.mubr.bf16.mxu0 %v2706
    %3012 = vmatmul.mubr.bf16.gmra.mrb[0].mxu0 %v2705
    %v3013 = vpop.f32.mrb[0].mxu0
    %v3014 = vadd.f32 %v2787, %v3013
    %v3015 = vpop.f32.mrb[0].mxu0
    %v3016 = vpop.f32.mrb[0].mxu0
    %v3017 = vadd.f32 %v2787, %v3016
    %v3018 = vpop.f32.mrb[0].mxu0
    %3019 = vmatprep.mubr.bf16.mxu0 %v2709
    %3020 = vmatmul.mubr.bf16.gmra.mrb[0].mxu0 %v2708
    %v3021 = vpop.f32.mrb[0].mxu0
    %v3022 = vadd.f32 %v2787, %v3021
    %v3023 = vpop.f32.mrb[0].mxu0
    %v3024 = vpop.f32.mrb[0].mxu0
    %v3025 = vadd.f32 %v2787, %v3024
    %v3026 = vpop.f32.mrb[0].mxu0
    %3027 = vmatprep.mubr.bf16.mxu0 %v2712
    %3028 = vmatmul.mubr.bf16.gmra.mrb[0].mxu0 %v2711
    %v3029 = vpop.f32.mrb[0].mxu0
    %v3030 = vadd.f32 %v2787, %v3029
    %v3031 = vpop.f32.mrb[0].mxu0
    %v3032 = vpop.f32.mrb[0].mxu0
    %v3033 = vadd.f32 %v2787, %v3032
    %v3034 = vpop.f32.mrb[0].mxu0
    %3035 = vmatprep.mubr.bf16.mxu0 %v2715
    %3036 = vmatmul.mubr.bf16.gmra.mrb[0].mxu0 %v2714
    %v3037 = vpop.f32.mrb[0].mxu0
    %v3038 = vadd.f32 %v2787, %v3037
    %v3039 = vpop.f32.mrb[0].mxu0
    %v3040 = vpop.f32.mrb[0].mxu0
    %v3041 = vadd.f32 %v2787, %v3040
    %v3042 = vpop.f32.mrb[0].mxu0
    %3043 = vmatprep.mubr.bf16.mxu0 %v2718
    %3044 = vmatmul.mubr.bf16.gmra.mrb[0].mxu0 %v2717
    %v3045 = vpop.f32.mrb[0].mxu0
    %v3046 = vadd.f32 %v2787, %v3045
    %v3047 = vpop.f32.mrb[0].mxu0
    %v3048 = vpop.f32.mrb[0].mxu0
    %v3049 = vadd.f32 %v2787, %v3048
    %v3050 = vpop.f32.mrb[0].mxu0
    %3051 = vmatprep.mubr.bf16.mxu0 %v2721
    %3052 = vmatmul.mubr.bf16.gmra.mrb[0].mxu0 %v2720
    %v3053 = vpop.f32.mrb[0].mxu0
    %v3054 = vadd.f32 %v2787, %v3053
    %v3055 = vpop.f32.mrb[0].mxu0
    %v3056 = vpop.f32.mrb[0].mxu0
    %v3057 = vadd.f32 %v2787, %v3056
    %v3058 = vpop.f32.mrb[0].mxu0
    %3059 = vmatprep.mubr.bf16.mxu0 %v2724
    %3060 = vmatmul.mubr.bf16.gmra.mrb[0].mxu0 %v2723
    %v3061 = vpop.f32.mrb[0].mxu0
    %v3062 = vadd.f32 %v2787, %v3061
    %v3063 = vpop.f32.mrb[0].mxu0
    %v3064 = vpop.f32.mrb[0].mxu0
    %v3065 = vadd.f32 %v2787, %v3064
    %v3066 = vpop.f32.mrb[0].mxu0
    %3067 = vmatprep.mubr.bf16.mxu0 %v2727
    %3068 = vmatmul.mubr.bf16.gmra.mrb[0].mxu0 %v2726
    %v3069 = vpop.f32.mrb[0].mxu0
    %v3070 = vadd.f32 %v2787, %v3069
    %v3071 = vpop.f32.mrb[0].mxu0
    %v3072 = vpop.f32.mrb[0].mxu0
    %v3073 = vadd.f32 %v2787, %v3072
    %v3074 = vpop.f32.mrb[0].mxu0
    %3075 = vmatprep.mubr.bf16.mxu0 %v2730
    %3076 = vmatmul.mubr.bf16.gmra.mrb[0].mxu0 %v2729
    %v3077 = vpop.f32.mrb[0].mxu0
    %v3078 = vadd.f32 %v2787, %v3077
    %v3079 = vpop.f32.mrb[0].mxu0
    %v3080 = vpop.f32.mrb[0].mxu0
    %v3081 = vadd.f32 %v2787, %v3080
    %v3082 = vpop.f32.mrb[0].mxu0
    %3083 = vmatprep.mubr.bf16.mxu0 %v2733
    %3084 = vmatmul.mubr.bf16.gmra.mrb[0].mxu0 %v2732
    %v3085 = vpop.f32.mrb[0].mxu0
    %v3086 = vadd.f32 %v2787, %v3085
    %v3087 = vpop.f32.mrb[0].mxu0
    %v3088 = vpop.f32.mrb[0].mxu0
    %v3089 = vadd.f32 %v2787, %v3088
    %v3090 = vpop.f32.mrb[0].mxu0
    %3091 = vmatprep.mubr.bf16.mxu0 %v2736
    %3092 = vmatmul.mubr.bf16.gmra.mrb[0].mxu0 %v2735
    %v3093 = vpop.f32.mrb[0].mxu0
    %v3094 = vadd.f32 %v2787, %v3093
    %v3095 = vpop.f32.mrb[0].mxu0
    %v3096 = vpop.f32.mrb[0].mxu0
    %v3097 = vadd.f32 %v2787, %v3096
    %v3098 = vpop.f32.mrb[0].mxu0
    %3099 = vmatprep.mubr.bf16.mxu0 %v2739
    %3100 = vmatmul.mubr.bf16.gmra.mrb[0].mxu0 %v2738
    %v3101 = vpop.f32.mrb[0].mxu0
    %v3102 = vadd.f32 %v2787, %v3101
    %v3103 = vpop.f32.mrb[0].mxu0
    %v3104 = vpop.f32.mrb[0].mxu0
    %v3105 = vadd.f32 %v2787, %v3104
    %v3106 = vpop.f32.mrb[0].mxu0
    %3107 = vmatprep.mubr.bf16.mxu0 %v2742
    %3108 = vmatmul.mubr.bf16.gmra.mrb[0].mxu0 %v2741
    %v3109 = vpop.f32.mrb[0].mxu0
    %v3110 = vadd.f32 %v2787, %v3109
    %v3111 = vpop.f32.mrb[0].mxu0
    %v3112 = vpop.f32.mrb[0].mxu0
    %v3113 = vadd.f32 %v2787, %v3112
    %v3114 = vpop.f32.mrb[0].mxu0
    %3115 = vdwg.mxu0
    %3116 = vmatprep.subr.bf16.mxu0 0
    %3117 = vmatpush1.bf16.msra.mxu0 %v2881
    %3118 = vmatprep.subr.bf16.mxu0 0
    %3119 = vmatpush1.bf16.msra.mxu0 %v2882
    %3120 = vmatprep.subr.bf16.mxu0 0
    %3121 = vmatpush1.bf16.msra.mxu0 %v2953
    %3122 = vmatprep.subr.bf16.mxu0 0
    %3123 = vmatpush1.bf16.msra.mxu0 0
    %3124 = vmatprep.subr.bf16.mxu0 0
    %3125 = vmatpush1.bf16.msra.mxu0 0
    %3126 = vmatprep.subr.bf16.mxu0 0
    %3127 = vmatpush1.bf16.msra.mxu0 0
    %3128 = vmatprep.subr.bf16.mxu0 0
    %3129 = vmatpush1.bf16.msra.mxu0 0
    %3130 = vmatprep.subr.bf16.mxu0 0
    %3131 = vmatpush1.bf16.msra.mxu0 0
    %3132 = vmatprep.subr.bf16.mxu0 0
    %3133 = vmatpush1.bf16.msra.mxu0 0
    %3134 = vmatprep.subr.bf16.mxu0 0
    %3135 = vmatpush1.bf16.msra.mxu0 0
    %3136 = vmatprep.subr.bf16.mxu0 0
    %3137 = vmatpush1.bf16.msra.mxu0 0
    %3138 = vmatprep.subr.bf16.mxu0 0
    %3139 = vmatpush1.bf16.msra.mxu0 0
    %3140 = vmatprep.subr.bf16.mxu0 0
    %3141 = vmatpush1.bf16.msra.mxu0 0
    %3142 = vmatprep.subr.bf16.mxu0 0
    %3143 = vmatpush1.bf16.msra.mxu0 0
    %3144 = vmatprep.subr.bf16.mxu0 0
    %3145 = vmatpush1.bf16.msra.mxu0 0
    %3146 = vmatprep.subr.bf16.mxu0 0
    %3147 = vmatpush1.bf16.msra.mxu0 0
    %3148 = vmatprep.mubr.bf16.mxu0 0
    %3149 = vmatmul.mubr.bf16.gmra.mrb[0].mxu0 %v2904
    %v3150 = vpop.f32.mrb[0].mxu0
    %v3151 = vadd.f32 %v2990, %v3150
    %v3152 = vpop.f32.mrb[0].mxu0
    %v3153 = vpop.f32.mrb[0].mxu0
    %v3154 = vadd.f32 %v2993, %v3153
    %v3155 = vpop.f32.mrb[0].mxu0
    %3156 = vmatprep.mubr.bf16.mxu0 0
    %3157 = vmatmul.mubr.bf16.gmra.mrb[0].mxu0 %v2907
    %v3158 = vpop.f32.mrb[0].mxu0
    %v3159 = vadd.f32 %v2998, %v3158
    %v3160 = vpop.f32.mrb[0].mxu0
    %v3161 = vpop.f32.mrb[0].mxu0
    %v3162 = vadd.f32 %v3001, %v3161
    %v3163 = vpop.f32.mrb[0].mxu0
    %3164 = vmatprep.mubr.bf16.mxu0 0
    %3165 = vmatmul.mubr.bf16.gmra.mrb[0].mxu0 %v2910
    %v3166 = vpop.f32.mrb[0].mxu0
    %v3167 = vadd.f32 %v3006, %v3166
    %v3168 = vpop.f32.mrb[0].mxu0
    %v3169 = vpop.f32.mrb[0].mxu0
    %v3170 = vadd.f32 %v3009, %v3169
    %v3171 = vpop.f32.mrb[0].mxu0
    %3172 = vmatprep.mubr.bf16.mxu0 0
    %3173 = vmatmul.mubr.bf16.gmra.mrb[0].mxu0 %v2913
    %v3174 = vpop.f32.mrb[0].mxu0
    %v3175 = vadd.f32 %v3014, %v3174
    %v3176 = vpop.f32.mrb[0].mxu0
    %v3177 = vpop.f32.mrb[0].mxu0
    %v3178 = vadd.f32 %v3017, %v3177
    %v3179 = vpop.f32.mrb[0].mxu0
    %3180 = vmatprep.mubr.bf16.mxu0 0
    %3181 = vmatmul.mubr.bf16.gmra.mrb[0].mxu0 %v2916
    %v3182 = vpop.f32.mrb[0].mxu0
    %v3183 = vadd.f32 %v3022, %v3182
    %v3184 = vpop.f32.mrb[0].mxu0
    %v3185 = vpop.f32.mrb[0].mxu0
    %v3186 = vadd.f32 %v3025, %v3185
    %v3187 = vpop.f32.mrb[0].mxu0
    %3188 = vmatprep.mubr.bf16.mxu0 0
    %3189 = vmatmul.mubr.bf16.gmra.mrb[0].mxu0 %v2919
    %v3190 = vpop.f32.mrb[0].mxu0
    %v3191 = vadd.f32 %v3030, %v3190
    %v3192 = vpop.f32.mrb[0].mxu0
    %v3193 = vpop.f32.mrb[0].mxu0
    %v3194 = vadd.f32 %v3033, %v3193
    %v3195 = vpop.f32.mrb[0].mxu0
    %3196 = vmatprep.mubr.bf16.mxu0 0
    %3197 = vmatmul.mubr.bf16.gmra.mrb[0].mxu0 %v2922
    %v3198 = vpop.f32.mrb[0].mxu0
    %v3199 = vadd.f32 %v3038, %v3198
    %v3200 = vpop.f32.mrb[0].mxu0
    %v3201 = vpop.f32.mrb[0].mxu0
    %v3202 = vadd.f32 %v3041, %v3201
    %v3203 = vpop.f32.mrb[0].mxu0
    %3204 = vmatprep.mubr.bf16.mxu0 0
    %3205 = vmatmul.mubr.bf16.gmra.mrb[0].mxu0 %v2925
    %v3206 = vpop.f32.mrb[0].mxu0
    %v3207 = vadd.f32 %v3046, %v3206
    %v3208 = vpop.f32.mrb[0].mxu0
    %v3209 = vpop.f32.mrb[0].mxu0
    %v3210 = vadd.f32 %v3049, %v3209
    %v3211 = vpop.f32.mrb[0].mxu0
    %3212 = vmatprep.mubr.bf16.mxu0 0
    %3213 = vmatmul.mubr.bf16.gmra.mrb[0].mxu0 %v2928
    %v3214 = vpop.f32.mrb[0].mxu0
    %v3215 = vadd.f32 %v3054, %v3214
    %v3216 = vpop.f32.mrb[0].mxu0
    %v3217 = vpop.f32.mrb[0].mxu0
    %v3218 = vadd.f32 %v3057, %v3217
    %v3219 = vpop.f32.mrb[0].mxu0
    %3220 = vmatprep.mubr.bf16.mxu0 0
    %3221 = vmatmul.mubr.bf16.gmra.mrb[0].mxu0 %v2931
    %v3222 = vpop.f32.mrb[0].mxu0
    %v3223 = vadd.f32 %v3062, %v3222
    %v3224 = vpop.f32.mrb[0].mxu0
    %v3225 = vpop.f32.mrb[0].mxu0
    %v3226 = vadd.f32 %v3065, %v3225
    %v3227 = vpop.f32.mrb[0].mxu0
    %3228 = vmatprep.mubr.bf16.mxu0 0
    %3229 = vmatmul.mubr.bf16.gmra.mrb[0].mxu0 %v2934
    %v3230 = vpop.f32.mrb[0].mxu0
    %v3231 = vadd.f32 %v3070, %v3230
    %v3232 = vpop.f32.mrb[0].mxu0
    %v3233 = vpop.f32.mrb[0].mxu0
    %v3234 = vadd.f32 %v3073, %v3233
    %v3235 = vpop.f32.mrb[0].mxu0
    %3236 = vmatprep.mubr.bf16.mxu0 0
    %3237 = vmatmul.mubr.bf16.gmra.mrb[0].mxu0 %v2937
    %v3238 = vpop.f32.mrb[0].mxu0
    %v3239 = vadd.f32 %v3078, %v3238
    %v3240 = vpop.f32.mrb[0].mxu0
    %v3241 = vpop.f32.mrb[0].mxu0
    %v3242 = vadd.f32 %v3081, %v3241
    %v3243 = vpop.f32.mrb[0].mxu0
    %3244 = vmatprep.mubr.bf16.mxu0 0
    %3245 = vmatmul.mubr.bf16.gmra.mrb[0].mxu0 %v2940
    %v3246 = vpop.f32.mrb[0].mxu0
    %v3247 = vadd.f32 %v3086, %v3246
    %v3248 = vpop.f32.mrb[0].mxu0
    %v3249 = vpop.f32.mrb[0].mxu0
    %v3250 = vadd.f32 %v3089, %v3249
    %v3251 = vpop.f32.mrb[0].mxu0
    %3252 = vmatprep.mubr.bf16.mxu0 0
    %3253 = vmatmul.mubr.bf16.gmra.mrb[0].mxu0 %v2943
    %v3254 = vpop.f32.mrb[0].mxu0
    %v3255 = vadd.f32 %v3094, %v3254
    %v3256 = vpop.f32.mrb[0].mxu0
    %v3257 = vpop.f32.mrb[0].mxu0
    %v3258 = vadd.f32 %v3097, %v3257
    %v3259 = vpop.f32.mrb[0].mxu0
    %3260 = vmatprep.mubr.bf16.mxu0 0
    %3261 = vmatmul.mubr.bf16.gmra.mrb[0].mxu0 %v2946
    %v3262 = vpop.f32.mrb[0].mxu0
    %v3263 = vadd.f32 %v3102, %v3262
    %v3264 = vpop.f32.mrb[0].mxu0
    %v3265 = vpop.f32.mrb[0].mxu0
    %v3266 = vadd.f32 %v3105, %v3265
    %v3267 = vpop.f32.mrb[0].mxu0
    %3268 = vmatprep.mubr.bf16.mxu0 0
    %3269 = vmatmul.mubr.bf16.gmra.mrb[0].mxu0 %v2949
    %v3270 = vpop.f32.mrb[0].mxu0
    %v3271 = vadd.f32 %v3110, %v3270
    %v3272 = vpop.f32.mrb[0].mxu0
    %v3273 = vpop.f32.mrb[0].mxu0
    %v3274 = vadd.f32 %v3113, %v3273
    %v3275 = vpop.f32.mrb[0].mxu0
    %3276 = vdwg.mxu0
    %3277 = vst [vmem:[#allocation8] sm:$0xff] %v3151
    %3278 = vst [vmem:[#allocation8 + $0x8] sm:$0xff] %v3154
    %3279 = vst [vmem:[#allocation8 + $0x10] sm:$0xff] %v3159
    %3280 = vst [vmem:[#allocation8 + $0x18] sm:$0xff] %v3162
    %3281 = vst [vmem:[#allocation8 + $0x20] sm:$0xff] %v3167
    %3282 = vst [vmem:[#allocation8 + $0x28] sm:$0xff] %v3170
    %3283 = vst [vmem:[#allocation8 + $0x30] sm:$0xff] %v3175
    %3284 = vst [vmem:[#allocation8 + $0x38] sm:$0xff] %v3178
    %3285 = vst [vmem:[#allocation8 + $0x40] sm:$0xff] %v3183
    %3286 = vst [vmem:[#allocation8 + $0x48] sm:$0xff] %v3186
    %3287 = vst [vmem:[#allocation8 + $0x50] sm:$0xff] %v3191
    %3288 = vst [vmem:[#allocation8 + $0x58] sm:$0xff] %v3194
    %3289 = vst [vmem:[#allocation8 + $0x60] sm:$0xff] %v3199
    %3290 = vst [vmem:[#allocation8 + $0x68] sm:$0xff] %v3202
    %3291 = vst [vmem:[#allocation8 + $0x70] sm:$0xff] %v3207
    %3292 = vst [vmem:[#allocation8 + $0x78] sm:$0xff] %v3210
    %3293 = vst [vmem:[#allocation8 + $0x80] sm:$0xff] %v3215
    %3294 = vst [vmem:[#allocation8 + $0x88] sm:$0xff] %v3218
    %3295 = vst [vmem:[#allocation8 + $0x90] sm:$0xff] %v3223
    %3296 = vst [vmem:[#allocation8 + $0x98] sm:$0xff] %v3226
    %3297 = vst [vmem:[#allocation8 + $0xa0] sm:$0xff] %v3231
    %3298 = vst [vmem:[#allocation8 + $0xa8] sm:$0xff] %v3234
    %3299 = vst [vmem:[#allocation8 + $0xb0] sm:$0xff] %v3239
    %3300 = vst [vmem:[#allocation8 + $0xb8] sm:$0xff] %v3242
    %3301 = vst [vmem:[#allocation8 + $0xc0] sm:$0xff] %v3247
    %3302 = vst [vmem:[#allocation8 + $0xc8] sm:$0xff] %v3250
    %3303 = vst [vmem:[#allocation8 + $0xd0] sm:$0xff] %v3255
    %3304 = vst [vmem:[#allocation8 + $0xd8] sm:$0xff] %v3258
    %3305 = vst [vmem:[#allocation8 + $0xe0] sm:$0xff] %v3263
    %3306 = vst [vmem:[#allocation8 + $0xe8] sm:$0xff] %v3266
    %3307 = vst [vmem:[#allocation8 + $0xf0] sm:$0xff] %v3271
    %3308 = vst [vmem:[#allocation8 + $0xf8] sm:$0xff] %v3274
    // Predicated region
    $region46: #{tpu_custom_call.1} parent=1 // pred_check
      _
    $region47: #{tpu_custom_call.1} parent=1 // pred_check_branch
      %3310 = sbr.rel (0) target = $region49
    $region48: #{tpu_custom_call.1} parent=1 // pred_region
      %s3312 = ssub.s32 4096, 4096
      %3313 = vsyncadd [#allocation4], %s3312
      %s3314 = sshll.u32 [#allocation8], 4
      %s3315 = int_to_ptr.vmem [resolvable:$true] %s3314
      %3320 = dma.vmem_to_hbm [thread:$0]  %s3315, 4096, %s8, [#allocation4], 128, 128, 8
    $region49: #{tpu_custom_call.1} parent=1 // pred_fallthru
      _
    // Predicated region
    $region50: #{tpu_custom_call.1} parent=1 // pred_check
      _
    $region51: #{tpu_custom_call.1} parent=1 // pred_check_branch
      %3322 = sbr.rel (0) target = $region53
    $region52: #{tpu_custom_call.1} parent=1 // pred_region
      %3323 = dma.done [#allocation4], 4096
    $region53: #{tpu_custom_call.1} parent=1 // pred_fallthru
      _
    %3324 = vsyncpa [#allocation3], 1
    %3325 = vsyncpa [#allocation6], 1
    %3326 = vsyncpa [#allocation4], 1

</llo_original>
